<compile_context>
chip_gen: v7x
topology: tpu7x:2x2x1
jax: 0.10.0
libtpu: 0.0.40
codegen_flags: <defaults>
</compile_context>

<pallas_src>
import functools

import jax
import jax.numpy as jnp
from jax.experimental import pallas as pl
from jax.experimental.pallas import tpu as pltpu


_MIB = 1024 * 1024


def _round_up(x, m):
    return (x + m - 1) // m * m


@functools.lru_cache(maxsize=None)
def _vmem_budgets():
    """Generation-aware (vmem_limit_bytes, tile_budget_bytes).

    v7x  (64 MiB physical/core) -> ~56 MiB limit / ~40 MiB tile budget.
    v5e/v6e (128 MiB physical)  -> ~112 MiB limit / ~80 MiB tile budget.
    """
    try:
        cap = int(pltpu.get_tpu_info().vmem_capacity_bytes)
    except Exception:
        cap = 64 * _MIB  # conservative fallback: smallest (v7x) VMEM
    limit = (cap * 7) // 8
    budget = (cap * 5) // 8
    return limit, budget


def _fused_vmem_bytes(batch_tile, f_pad, h_pad, c_pad, wdt_bytes=2):
    """VMEM footprint of the single-step fused path (weights Buffered(1))."""
    x_blk = 2 * batch_tile * f_pad * wdt_bytes                      # x double-buffered (varies with b)
    weights = (f_pad * h_pad + h_pad * c_pad) * wdt_bytes \
              + (h_pad + c_pad) * 4                                 # invariant: fetched once
    outs = 2 * 2 * batch_tile * c_pad * 4                           # two f32 outputs, double-buffered
    interm = batch_tile * h_pad * (4 + wdt_bytes) \
             + 2 * batch_tile * c_pad * 4                           # h (f32 + bf16 copy) + feat/tanh temps
    return x_blk + weights + outs + interm


def _tiled_vmem_bytes(batch_tile, hidden_tile, f_pad, c_pad, wdt_bytes=2):
    """VMEM footprint of the hidden-dim-reduction path."""
    x_blk = 2 * batch_tile * f_pad * wdt_bytes
    weights = 2 * (f_pad * hidden_tile + hidden_tile * c_pad) * wdt_bytes \
              + 2 * hidden_tile * 4 + c_pad * 4                     # w1/b1/w2 double-buffered, b2 once
    outs = 2 * 2 * batch_tile * c_pad * 4
    acc = batch_tile * c_pad * 4
    interm = batch_tile * hidden_tile * (4 + wdt_bytes) \
             + 2 * batch_tile * c_pad * 4
    return x_blk + weights + outs + acc + interm


def _choose_tiling(b_pad, f_pad, h_pad, c_pad, budget):
    """Pick (batch_tile, hidden_tile); hidden_tile == h_pad means fully-fused path."""
    cands = sorted({min(b_pad, c) for c in (1024, 512, 256, 128, 64, 32, 16)},
                   reverse=True)
    # 1) Fully-fused single-step path: largest batch tile that fits the budget.
    for bt in cands:
        if _fused_vmem_bytes(bt, f_pad, h_pad, c_pad) <= budget:
            return bt, h_pad
    # 2) Hidden-dim reduction path. Prefer large batch tiles first (the full weight
    #    set is re-streamed once per batch tile), then the largest hidden tile.
    for bt in cands:
        for th in (2048, 1024, 512, 256, 128):
            if th >= h_pad or h_pad % th:
                continue
            if _tiled_vmem_bytes(bt, th, f_pad, c_pad) <= budget:
                return bt, th
    # TODO(synk): add an F (input-feature) tiling path for very large img_feat_len.
    raise ValueError(
        "ImgNet Pallas kernel does not fit the VMEM budget "
        f"(F_pad={f_pad}, H_pad={h_pad}, C_pad={c_pad}, budget={budget} bytes); "
        "input-feature tiling is not implemented.")


def _invariant_spec(shape, index_map):
    """BlockSpec for a block whose index never changes: fetch once, single-buffer it."""
    try:
        return pl.BlockSpec(shape, index_map, pipeline_mode=pl.Buffered(1))
    except (AttributeError, TypeError):
        return pl.BlockSpec(shape, index_map)


def _imgnet_fused_kernel(x_ref, w1_ref, b1_ref, w2_ref, b2_ref, feat_ref, code_ref):
    # Single grid step over the hidden dim: both matmuls back-to-back, no scratch.
    h = jnp.dot(x_ref[...], w1_ref[...], preferred_element_type=jnp.float32)
    h = jnp.maximum(h + b1_ref[...], 0.0)
    # Dropout(0.3): identity in eval mode.
    feat = jnp.dot(h.astype(w2_ref.dtype), w2_ref[...],
                   preferred_element_type=jnp.float32) + b2_ref[...]
    feat_ref[...] = feat.astype(feat_ref.dtype)
    code_ref[...] = jnp.tanh(feat).astype(code_ref.dtype)


def _imgnet_tiled_kernel(x_ref, w1_ref, b1_ref, w2_ref, b2_ref,
                         feat_ref, code_ref, acc_ref):
    # Grid = (batch tiles, hidden tiles ["arbitrary" reduction, LAST axis]).
    # feat_ref/code_ref use a constant index_map along axis 1 (resident accumulator
    # pattern); do NOT mark axis 1 "parallel" or change the out index_map.
    k = pl.program_id(1)

    @pl.when(k == 0)
    def _init():
        acc_ref[...] = jnp.zeros_like(acc_ref)

    h = jnp.dot(x_ref[...], w1_ref[...], preferred_element_type=jnp.float32)
    h = jnp.maximum(h + b1_ref[...], 0.0)
    # Dropout(0.3): identity in eval mode.
    acc_ref[...] += jnp.dot(h.astype(w2_ref.dtype), w2_ref[...],
                            preferred_element_type=jnp.float32)

    @pl.when(k == pl.num_programs(1) - 1)
    def _finalize():
        feat = acc_ref[...] + b2_ref[...]
        feat_ref[...] = feat.astype(feat_ref.dtype)
        code_ref[...] = jnp.tanh(feat).astype(code_ref.dtype)


@functools.partial(jax.jit, static_argnames=("c_orig", "batch_tile", "hidden_tile"))
def _imgnet_forward_padded(x, w1_p, b1_p, w2_p, b2_p, *, c_orig,
                           batch_tile=None, hidden_tile=None):
    B, F = x.shape
    F_pad, H_pad = w1_p.shape
    H_pad2, C_pad = w2_p.shape
    assert H_pad == H_pad2 and F <= F_pad
    wdt = w1_p.dtype

    vmem_limit, vmem_budget = _vmem_budgets()

    # bf16 packs 16 rows per sublane tile -> keep batch a multiple of 16.
    B_pad = _round_up(max(B, 16), 16)
    if batch_tile is None or hidden_tile is None:
        bt_auto, th_auto = _choose_tiling(B_pad, F_pad, H_pad, C_pad, vmem_budget)
        batch_tile = bt_auto if batch_tile is None else batch_tile
        hidden_tile = th_auto if hidden_tile is None else hidden_tile
    assert batch_tile % 16 == 0 and hidden_tile % 128 == 0 and H_pad % hidden_tile == 0
    B_pad = _round_up(B_pad, batch_tile)

    if x.shape == (B_pad, F_pad) and x.dtype == wdt:
        x_p = x
    else:
        x_p = jnp.zeros((B_pad, F_pad), wdt).at[:B, :F].set(x.astype(wdt))

    num_b = B_pad // batch_tile
    num_k = H_pad // hidden_tile

    # Megacore batch split only pays off when activation traffic rivals weight traffic;
    # otherwise each TensorCore streams its own full weight copy from shared HBM.
    wdt_bytes = jnp.dtype(wdt).itemsize
    act_bytes = B_pad * F_pad * wdt_bytes + 2 * B_pad * C_pad * 4
    weight_bytes = (w1_p.size + w2_p.size) * wdt_bytes + (b1_p.size + b2_p.size) * 4
    batch_sem = "parallel" if act_bytes >= weight_bytes else "arbitrary"

    out_shape = (jax.ShapeDtypeStruct((B_pad, C_pad), jnp.float32),
                 jax.ShapeDtypeStruct((B_pad, C_pad), jnp.float32))

    if num_k == 1:
        # Fully-fused single-step path (the common case); weights fetched once.
        grid = (num_b,)
        in_specs = [
            pl.BlockSpec((batch_tile, F_pad), lambda b: (b, 0)),
            _invariant_spec((F_pad, H_pad), lambda b: (0, 0)),
            _invariant_spec((1, H_pad), lambda b: (0, 0)),
            _invariant_spec((H_pad, C_pad), lambda b: (0, 0)),
            _invariant_spec((1, C_pad), lambda b: (0, 0)),
        ]
        out_specs = [pl.BlockSpec((batch_tile, C_pad), lambda b: (b, 0)),
                     pl.BlockSpec((batch_tile, C_pad), lambda b: (b, 0))]
        scratch_shapes = ()
        kernel = _imgnet_fused_kernel
        dims = (batch_sem,)
        streamed_weight_bytes = weight_bytes           # fetched once
    else:
        # Hidden-dim reduction path for large F/H.
        grid = (num_b, num_k)
        in_specs = [
            pl.BlockSpec((batch_tile, F_pad), lambda b, k: (b, 0)),
            pl.BlockSpec((F_pad, hidden_tile), lambda b, k: (0, k)),
            pl.BlockSpec((1, hidden_tile), lambda b, k: (0, k)),
            pl.BlockSpec((hidden_tile, C_pad), lambda b, k: (k, 0)),
            _invariant_spec((1, C_pad), lambda b, k: (0, 0)),
        ]
        out_specs = [pl.BlockSpec((batch_tile, C_pad), lambda b, k: (b, 0)),
                     pl.BlockSpec((batch_tile, C_pad), lambda b, k: (b, 0))]
        scratch_shapes = (pltpu.VMEM((batch_tile, C_pad), jnp.float32),)
        kernel = _imgnet_tiled_kernel
        dims = (batch_sem, "arbitrary")
        streamed_weight_bytes = num_b * weight_bytes   # re-streamed per batch tile

    cost = pl.CostEstimate(
        flops=int(2 * B_pad * H_pad * (F_pad + C_pad)),
        transcendentals=int(B_pad * C_pad),
        bytes_accessed=int(x_p.size * wdt_bytes
                           + streamed_weight_bytes
                           + 2 * B_pad * C_pad * 4),
    )

    feat_p, code_p = pl.pallas_call(
        kernel,
        out_shape=out_shape,
        grid_spec=pltpu.PrefetchScalarGridSpec(
            num_scalar_prefetch=0,
            grid=grid,
            in_specs=in_specs,
            out_specs=out_specs,
            scratch_shapes=scratch_shapes,
        ),
        compiler_params=pltpu.CompilerParams(
            dimension_semantics=dims,
            vmem_limit_bytes=vmem_limit,
        ),
        cost_estimate=cost,
    )(x_p, w1_p, b1_p, w2_p, b2_p)

    return feat_p[:B, :c_orig], code_p[:B, :c_orig]


def _pad_cast_2d(a, rows, cols, dtype):
    a = a.astype(dtype)
    if a.shape == (rows, cols):
        return a
    return jnp.zeros((rows, cols), dtype).at[:a.shape[0], :a.shape[1]].set(a)


def prepare_imgnet_params(w1, b1, w2, b2, *, weight_dtype=jnp.bfloat16):
    """One-time weight pad + bf16 cast (hoisted out of the per-call hot path).

    w1: (F, H); b1: (H,); w2: (H, C); b2: (C,) — (in, out) layout, i.e. already
    transposed vs. torch's (out, in). Reuse the returned dict across calls.
    """
    F, H = w1.shape
    H2, C = w2.shape
    assert H == H2 and b1.shape == (H,) and b2.shape == (C,)
    F_pad, H_pad, C_pad = (_round_up(d, 128) for d in (F, H, C))
    return {
        "w1": _pad_cast_2d(w1, F_pad, H_pad, weight_dtype),
        "b1": _pad_cast_2d(b1.reshape(1, H), 1, H_pad, jnp.float32),
        "w2": _pad_cast_2d(w2, H_pad, C_pad, weight_dtype),
        "b2": _pad_cast_2d(b2.reshape(1, C), 1, C_pad, jnp.float32),
        "code_len": C,
    }


def imgnet_forward(x, params, *, batch_tile=None, hidden_tile=None):
    """ImgNet forward: returns (feat, feat, tanh(feat)), mirroring the PyTorch module.

    x: (B, img_feat_len); params: output of prepare_imgnet_params().
    Dropout(0.3) is inference-mode identity (deterministic forward).
    """
    feat, code = _imgnet_forward_padded(
        x, params["w1"], params["b1"], params["w2"], params["b2"],
        c_orig=params["code_len"], batch_tile=batch_tile, hidden_tile=hidden_tile)
    return feat, feat, code


def init_imgnet_params(key, code_len, img_feat_len, hidden=4096):
    """fc1 default Linear init; fc2 weight ~ N(0,1) (as in the module).

    Weights are stored as (in, out) — already transposed vs. torch's (out, in).
    Master copies are f32; prepare_imgnet_params casts them to bf16 for streaming.
    """
    k1, k2, k3, k4 = jax.random.split(key, 4)
    bound1 = 1.0 / jnp.sqrt(img_feat_len)
    w1 = jax.random.uniform(k1, (img_feat_len, hidden), jnp.float32,
                            minval=-bound1, maxval=bound1)
    b1 = jax.random.uniform(k2, (hidden,), jnp.float32,
                            minval=-bound1, maxval=bound1)
    w2 = jax.random.normal(k3, (hidden, code_len), jnp.float32)  # std=1 init
    bound2 = 1.0 / jnp.sqrt(hidden)
    b2 = jax.random.uniform(k4, (code_len,), jnp.float32,
                            minval=-bound2, maxval=bound2)
    return w1, b1, w2, b2


if __name__ == "__main__":
    code_len = 16
    img_feat_len = 32
    batch = 2

    key = jax.random.PRNGKey(0)
    kx, kp = jax.random.split(key)
    x = jax.random.normal(kx, (batch, img_feat_len), jnp.float32)
    w1, b1, w2, b2 = init_imgnet_params(kp, code_len, img_feat_len)

    params = prepare_imgnet_params(w1, b1, w2, b2)   # one-time pad/cast (reused per call)
    feat1, feat2, code = imgnet_forward(x, params)
    jax.block_until_ready((feat1, feat2, code))

    # Plain-JAX reference (eval-mode dropout = identity), mirroring the kernel's bf16
    # weight/activation streaming with f32 accumulation.
    f32 = jnp.float32
    xb = x.astype(jnp.bfloat16).astype(f32)
    w1b = w1.astype(jnp.bfloat16).astype(f32)
    w2b = w2.astype(jnp.bfloat16).astype(f32)
    h_ref = jnp.maximum(xb @ w1b + b1, 0.0)
    feat_ref = h_ref.astype(jnp.bfloat16).astype(f32) @ w2b + b2
    code_ref = jnp.tanh(feat_ref)

    assert feat1.shape == (batch, code_len) and code.shape == (batch, code_len)
    assert bool(jnp.allclose(feat1, feat2))
    assert bool(jnp.allclose(feat1, feat_ref, atol=1e-2, rtol=1e-3)), \
        float(jnp.max(jnp.abs(feat1 - feat_ref)))
    assert bool(jnp.allclose(code, code_ref, atol=1e-3, rtol=1e-3))

    print("KERNEL_OK")
</pallas_src>

<mosaic_0001>
module attributes {stable_mosaic.version = 11 : i64} {
  func.func @_imgnet_fused_kernel(%arg0: i32, %arg1: memref<16x128xbf16, #tpu.memory_space<vmem>>, %arg2: memref<128x4096xbf16, #tpu.memory_space<vmem>>, %arg3: memref<1x4096xf32, #tpu.memory_space<vmem>>, %arg4: memref<4096x128xbf16, #tpu.memory_space<vmem>>, %arg5: memref<1x128xf32, #tpu.memory_space<vmem>>, %arg6: memref<16x128xf32, #tpu.memory_space<vmem>>, %arg7: memref<16x128xf32, #tpu.memory_space<vmem>>) attributes {dimension_semantics = [#tpu.dimension_semantics<arbitrary>], iteration_bounds = array<i64: 1>, scalar_prefetch = 0 : i64, scratch_operands = 0 : i64, tpu.core_type = #tpu.core_type<tc>, window_params = [{transform_indices = @transform_0, window_bounds = array<i64: 16, 128>}, {pipeline_mode = #tpu.pipeline_mode<synchronous>, transform_indices = @transform_1, window_bounds = array<i64: 128, 4096>}, {pipeline_mode = #tpu.pipeline_mode<synchronous>, transform_indices = @transform_2, window_bounds = array<i64: 1, 4096>}, {pipeline_mode = #tpu.pipeline_mode<synchronous>, transform_indices = @transform_3, window_bounds = array<i64: 4096, 128>}, {pipeline_mode = #tpu.pipeline_mode<synchronous>, transform_indices = @transform_4, window_bounds = array<i64: 1, 128>}, {transform_indices = @transform_5, window_bounds = array<i64: 16, 128>}, {transform_indices = @transform_6, window_bounds = array<i64: 16, 128>}]} {
    %c0 = arith.constant 0 : index
    %c0_0 = arith.constant 0 : index
    %0 = vector.load %arg1[%c0, %c0_0] : memref<16x128xbf16, #tpu.memory_space<vmem>>, vector<16x128xbf16>
    %c0_1 = arith.constant 0 : index
    %c0_2 = arith.constant 0 : index
    %1 = vector.load %arg2[%c0_1, %c0_2] : memref<128x4096xbf16, #tpu.memory_space<vmem>>, vector<128x4096xbf16>
    %cst = arith.constant dense<0.000000e+00> : vector<16x4096xf32>
    %2 = tpu.matmul %0, %1, %cst {dimension_numbers = #tpu.dot_dimension_numbers<[1], [0], [0], [1], [0, 0, 1, 1], [], []>} : vector<16x128xbf16>, vector<128x4096xbf16>, vector<16x4096xf32> -> vector<16x4096xf32>
    %c0_3 = arith.constant 0 : index
    %c0_4 = arith.constant 0 : index
    %3 = vector.load %arg3[%c0_3, %c0_4] : memref<1x4096xf32, #tpu.memory_space<vmem>>, vector<1x4096xf32>
    %4 = vector.broadcast %3 : vector<1x4096xf32> to vector<16x4096xf32>
    %5 = arith.addf %2, %4 : vector<16x4096xf32>
    %cst_5 = arith.constant 0.000000e+00 : f32
    %6 = vector.broadcast %cst_5 : f32 to vector<16x4096xf32>
    %7 = arith.maximumf %5, %6 : vector<16x4096xf32>
    %8 = arith.truncf %7 : vector<16x4096xf32> to vector<16x4096xbf16>
    %c0_6 = arith.constant 0 : index
    %c0_7 = arith.constant 0 : index
    %9 = vector.load %arg4[%c0_6, %c0_7] : memref<4096x128xbf16, #tpu.memory_space<vmem>>, vector<4096x128xbf16>
    %cst_8 = arith.constant dense<0.000000e+00> : vector<16x128xf32>
    %10 = tpu.matmul %8, %9, %cst_8 {dimension_numbers = #tpu.dot_dimension_numbers<[1], [0], [0], [1], [0, 0, 1, 1], [], []>} : vector<16x4096xbf16>, vector<4096x128xbf16>, vector<16x128xf32> -> vector<16x128xf32>
    %c0_9 = arith.constant 0 : index
    %c0_10 = arith.constant 0 : index
    %11 = vector.load %arg5[%c0_9, %c0_10] : memref<1x128xf32, #tpu.memory_space<vmem>>, vector<1x128xf32>
    %12 = vector.broadcast %11 : vector<1x128xf32> to vector<16x128xf32>
    %13 = arith.addf %10, %12 : vector<16x128xf32>
    %c0_11 = arith.constant 0 : index
    %c0_12 = arith.constant 0 : index
    %14 = vector.load %arg6[%c0_11, %c0_12] : memref<16x128xf32, #tpu.memory_space<vmem>>, vector<16x128xf32>
    tpu.vector_store %arg6[%c0_11, %c0_12], %13 {strides = array<i32>} : memref<16x128xf32, #tpu.memory_space<vmem>>, vector<16x128xf32>,
    %15 = math.tanh %13 : vector<16x128xf32>
    %c0_13 = arith.constant 0 : index
    %c0_14 = arith.constant 0 : index
    %16 = vector.load %arg7[%c0_13, %c0_14] : memref<16x128xf32, #tpu.memory_space<vmem>>, vector<16x128xf32>
    tpu.vector_store %arg7[%c0_13, %c0_14], %15 {strides = array<i32>} : memref<16x128xf32, #tpu.memory_space<vmem>>, vector<16x128xf32>,
    return
  }
  func.func @transform_0(%arg0: i32) -> (i32, i32) {
    %c0_i32 = arith.constant 0 : i32
    %c0_i32_0 = arith.constant 0 : i32
    return %arg0, %c0_i32 : i32, i32
  }
  func.func @transform_1(%arg0: i32) -> (i32, i32) {
    %c0_i32 = arith.constant 0 : i32
    %c0_i32_0 = arith.constant 0 : i32
    %c0_i32_1 = arith.constant 0 : i32
    return %c0_i32, %c0_i32_0 : i32, i32
  }
  func.func @transform_2(%arg0: i32) -> (i32, i32) {
    %c0_i32 = arith.constant 0 : i32
    %c0_i32_0 = arith.constant 0 : i32
    %c0_i32_1 = arith.constant 0 : i32
    return %c0_i32, %c0_i32_0 : i32, i32
  }
  func.func @transform_3(%arg0: i32) -> (i32, i32) {
    %c0_i32 = arith.constant 0 : i32
    %c0_i32_0 = arith.constant 0 : i32
    %c0_i32_1 = arith.constant 0 : i32
    return %c0_i32, %c0_i32_0 : i32, i32
  }
  func.func @transform_4(%arg0: i32) -> (i32, i32) {
    %c0_i32 = arith.constant 0 : i32
    %c0_i32_0 = arith.constant 0 : i32
    %c0_i32_1 = arith.constant 0 : i32
    return %c0_i32, %c0_i32_0 : i32, i32
  }
  func.func @transform_5(%arg0: i32) -> (i32, i32) {
    %c0_i32 = arith.constant 0 : i32
    %c0_i32_0 = arith.constant 0 : i32
    return %arg0, %c0_i32 : i32, i32
  }
  func.func @transform_6(%arg0: i32) -> (i32, i32) {
    %c0_i32 = arith.constant 0 : i32
    %c0_i32_0 = arith.constant 0 : i32
    return %arg0, %c0_i32 : i32, i32
  }
}

</mosaic_0001>

<llo_original>
// kernel: _imgnet_forward_padded.1
$region0: #{_imgnet_forward_padded.1}
  #allocation0 [shape = 'u32[]', space=smem, size = 0x4, offset = 0x4, fixed_abs, tag = 'smem constant byte address 0x4 - core index']
  #allocation1 [shape = 'u32[144,128]{1,0:T(1,128)}', space=vmem, size = 0x12000, scoped, tag = 'internal scratch']
  %s0 = inlined_call_operand.vmem [shape: bf16[16,128], index: 0, kind: input, shape index: {}]
  %s1 = inlined_call_operand.hbm [shape: bf16[128,4096], index: 1, kind: input, shape index: {}]
  %s2 = inlined_call_operand.hbm [shape: f32[1,4096], index: 2, kind: input, shape index: {}]
  %s3 = inlined_call_operand.hbm [shape: bf16[4096,128], index: 3, kind: input, shape index: {}]
  %s4 = inlined_call_operand.vmem [shape: f32[1,128], index: 4, kind: input, shape index: {}]
  %s5 = inlined_call_operand.vmem [shape: f32[16,128], index: 5, kind: output, shape index: {0}]
  %s6 = inlined_call_operand.vmem [shape: f32[16,128], index: 6, kind: output, shape index: {1}]
  %7 = xla_tuple %s5, %s6
  %s8 = sld [smem:[#allocation0]]
  $region50: #{_imgnet_forward_padded.1} parent=0
    _
  %s10 = ssub.s32 1, %s8
  %s11 = scalar_select 0, %s10, %s8
  $region1: #{_imgnet_forward_padded.1} parent=0
    #allocation2 [shape = 'u8[1048576]{0}', space=vmem, size = 0x100000, scoped, tag = 'input window, operand 1, single buffered']
    #allocation3 [shape = 's32[1]{0}', space=sflag, size = 0x4, scoped, tag = 'scoped memory for _imgnet_forward_padded.1']
    #allocation4 [shape = 'u8[16384]{0}', space=vmem, size = 0x4000, scoped, tag = 'input window, operand 2, single buffered']
    #allocation5 [shape = 's32[1]{0}', space=sflag, size = 0x4, scoped, tag = 'scoped memory for _imgnet_forward_padded.1']
    #allocation6 [shape = 'u8[1048576]{0}', space=vmem, size = 0x100000, scoped, tag = 'input window, operand 3, single buffered']
    %12 = vsyncpa [#allocation3], 0
    %13 = vsyncpa [#allocation5], 0
    // Predicated region
    $region2: #{_imgnet_forward_padded.1} parent=1 // pred_check
      _
    $region3: #{_imgnet_forward_padded.1} parent=1 // pred_check_branch
      %15 = sbr.rel (0) target = $region5
    $region4: #{_imgnet_forward_padded.1} parent=1 // pred_region
      _
    $region5: #{_imgnet_forward_padded.1} parent=1 // pred_fallthru
      _
    // Predicated region
    $region6: #{_imgnet_forward_padded.1} parent=1 // pred_check
      _
    $region7: #{_imgnet_forward_padded.1} parent=1 // pred_check_branch
      %17 = sbr.rel (0) target = $region9
    $region8: #{_imgnet_forward_padded.1} parent=1 // pred_region
      %s19 = ssub.s32 32768, 32768
      %20 = vsyncadd [#allocation3], %s19
      %s21 = sshll.u32 [#allocation2], 4
      %s22 = int_to_ptr.vmem [resolvable:$true] %s21
      %27 = dma.hbm_to_vmem [thread:$0]  %s1, 32768, %s22, [#allocation3], 2048, 2048, 128
    $region9: #{_imgnet_forward_padded.1} parent=1 // pred_fallthru
      _
    // Predicated region
    $region10: #{_imgnet_forward_padded.1} parent=1 // pred_check
      _
    $region11: #{_imgnet_forward_padded.1} parent=1 // pred_check_branch
      %29 = sbr.rel (0) target = $region13
    $region12: #{_imgnet_forward_padded.1} parent=1 // pred_region
      %s31 = ssub.s32 512, 512
      %32 = vsyncadd [#allocation5], %s31
      %s34 = sshll.u32 [#allocation4], 4
      %s35 = int_to_ptr.vmem [resolvable:$true] %s34
      %37 = dma.hbm_to_vmem [thread:$0]  %s2, 512, %s35, [#allocation5]
    $region13: #{_imgnet_forward_padded.1} parent=1 // pred_fallthru
      _
    // Predicated region
    $region14: #{_imgnet_forward_padded.1} parent=1 // pred_check
      _
    $region15: #{_imgnet_forward_padded.1} parent=1 // pred_check_branch
      %39 = sbr.rel (0) target = $region17
    $region16: #{_imgnet_forward_padded.1} parent=1 // pred_region
      %s41 = ssub.s32 32768, 32768
      %42 = vsyncadd [#allocation5], %s41
      %s43 = sshll.u32 [#allocation6], 4
      %s44 = int_to_ptr.vmem [resolvable:$true] %s43
      %49 = dma.hbm_to_vmem [thread:$0]  %s3, 32768, %s44, [#allocation5], 64, 64, 4
    $region17: #{_imgnet_forward_padded.1} parent=1 // pred_fallthru
      _
    // Predicated region
    $region18: #{_imgnet_forward_padded.1} parent=1 // pred_check
      _
    $region19: #{_imgnet_forward_padded.1} parent=1 // pred_check_branch
      %51 = sbr.rel (0) target = $region21
    $region20: #{_imgnet_forward_padded.1} parent=1 // pred_region
      _
    $region21: #{_imgnet_forward_padded.1} parent=1 // pred_fallthru
      _
    // Predicated region
    $region22: #{_imgnet_forward_padded.1} parent=1 // pred_check
      _
    $region23: #{_imgnet_forward_padded.1} parent=1 // pred_check_branch
      %53 = sbr.rel (0) target = $region25
    $region24: #{_imgnet_forward_padded.1} parent=1 // pred_region
      %54 = dma.done [#allocation3], 32768
    $region25: #{_imgnet_forward_padded.1} parent=1 // pred_fallthru
      _
    // Predicated region
    $region26: #{_imgnet_forward_padded.1} parent=1 // pred_check
      _
    $region27: #{_imgnet_forward_padded.1} parent=1 // pred_check_branch
      %56 = sbr.rel (0) target = $region29
    $region28: #{_imgnet_forward_padded.1} parent=1 // pred_region
      %57 = dma.done [#allocation5], 512
    $region29: #{_imgnet_forward_padded.1} parent=1 // pred_fallthru
      _
    // Predicated region
    $region30: #{_imgnet_forward_padded.1} parent=1 // pred_check
      _
    $region31: #{_imgnet_forward_padded.1} parent=1 // pred_check_branch
      %59 = sbr.rel (0) target = $region33
    $region32: #{_imgnet_forward_padded.1} parent=1 // pred_region
      %60 = dma.done [#allocation5], 32768
    $region33: #{_imgnet_forward_padded.1} parent=1 // pred_fallthru
      _
    %v62 = vld [vmem:[%s0] sm:$0xf]
    %v63 = vld [vmem:[%s0 + $0x4] sm:$0xf]
    %v64 = vld [vmem:[#allocation2] sm:$0xff]
    %v65 = vld [vmem:[#allocation2 + $0x8] sm:$0xff]
    %v66 = vld [vmem:[#allocation2 + $0x10] sm:$0xff]
    %v67 = vld [vmem:[#allocation2 + $0x18] sm:$0xff]
    %v68 = vld [vmem:[#allocation2 + $0x20] sm:$0xff]
    %v69 = vld [vmem:[#allocation2 + $0x28] sm:$0xff]
    %v70 = vld [vmem:[#allocation2 + $0x30] sm:$0xff]
    %v71 = vld [vmem:[#allocation2 + $0x38] sm:$0xff]
    %v72 = vld [vmem:[#allocation2 + $0x40] sm:$0xff]
    %v73 = vld [vmem:[#allocation2 + $0x48] sm:$0xff]
    %v74 = vld [vmem:[#allocation2 + $0x50] sm:$0xff]
    %v75 = vld [vmem:[#allocation2 + $0x58] sm:$0xff]
    %v76 = vld [vmem:[#allocation2 + $0x60] sm:$0xff]
    %v77 = vld [vmem:[#allocation2 + $0x68] sm:$0xff]
    %v78 = vld [vmem:[#allocation2 + $0x70] sm:$0xff]
    %v79 = vld [vmem:[#allocation2 + $0x78] sm:$0xff]
    %v80 = vld [vmem:[#allocation2 + $0x80] sm:$0xff]
    %v81 = vld [vmem:[#allocation2 + $0x88] sm:$0xff]
    %v82 = vld [vmem:[#allocation2 + $0x90] sm:$0xff]
    %v83 = vld [vmem:[#allocation2 + $0x98] sm:$0xff]
    %v84 = vld [vmem:[#allocation2 + $0xa0] sm:$0xff]
    %v85 = vld [vmem:[#allocation2 + $0xa8] sm:$0xff]
    %v86 = vld [vmem:[#allocation2 + $0xb0] sm:$0xff]
    %v87 = vld [vmem:[#allocation2 + $0xb8] sm:$0xff]
    %v88 = vld [vmem:[#allocation2 + $0xc0] sm:$0xff]
    %v89 = vld [vmem:[#allocation2 + $0xc8] sm:$0xff]
    %v90 = vld [vmem:[#allocation2 + $0xd0] sm:$0xff]
    %v91 = vld [vmem:[#allocation2 + $0xd8] sm:$0xff]
    %v92 = vld [vmem:[#allocation2 + $0xe0] sm:$0xff]
    %v93 = vld [vmem:[#allocation2 + $0xe8] sm:$0xff]
    %v94 = vld [vmem:[#allocation2 + $0xf0] sm:$0xff]
    %v95 = vld [vmem:[#allocation2 + $0xf8] sm:$0xff]
    %v96 = vld [vmem:[#allocation2 + $0x100] sm:$0xff]
    %v97 = vld [vmem:[#allocation2 + $0x108] sm:$0xff]
    %v98 = vld [vmem:[#allocation2 + $0x110] sm:$0xff]
    %v99 = vld [vmem:[#allocation2 + $0x118] sm:$0xff]
    %v100 = vld [vmem:[#allocation2 + $0x120] sm:$0xff]
    %v101 = vld [vmem:[#allocation2 + $0x128] sm:$0xff]
    %v102 = vld [vmem:[#allocation2 + $0x130] sm:$0xff]
    %v103 = vld [vmem:[#allocation2 + $0x138] sm:$0xff]
    %v104 = vld [vmem:[#allocation2 + $0x140] sm:$0xff]
    %v105 = vld [vmem:[#allocation2 + $0x148] sm:$0xff]
    %v106 = vld [vmem:[#allocation2 + $0x150] sm:$0xff]
    %v107 = vld [vmem:[#allocation2 + $0x158] sm:$0xff]
    %v108 = vld [vmem:[#allocation2 + $0x160] sm:$0xff]
    %v109 = vld [vmem:[#allocation2 + $0x168] sm:$0xff]
    %v110 = vld [vmem:[#allocation2 + $0x170] sm:$0xff]
    %v111 = vld [vmem:[#allocation2 + $0x178] sm:$0xff]
    %v112 = vld [vmem:[#allocation2 + $0x180] sm:$0xff]
    %v113 = vld [vmem:[#allocation2 + $0x188] sm:$0xff]
    %v114 = vld [vmem:[#allocation2 + $0x190] sm:$0xff]
    %v115 = vld [vmem:[#allocation2 + $0x198] sm:$0xff]
    %v116 = vld [vmem:[#allocation2 + $0x1a0] sm:$0xff]
    %v117 = vld [vmem:[#allocation2 + $0x1a8] sm:$0xff]
    %v118 = vld [vmem:[#allocation2 + $0x1b0] sm:$0xff]
    %v119 = vld [vmem:[#allocation2 + $0x1b8] sm:$0xff]
    %v120 = vld [vmem:[#allocation2 + $0x1c0] sm:$0xff]
    %v121 = vld [vmem:[#allocation2 + $0x1c8] sm:$0xff]
    %v122 = vld [vmem:[#allocation2 + $0x1d0] sm:$0xff]
    %v123 = vld [vmem:[#allocation2 + $0x1d8] sm:$0xff]
    %v124 = vld [vmem:[#allocation2 + $0x1e0] sm:$0xff]
    %v125 = vld [vmem:[#allocation2 + $0x1e8] sm:$0xff]
    %v126 = vld [vmem:[#allocation2 + $0x1f0] sm:$0xff]
    %v127 = vld [vmem:[#allocation2 + $0x1f8] sm:$0xff]
    %v128 = vld [vmem:[#allocation2 + $0x200] sm:$0xff]
    %v129 = vld [vmem:[#allocation2 + $0x208] sm:$0xff]
    %v130 = vld [vmem:[#allocation2 + $0x210] sm:$0xff]
    %v131 = vld [vmem:[#allocation2 + $0x218] sm:$0xff]
    %v132 = vld [vmem:[#allocation2 + $0x220] sm:$0xff]
    %v133 = vld [vmem:[#allocation2 + $0x228] sm:$0xff]
    %v134 = vld [vmem:[#allocation2 + $0x230] sm:$0xff]
    %v135 = vld [vmem:[#allocation2 + $0x238] sm:$0xff]
    %v136 = vld [vmem:[#allocation2 + $0x240] sm:$0xff]
    %v137 = vld [vmem:[#allocation2 + $0x248] sm:$0xff]
    %v138 = vld [vmem:[#allocation2 + $0x250] sm:$0xff]
    %v139 = vld [vmem:[#allocation2 + $0x258] sm:$0xff]
    %v140 = vld [vmem:[#allocation2 + $0x260] sm:$0xff]
    %v141 = vld [vmem:[#allocation2 + $0x268] sm:$0xff]
    %v142 = vld [vmem:[#allocation2 + $0x270] sm:$0xff]
    %v143 = vld [vmem:[#allocation2 + $0x278] sm:$0xff]
    %v144 = vld [vmem:[#allocation2 + $0x280] sm:$0xff]
    %v145 = vld [vmem:[#allocation2 + $0x288] sm:$0xff]
    %v146 = vld [vmem:[#allocation2 + $0x290] sm:$0xff]
    %v147 = vld [vmem:[#allocation2 + $0x298] sm:$0xff]
    %v148 = vld [vmem:[#allocation2 + $0x2a0] sm:$0xff]
    %v149 = vld [vmem:[#allocation2 + $0x2a8] sm:$0xff]
    %v150 = vld [vmem:[#allocation2 + $0x2b0] sm:$0xff]
    %v151 = vld [vmem:[#allocation2 + $0x2b8] sm:$0xff]
    %v152 = vld [vmem:[#allocation2 + $0x2c0] sm:$0xff]
    %v153 = vld [vmem:[#allocation2 + $0x2c8] sm:$0xff]
    %v154 = vld [vmem:[#allocation2 + $0x2d0] sm:$0xff]
    %v155 = vld [vmem:[#allocation2 + $0x2d8] sm:$0xff]
    %v156 = vld [vmem:[#allocation2 + $0x2e0] sm:$0xff]
    %v157 = vld [vmem:[#allocation2 + $0x2e8] sm:$0xff]
    %v158 = vld [vmem:[#allocation2 + $0x2f0] sm:$0xff]
    %v159 = vld [vmem:[#allocation2 + $0x2f8] sm:$0xff]
    %v160 = vld [vmem:[#allocation2 + $0x300] sm:$0xff]
    %v161 = vld [vmem:[#allocation2 + $0x308] sm:$0xff]
    %v162 = vld [vmem:[#allocation2 + $0x310] sm:$0xff]
    %v163 = vld [vmem:[#allocation2 + $0x318] sm:$0xff]
    %v164 = vld [vmem:[#allocation2 + $0x320] sm:$0xff]
    %v165 = vld [vmem:[#allocation2 + $0x328] sm:$0xff]
    %v166 = vld [vmem:[#allocation2 + $0x330] sm:$0xff]
    %v167 = vld [vmem:[#allocation2 + $0x338] sm:$0xff]
    %v168 = vld [vmem:[#allocation2 + $0x340] sm:$0xff]
    %v169 = vld [vmem:[#allocation2 + $0x348] sm:$0xff]
    %v170 = vld [vmem:[#allocation2 + $0x350] sm:$0xff]
    %v171 = vld [vmem:[#allocation2 + $0x358] sm:$0xff]
    %v172 = vld [vmem:[#allocation2 + $0x360] sm:$0xff]
    %v173 = vld [vmem:[#allocation2 + $0x368] sm:$0xff]
    %v174 = vld [vmem:[#allocation2 + $0x370] sm:$0xff]
    %v175 = vld [vmem:[#allocation2 + $0x378] sm:$0xff]
    %v176 = vld [vmem:[#allocation2 + $0x380] sm:$0xff]
    %v177 = vld [vmem:[#allocation2 + $0x388] sm:$0xff]
    %v178 = vld [vmem:[#allocation2 + $0x390] sm:$0xff]
    %v179 = vld [vmem:[#allocation2 + $0x398] sm:$0xff]
    %v180 = vld [vmem:[#allocation2 + $0x3a0] sm:$0xff]
    %v181 = vld [vmem:[#allocation2 + $0x3a8] sm:$0xff]
    %v182 = vld [vmem:[#allocation2 + $0x3b0] sm:$0xff]
    %v183 = vld [vmem:[#allocation2 + $0x3b8] sm:$0xff]
    %v184 = vld [vmem:[#allocation2 + $0x3c0] sm:$0xff]
    %v185 = vld [vmem:[#allocation2 + $0x3c8] sm:$0xff]
    %v186 = vld [vmem:[#allocation2 + $0x3d0] sm:$0xff]
    %v187 = vld [vmem:[#allocation2 + $0x3d8] sm:$0xff]
    %v188 = vld [vmem:[#allocation2 + $0x3e0] sm:$0xff]
    %v189 = vld [vmem:[#allocation2 + $0x3e8] sm:$0xff]
    %v190 = vld [vmem:[#allocation2 + $0x3f0] sm:$0xff]
    %v191 = vld [vmem:[#allocation2 + $0x3f8] sm:$0xff]
    %v192 = vld [vmem:[#allocation2 + $0x400] sm:$0xff]
    %v193 = vld [vmem:[#allocation2 + $0x408] sm:$0xff]
    %v194 = vld [vmem:[#allocation2 + $0x410] sm:$0xff]
    %v195 = vld [vmem:[#allocation2 + $0x418] sm:$0xff]
    %v196 = vld [vmem:[#allocation2 + $0x420] sm:$0xff]
    %v197 = vld [vmem:[#allocation2 + $0x428] sm:$0xff]
    %v198 = vld [vmem:[#allocation2 + $0x430] sm:$0xff]
    %v199 = vld [vmem:[#allocation2 + $0x438] sm:$0xff]
    %v200 = vld [vmem:[#allocation2 + $0x440] sm:$0xff]
    %v201 = vld [vmem:[#allocation2 + $0x448] sm:$0xff]
    %v202 = vld [vmem:[#allocation2 + $0x450] sm:$0xff]
    %v203 = vld [vmem:[#allocation2 + $0x458] sm:$0xff]
    %v204 = vld [vmem:[#allocation2 + $0x460] sm:$0xff]
    %v205 = vld [vmem:[#allocation2 + $0x468] sm:$0xff]
    %v206 = vld [vmem:[#allocation2 + $0x470] sm:$0xff]
    %v207 = vld [vmem:[#allocation2 + $0x478] sm:$0xff]
    %v208 = vld [vmem:[#allocation2 + $0x480] sm:$0xff]
    %v209 = vld [vmem:[#allocation2 + $0x488] sm:$0xff]
    %v210 = vld [vmem:[#allocation2 + $0x490] sm:$0xff]
    %v211 = vld [vmem:[#allocation2 + $0x498] sm:$0xff]
    %v212 = vld [vmem:[#allocation2 + $0x4a0] sm:$0xff]
    %v213 = vld [vmem:[#allocation2 + $0x4a8] sm:$0xff]
    %v214 = vld [vmem:[#allocation2 + $0x4b0] sm:$0xff]
    %v215 = vld [vmem:[#allocation2 + $0x4b8] sm:$0xff]
    %v216 = vld [vmem:[#allocation2 + $0x4c0] sm:$0xff]
    %v217 = vld [vmem:[#allocation2 + $0x4c8] sm:$0xff]
    %v218 = vld [vmem:[#allocation2 + $0x4d0] sm:$0xff]
    %v219 = vld [vmem:[#allocation2 + $0x4d8] sm:$0xff]
    %v220 = vld [vmem:[#allocation2 + $0x4e0] sm:$0xff]
    %v221 = vld [vmem:[#allocation2 + $0x4e8] sm:$0xff]
    %v222 = vld [vmem:[#allocation2 + $0x4f0] sm:$0xff]
    %v223 = vld [vmem:[#allocation2 + $0x4f8] sm:$0xff]
    %v224 = vld [vmem:[#allocation2 + $0x500] sm:$0xff]
    %v225 = vld [vmem:[#allocation2 + $0x508] sm:$0xff]
    %v226 = vld [vmem:[#allocation2 + $0x510] sm:$0xff]
    %v227 = vld [vmem:[#allocation2 + $0x518] sm:$0xff]
    %v228 = vld [vmem:[#allocation2 + $0x520] sm:$0xff]
    %v229 = vld [vmem:[#allocation2 + $0x528] sm:$0xff]
    %v230 = vld [vmem:[#allocation2 + $0x530] sm:$0xff]
    %v231 = vld [vmem:[#allocation2 + $0x538] sm:$0xff]
    %v232 = vld [vmem:[#allocation2 + $0x540] sm:$0xff]
    %v233 = vld [vmem:[#allocation2 + $0x548] sm:$0xff]
    %v234 = vld [vmem:[#allocation2 + $0x550] sm:$0xff]
    %v235 = vld [vmem:[#allocation2 + $0x558] sm:$0xff]
    %v236 = vld [vmem:[#allocation2 + $0x560] sm:$0xff]
    %v237 = vld [vmem:[#allocation2 + $0x568] sm:$0xff]
    %v238 = vld [vmem:[#allocation2 + $0x570] sm:$0xff]
    %v239 = vld [vmem:[#allocation2 + $0x578] sm:$0xff]
    %v240 = vld [vmem:[#allocation2 + $0x580] sm:$0xff]
    %v241 = vld [vmem:[#allocation2 + $0x588] sm:$0xff]
    %v242 = vld [vmem:[#allocation2 + $0x590] sm:$0xff]
    %v243 = vld [vmem:[#allocation2 + $0x598] sm:$0xff]
    %v244 = vld [vmem:[#allocation2 + $0x5a0] sm:$0xff]
    %v245 = vld [vmem:[#allocation2 + $0x5a8] sm:$0xff]
    %v246 = vld [vmem:[#allocation2 + $0x5b0] sm:$0xff]
    %v247 = vld [vmem:[#allocation2 + $0x5b8] sm:$0xff]
    %v248 = vld [vmem:[#allocation2 + $0x5c0] sm:$0xff]
    %v249 = vld [vmem:[#allocation2 + $0x5c8] sm:$0xff]
    %v250 = vld [vmem:[#allocation2 + $0x5d0] sm:$0xff]
    %v251 = vld [vmem:[#allocation2 + $0x5d8] sm:$0xff]
    %v252 = vld [vmem:[#allocation2 + $0x5e0] sm:$0xff]
    %v253 = vld [vmem:[#allocation2 + $0x5e8] sm:$0xff]
    %v254 = vld [vmem:[#allocation2 + $0x5f0] sm:$0xff]
    %v255 = vld [vmem:[#allocation2 + $0x5f8] sm:$0xff]
    %v256 = vld [vmem:[#allocation2 + $0x600] sm:$0xff]
    %v257 = vld [vmem:[#allocation2 + $0x608] sm:$0xff]
    %v258 = vld [vmem:[#allocation2 + $0x610] sm:$0xff]
    %v259 = vld [vmem:[#allocation2 + $0x618] sm:$0xff]
    %v260 = vld [vmem:[#allocation2 + $0x620] sm:$0xff]
    %v261 = vld [vmem:[#allocation2 + $0x628] sm:$0xff]
    %v262 = vld [vmem:[#allocation2 + $0x630] sm:$0xff]
    %v263 = vld [vmem:[#allocation2 + $0x638] sm:$0xff]
    %v264 = vld [vmem:[#allocation2 + $0x640] sm:$0xff]
    %v265 = vld [vmem:[#allocation2 + $0x648] sm:$0xff]
    %v266 = vld [vmem:[#allocation2 + $0x650] sm:$0xff]
    %v267 = vld [vmem:[#allocation2 + $0x658] sm:$0xff]
    %v268 = vld [vmem:[#allocation2 + $0x660] sm:$0xff]
    %v269 = vld [vmem:[#allocation2 + $0x668] sm:$0xff]
    %v270 = vld [vmem:[#allocation2 + $0x670] sm:$0xff]
    %v271 = vld [vmem:[#allocation2 + $0x678] sm:$0xff]
    %v272 = vld [vmem:[#allocation2 + $0x680] sm:$0xff]
    %v273 = vld [vmem:[#allocation2 + $0x688] sm:$0xff]
    %v274 = vld [vmem:[#allocation2 + $0x690] sm:$0xff]
    %v275 = vld [vmem:[#allocation2 + $0x698] sm:$0xff]
    %v276 = vld [vmem:[#allocation2 + $0x6a0] sm:$0xff]
    %v277 = vld [vmem:[#allocation2 + $0x6a8] sm:$0xff]
    %v278 = vld [vmem:[#allocation2 + $0x6b0] sm:$0xff]
    %v279 = vld [vmem:[#allocation2 + $0x6b8] sm:$0xff]
    %v280 = vld [vmem:[#allocation2 + $0x6c0] sm:$0xff]
    %v281 = vld [vmem:[#allocation2 + $0x6c8] sm:$0xff]
    %v282 = vld [vmem:[#allocation2 + $0x6d0] sm:$0xff]
    %v283 = vld [vmem:[#allocation2 + $0x6d8] sm:$0xff]
    %v284 = vld [vmem:[#allocation2 + $0x6e0] sm:$0xff]
    %v285 = vld [vmem:[#allocation2 + $0x6e8] sm:$0xff]
    %v286 = vld [vmem:[#allocation2 + $0x6f0] sm:$0xff]
    %v287 = vld [vmem:[#allocation2 + $0x6f8] sm:$0xff]
    %v288 = vld [vmem:[#allocation2 + $0x700] sm:$0xff]
    %v289 = vld [vmem:[#allocation2 + $0x708] sm:$0xff]
    %v290 = vld [vmem:[#allocation2 + $0x710] sm:$0xff]
    %v291 = vld [vmem:[#allocation2 + $0x718] sm:$0xff]
    %v292 = vld [vmem:[#allocation2 + $0x720] sm:$0xff]
    %v293 = vld [vmem:[#allocation2 + $0x728] sm:$0xff]
    %v294 = vld [vmem:[#allocation2 + $0x730] sm:$0xff]
    %v295 = vld [vmem:[#allocation2 + $0x738] sm:$0xff]
    %v296 = vld [vmem:[#allocation2 + $0x740] sm:$0xff]
    %v297 = vld [vmem:[#allocation2 + $0x748] sm:$0xff]
    %v298 = vld [vmem:[#allocation2 + $0x750] sm:$0xff]
    %v299 = vld [vmem:[#allocation2 + $0x758] sm:$0xff]
    %v300 = vld [vmem:[#allocation2 + $0x760] sm:$0xff]
    %v301 = vld [vmem:[#allocation2 + $0x768] sm:$0xff]
    %v302 = vld [vmem:[#allocation2 + $0x770] sm:$0xff]
    %v303 = vld [vmem:[#allocation2 + $0x778] sm:$0xff]
    %v304 = vld [vmem:[#allocation2 + $0x780] sm:$0xff]
    %v305 = vld [vmem:[#allocation2 + $0x788] sm:$0xff]
    %v306 = vld [vmem:[#allocation2 + $0x790] sm:$0xff]
    %v307 = vld [vmem:[#allocation2 + $0x798] sm:$0xff]
    %v308 = vld [vmem:[#allocation2 + $0x7a0] sm:$0xff]
    %v309 = vld [vmem:[#allocation2 + $0x7a8] sm:$0xff]
    %v310 = vld [vmem:[#allocation2 + $0x7b0] sm:$0xff]
    %v311 = vld [vmem:[#allocation2 + $0x7b8] sm:$0xff]
    %v312 = vld [vmem:[#allocation2 + $0x7c0] sm:$0xff]
    %v313 = vld [vmem:[#allocation2 + $0x7c8] sm:$0xff]
    %v314 = vld [vmem:[#allocation2 + $0x7d0] sm:$0xff]
    %v315 = vld [vmem:[#allocation2 + $0x7d8] sm:$0xff]
    %v316 = vld [vmem:[#allocation2 + $0x7e0] sm:$0xff]
    %v317 = vld [vmem:[#allocation2 + $0x7e8] sm:$0xff]
    %v318 = vld [vmem:[#allocation2 + $0x7f0] sm:$0xff]
    %v319 = vld [vmem:[#allocation2 + $0x7f8] sm:$0xff]
    %v320 = vld [vmem:[#allocation4] sm:$0xff]
    %v321 = vld [vmem:[#allocation4 + $0x8] sm:$0xff]
    %v322 = vld [vmem:[#allocation4 + $0x10] sm:$0xff]
    %v323 = vld [vmem:[#allocation4 + $0x18] sm:$0xff]
    %v328 = vlaneseq
    %v329 = vshrl.u32 %v328, 7
    %v330 = vsub.s32 0, %v329
    %v331 = vrot.slane %v320, %v330
    %v332 = vlaneseq
    %v333 = vshrl.u32 %v332, 7
    %v334 = vsub.s32 1, %v333
    %v335 = vrot.slane %v320, %v334
    %v336 = vlaneseq
    %v337 = vshrl.u32 %v336, 7
    %v338 = vsub.s32 2, %v337
    %v339 = vrot.slane %v320, %v338
    %v340 = vlaneseq
    %v341 = vshrl.u32 %v340, 7
    %v342 = vsub.s32 3, %v341
    %v343 = vrot.slane %v320, %v342
    %v344 = vlaneseq
    %v345 = vshrl.u32 %v344, 7
    %v346 = vsub.s32 4, %v345
    %v347 = vrot.slane %v320, %v346
    %v348 = vlaneseq
    %v349 = vshrl.u32 %v348, 7
    %v350 = vsub.s32 5, %v349
    %v351 = vrot.slane %v320, %v350
    %v352 = vlaneseq
    %v353 = vshrl.u32 %v352, 7
    %v354 = vsub.s32 6, %v353
    %v355 = vrot.slane %v320, %v354
    %v356 = vlaneseq
    %v357 = vshrl.u32 %v356, 7
    %v358 = vsub.s32 7, %v357
    %v359 = vrot.slane %v320, %v358
    %v360 = vlaneseq
    %v361 = vshrl.u32 %v360, 7
    %v362 = vsub.s32 0, %v361
    %v363 = vrot.slane %v321, %v362
    %v364 = vlaneseq
    %v365 = vshrl.u32 %v364, 7
    %v366 = vsub.s32 1, %v365
    %v367 = vrot.slane %v321, %v366
    %v368 = vlaneseq
    %v369 = vshrl.u32 %v368, 7
    %v370 = vsub.s32 2, %v369
    %v371 = vrot.slane %v321, %v370
    %v372 = vlaneseq
    %v373 = vshrl.u32 %v372, 7
    %v374 = vsub.s32 3, %v373
    %v375 = vrot.slane %v321, %v374
    %v376 = vlaneseq
    %v377 = vshrl.u32 %v376, 7
    %v378 = vsub.s32 4, %v377
    %v379 = vrot.slane %v321, %v378
    %v380 = vlaneseq
    %v381 = vshrl.u32 %v380, 7
    %v382 = vsub.s32 5, %v381
    %v383 = vrot.slane %v321, %v382
    %v384 = vlaneseq
    %v385 = vshrl.u32 %v384, 7
    %v386 = vsub.s32 6, %v385
    %v387 = vrot.slane %v321, %v386
    %v388 = vlaneseq
    %v389 = vshrl.u32 %v388, 7
    %v390 = vsub.s32 7, %v389
    %v391 = vrot.slane %v321, %v390
    %v392 = vlaneseq
    %v393 = vshrl.u32 %v392, 7
    %v394 = vsub.s32 0, %v393
    %v395 = vrot.slane %v322, %v394
    %v396 = vlaneseq
    %v397 = vshrl.u32 %v396, 7
    %v398 = vsub.s32 1, %v397
    %v399 = vrot.slane %v322, %v398
    %v400 = vlaneseq
    %v401 = vshrl.u32 %v400, 7
    %v402 = vsub.s32 2, %v401
    %v403 = vrot.slane %v322, %v402
    %v404 = vlaneseq
    %v405 = vshrl.u32 %v404, 7
    %v406 = vsub.s32 3, %v405
    %v407 = vrot.slane %v322, %v406
    %v408 = vlaneseq
    %v409 = vshrl.u32 %v408, 7
    %v410 = vsub.s32 4, %v409
    %v411 = vrot.slane %v322, %v410
    %v412 = vlaneseq
    %v413 = vshrl.u32 %v412, 7
    %v414 = vsub.s32 5, %v413
    %v415 = vrot.slane %v322, %v414
    %v416 = vlaneseq
    %v417 = vshrl.u32 %v416, 7
    %v418 = vsub.s32 6, %v417
    %v419 = vrot.slane %v322, %v418
    %v420 = vlaneseq
    %v421 = vshrl.u32 %v420, 7
    %v422 = vsub.s32 7, %v421
    %v423 = vrot.slane %v322, %v422
    %v424 = vlaneseq
    %v425 = vshrl.u32 %v424, 7
    %v426 = vsub.s32 0, %v425
    %v427 = vrot.slane %v323, %v426
    %v428 = vlaneseq
    %v429 = vshrl.u32 %v428, 7
    %v430 = vsub.s32 1, %v429
    %v431 = vrot.slane %v323, %v430
    %v432 = vlaneseq
    %v433 = vshrl.u32 %v432, 7
    %v434 = vsub.s32 2, %v433
    %v435 = vrot.slane %v323, %v434
    %v436 = vlaneseq
    %v437 = vshrl.u32 %v436, 7
    %v438 = vsub.s32 3, %v437
    %v439 = vrot.slane %v323, %v438
    %v440 = vlaneseq
    %v441 = vshrl.u32 %v440, 7
    %v442 = vsub.s32 4, %v441
    %v443 = vrot.slane %v323, %v442
    %v444 = vlaneseq
    %v445 = vshrl.u32 %v444, 7
    %v446 = vsub.s32 5, %v445
    %v447 = vrot.slane %v323, %v446
    %v448 = vlaneseq
    %v449 = vshrl.u32 %v448, 7
    %v450 = vsub.s32 6, %v449
    %v451 = vrot.slane %v323, %v450
    %v452 = vlaneseq
    %v453 = vshrl.u32 %v452, 7
    %v454 = vsub.s32 7, %v453
    %v455 = vrot.slane %v323, %v454
    %v490 = vunpack.c.l.b16 %v62
    %v491 = vunpack.c.l.b16 %v63
    %v492 = vpack.c.b16 %v491, %v490
    %v750 = vunpack.c.l.b16 %v64
    %v751 = vunpack.c.h.b16 %v64
    %v752 = vunpack.c.l.b16 %v65
    %v753 = vunpack.c.h.b16 %v65
    %v754 = vunpack.c.l.b16 %v66
    %v755 = vunpack.c.h.b16 %v66
    %v756 = vunpack.c.l.b16 %v67
    %v757 = vunpack.c.h.b16 %v67
    %v758 = vunpack.c.l.b16 %v68
    %v759 = vunpack.c.h.b16 %v68
    %v760 = vunpack.c.l.b16 %v69
    %v761 = vunpack.c.h.b16 %v69
    %v762 = vunpack.c.l.b16 %v70
    %v763 = vunpack.c.h.b16 %v70
    %v764 = vunpack.c.l.b16 %v71
    %v765 = vunpack.c.h.b16 %v71
    %v766 = vunpack.c.l.b16 %v72
    %v767 = vunpack.c.h.b16 %v72
    %v768 = vunpack.c.l.b16 %v73
    %v769 = vunpack.c.h.b16 %v73
    %v770 = vunpack.c.l.b16 %v74
    %v771 = vunpack.c.h.b16 %v74
    %v772 = vunpack.c.l.b16 %v75
    %v773 = vunpack.c.h.b16 %v75
    %v774 = vunpack.c.l.b16 %v76
    %v775 = vunpack.c.h.b16 %v76
    %v776 = vunpack.c.l.b16 %v77
    %v777 = vunpack.c.h.b16 %v77
    %v778 = vunpack.c.l.b16 %v78
    %v779 = vunpack.c.h.b16 %v78
    %v780 = vunpack.c.l.b16 %v79
    %v781 = vunpack.c.h.b16 %v79
    %v782 = vunpack.c.l.b16 %v80
    %v783 = vunpack.c.h.b16 %v80
    %v784 = vunpack.c.l.b16 %v81
    %v785 = vunpack.c.h.b16 %v81
    %v786 = vunpack.c.l.b16 %v82
    %v787 = vunpack.c.h.b16 %v82
    %v788 = vunpack.c.l.b16 %v83
    %v789 = vunpack.c.h.b16 %v83
    %v790 = vunpack.c.l.b16 %v84
    %v791 = vunpack.c.h.b16 %v84
    %v792 = vunpack.c.l.b16 %v85
    %v793 = vunpack.c.h.b16 %v85
    %v794 = vunpack.c.l.b16 %v86
    %v795 = vunpack.c.h.b16 %v86
    %v796 = vunpack.c.l.b16 %v87
    %v797 = vunpack.c.h.b16 %v87
    %v798 = vunpack.c.l.b16 %v88
    %v799 = vunpack.c.h.b16 %v88
    %v800 = vunpack.c.l.b16 %v89
    %v801 = vunpack.c.h.b16 %v89
    %v802 = vunpack.c.l.b16 %v90
    %v803 = vunpack.c.h.b16 %v90
    %v804 = vunpack.c.l.b16 %v91
    %v805 = vunpack.c.h.b16 %v91
    %v806 = vunpack.c.l.b16 %v92
    %v807 = vunpack.c.h.b16 %v92
    %v808 = vunpack.c.l.b16 %v93
    %v809 = vunpack.c.h.b16 %v93
    %v810 = vunpack.c.l.b16 %v94
    %v811 = vunpack.c.h.b16 %v94
    %v812 = vunpack.c.l.b16 %v95
    %v813 = vunpack.c.h.b16 %v95
    %v814 = vunpack.c.l.b16 %v96
    %v815 = vunpack.c.h.b16 %v96
    %v816 = vunpack.c.l.b16 %v97
    %v817 = vunpack.c.h.b16 %v97
    %v818 = vunpack.c.l.b16 %v98
    %v819 = vunpack.c.h.b16 %v98
    %v820 = vunpack.c.l.b16 %v99
    %v821 = vunpack.c.h.b16 %v99
    %v822 = vunpack.c.l.b16 %v100
    %v823 = vunpack.c.h.b16 %v100
    %v824 = vunpack.c.l.b16 %v101
    %v825 = vunpack.c.h.b16 %v101
    %v826 = vunpack.c.l.b16 %v102
    %v827 = vunpack.c.h.b16 %v102
    %v828 = vunpack.c.l.b16 %v103
    %v829 = vunpack.c.h.b16 %v103
    %v830 = vunpack.c.l.b16 %v104
    %v831 = vunpack.c.h.b16 %v104
    %v832 = vunpack.c.l.b16 %v105
    %v833 = vunpack.c.h.b16 %v105
    %v834 = vunpack.c.l.b16 %v106
    %v835 = vunpack.c.h.b16 %v106
    %v836 = vunpack.c.l.b16 %v107
    %v837 = vunpack.c.h.b16 %v107
    %v838 = vunpack.c.l.b16 %v108
    %v839 = vunpack.c.h.b16 %v108
    %v840 = vunpack.c.l.b16 %v109
    %v841 = vunpack.c.h.b16 %v109
    %v842 = vunpack.c.l.b16 %v110
    %v843 = vunpack.c.h.b16 %v110
    %v844 = vunpack.c.l.b16 %v111
    %v845 = vunpack.c.h.b16 %v111
    %v846 = vunpack.c.l.b16 %v112
    %v847 = vunpack.c.h.b16 %v112
    %v848 = vunpack.c.l.b16 %v113
    %v849 = vunpack.c.h.b16 %v113
    %v850 = vunpack.c.l.b16 %v114
    %v851 = vunpack.c.h.b16 %v114
    %v852 = vunpack.c.l.b16 %v115
    %v853 = vunpack.c.h.b16 %v115
    %v854 = vunpack.c.l.b16 %v116
    %v855 = vunpack.c.h.b16 %v116
    %v856 = vunpack.c.l.b16 %v117
    %v857 = vunpack.c.h.b16 %v117
    %v858 = vunpack.c.l.b16 %v118
    %v859 = vunpack.c.h.b16 %v118
    %v860 = vunpack.c.l.b16 %v119
    %v861 = vunpack.c.h.b16 %v119
    %v862 = vunpack.c.l.b16 %v120
    %v863 = vunpack.c.h.b16 %v120
    %v864 = vunpack.c.l.b16 %v121
    %v865 = vunpack.c.h.b16 %v121
    %v866 = vunpack.c.l.b16 %v122
    %v867 = vunpack.c.h.b16 %v122
    %v868 = vunpack.c.l.b16 %v123
    %v869 = vunpack.c.h.b16 %v123
    %v870 = vunpack.c.l.b16 %v124
    %v871 = vunpack.c.h.b16 %v124
    %v872 = vunpack.c.l.b16 %v125
    %v873 = vunpack.c.h.b16 %v125
    %v874 = vunpack.c.l.b16 %v126
    %v875 = vunpack.c.h.b16 %v126
    %v876 = vunpack.c.l.b16 %v127
    %v877 = vunpack.c.h.b16 %v127
    %v878 = vunpack.c.l.b16 %v128
    %v879 = vunpack.c.h.b16 %v128
    %v880 = vunpack.c.l.b16 %v129
    %v881 = vunpack.c.h.b16 %v129
    %v882 = vunpack.c.l.b16 %v130
    %v883 = vunpack.c.h.b16 %v130
    %v884 = vunpack.c.l.b16 %v131
    %v885 = vunpack.c.h.b16 %v131
    %v886 = vunpack.c.l.b16 %v132
    %v887 = vunpack.c.h.b16 %v132
    %v888 = vunpack.c.l.b16 %v133
    %v889 = vunpack.c.h.b16 %v133
    %v890 = vunpack.c.l.b16 %v134
    %v891 = vunpack.c.h.b16 %v134
    %v892 = vunpack.c.l.b16 %v135
    %v893 = vunpack.c.h.b16 %v135
    %v894 = vunpack.c.l.b16 %v136
    %v895 = vunpack.c.h.b16 %v136
    %v896 = vunpack.c.l.b16 %v137
    %v897 = vunpack.c.h.b16 %v137
    %v898 = vunpack.c.l.b16 %v138
    %v899 = vunpack.c.h.b16 %v138
    %v900 = vunpack.c.l.b16 %v139
    %v901 = vunpack.c.h.b16 %v139
    %v902 = vunpack.c.l.b16 %v140
    %v903 = vunpack.c.h.b16 %v140
    %v904 = vunpack.c.l.b16 %v141
    %v905 = vunpack.c.h.b16 %v141
    %v906 = vunpack.c.l.b16 %v142
    %v907 = vunpack.c.h.b16 %v142
    %v908 = vunpack.c.l.b16 %v143
    %v909 = vunpack.c.h.b16 %v143
    %v910 = vunpack.c.l.b16 %v144
    %v911 = vunpack.c.h.b16 %v144
    %v912 = vunpack.c.l.b16 %v145
    %v913 = vunpack.c.h.b16 %v145
    %v914 = vunpack.c.l.b16 %v146
    %v915 = vunpack.c.h.b16 %v146
    %v916 = vunpack.c.l.b16 %v147
    %v917 = vunpack.c.h.b16 %v147
    %v918 = vunpack.c.l.b16 %v148
    %v919 = vunpack.c.h.b16 %v148
    %v920 = vunpack.c.l.b16 %v149
    %v921 = vunpack.c.h.b16 %v149
    %v922 = vunpack.c.l.b16 %v150
    %v923 = vunpack.c.h.b16 %v150
    %v924 = vunpack.c.l.b16 %v151
    %v925 = vunpack.c.h.b16 %v151
    %v926 = vunpack.c.l.b16 %v152
    %v927 = vunpack.c.h.b16 %v152
    %v928 = vunpack.c.l.b16 %v153
    %v929 = vunpack.c.h.b16 %v153
    %v930 = vunpack.c.l.b16 %v154
    %v931 = vunpack.c.h.b16 %v154
    %v932 = vunpack.c.l.b16 %v155
    %v933 = vunpack.c.h.b16 %v155
    %v934 = vunpack.c.l.b16 %v156
    %v935 = vunpack.c.h.b16 %v156
    %v936 = vunpack.c.l.b16 %v157
    %v937 = vunpack.c.h.b16 %v157
    %v938 = vunpack.c.l.b16 %v158
    %v939 = vunpack.c.h.b16 %v158
    %v940 = vunpack.c.l.b16 %v159
    %v941 = vunpack.c.h.b16 %v159
    %v942 = vunpack.c.l.b16 %v160
    %v943 = vunpack.c.h.b16 %v160
    %v944 = vunpack.c.l.b16 %v161
    %v945 = vunpack.c.h.b16 %v161
    %v946 = vunpack.c.l.b16 %v162
    %v947 = vunpack.c.h.b16 %v162
    %v948 = vunpack.c.l.b16 %v163
    %v949 = vunpack.c.h.b16 %v163
    %v950 = vunpack.c.l.b16 %v164
    %v951 = vunpack.c.h.b16 %v164
    %v952 = vunpack.c.l.b16 %v165
    %v953 = vunpack.c.h.b16 %v165
    %v954 = vunpack.c.l.b16 %v166
    %v955 = vunpack.c.h.b16 %v166
    %v956 = vunpack.c.l.b16 %v167
    %v957 = vunpack.c.h.b16 %v167
    %v958 = vunpack.c.l.b16 %v168
    %v959 = vunpack.c.h.b16 %v168
    %v960 = vunpack.c.l.b16 %v169
    %v961 = vunpack.c.h.b16 %v169
    %v962 = vunpack.c.l.b16 %v170
    %v963 = vunpack.c.h.b16 %v170
    %v964 = vunpack.c.l.b16 %v171
    %v965 = vunpack.c.h.b16 %v171
    %v966 = vunpack.c.l.b16 %v172
    %v967 = vunpack.c.h.b16 %v172
    %v968 = vunpack.c.l.b16 %v173
    %v969 = vunpack.c.h.b16 %v173
    %v970 = vunpack.c.l.b16 %v174
    %v971 = vunpack.c.h.b16 %v174
    %v972 = vunpack.c.l.b16 %v175
    %v973 = vunpack.c.h.b16 %v175
    %v974 = vunpack.c.l.b16 %v176
    %v975 = vunpack.c.h.b16 %v176
    %v976 = vunpack.c.l.b16 %v177
    %v977 = vunpack.c.h.b16 %v177
    %v978 = vunpack.c.l.b16 %v178
    %v979 = vunpack.c.h.b16 %v178
    %v980 = vunpack.c.l.b16 %v179
    %v981 = vunpack.c.h.b16 %v179
    %v982 = vunpack.c.l.b16 %v180
    %v983 = vunpack.c.h.b16 %v180
    %v984 = vunpack.c.l.b16 %v181
    %v985 = vunpack.c.h.b16 %v181
    %v986 = vunpack.c.l.b16 %v182
    %v987 = vunpack.c.h.b16 %v182
    %v988 = vunpack.c.l.b16 %v183
    %v989 = vunpack.c.h.b16 %v183
    %v990 = vunpack.c.l.b16 %v184
    %v991 = vunpack.c.h.b16 %v184
    %v992 = vunpack.c.l.b16 %v185
    %v993 = vunpack.c.h.b16 %v185
    %v994 = vunpack.c.l.b16 %v186
    %v995 = vunpack.c.h.b16 %v186
    %v996 = vunpack.c.l.b16 %v187
    %v997 = vunpack.c.h.b16 %v187
    %v998 = vunpack.c.l.b16 %v188
    %v999 = vunpack.c.h.b16 %v188
    %v1000 = vunpack.c.l.b16 %v189
    %v1001 = vunpack.c.h.b16 %v189
    %v1002 = vunpack.c.l.b16 %v190
    %v1003 = vunpack.c.h.b16 %v190
    %v1004 = vunpack.c.l.b16 %v191
    %v1005 = vunpack.c.h.b16 %v191
    %v1006 = vunpack.c.l.b16 %v192
    %v1007 = vunpack.c.h.b16 %v192
    %v1008 = vunpack.c.l.b16 %v193
    %v1009 = vunpack.c.h.b16 %v193
    %v1010 = vunpack.c.l.b16 %v194
    %v1011 = vunpack.c.h.b16 %v194
    %v1012 = vunpack.c.l.b16 %v195
    %v1013 = vunpack.c.h.b16 %v195
    %v1014 = vunpack.c.l.b16 %v196
    %v1015 = vunpack.c.h.b16 %v196
    %v1016 = vunpack.c.l.b16 %v197
    %v1017 = vunpack.c.h.b16 %v197
    %v1018 = vunpack.c.l.b16 %v198
    %v1019 = vunpack.c.h.b16 %v198
    %v1020 = vunpack.c.l.b16 %v199
    %v1021 = vunpack.c.h.b16 %v199
    %v1022 = vunpack.c.l.b16 %v200
    %v1023 = vunpack.c.h.b16 %v200
    %v1024 = vunpack.c.l.b16 %v201
    %v1025 = vunpack.c.h.b16 %v201
    %v1026 = vunpack.c.l.b16 %v202
    %v1027 = vunpack.c.h.b16 %v202
    %v1028 = vunpack.c.l.b16 %v203
    %v1029 = vunpack.c.h.b16 %v203
    %v1030 = vunpack.c.l.b16 %v204
    %v1031 = vunpack.c.h.b16 %v204
    %v1032 = vunpack.c.l.b16 %v205
    %v1033 = vunpack.c.h.b16 %v205
    %v1034 = vunpack.c.l.b16 %v206
    %v1035 = vunpack.c.h.b16 %v206
    %v1036 = vunpack.c.l.b16 %v207
    %v1037 = vunpack.c.h.b16 %v207
    %v1038 = vunpack.c.l.b16 %v208
    %v1039 = vunpack.c.h.b16 %v208
    %v1040 = vunpack.c.l.b16 %v209
    %v1041 = vunpack.c.h.b16 %v209
    %v1042 = vunpack.c.l.b16 %v210
    %v1043 = vunpack.c.h.b16 %v210
    %v1044 = vunpack.c.l.b16 %v211
    %v1045 = vunpack.c.h.b16 %v211
    %v1046 = vunpack.c.l.b16 %v212
    %v1047 = vunpack.c.h.b16 %v212
    %v1048 = vunpack.c.l.b16 %v213
    %v1049 = vunpack.c.h.b16 %v213
    %v1050 = vunpack.c.l.b16 %v214
    %v1051 = vunpack.c.h.b16 %v214
    %v1052 = vunpack.c.l.b16 %v215
    %v1053 = vunpack.c.h.b16 %v215
    %v1054 = vunpack.c.l.b16 %v216
    %v1055 = vunpack.c.h.b16 %v216
    %v1056 = vunpack.c.l.b16 %v217
    %v1057 = vunpack.c.h.b16 %v217
    %v1058 = vunpack.c.l.b16 %v218
    %v1059 = vunpack.c.h.b16 %v218
    %v1060 = vunpack.c.l.b16 %v219
    %v1061 = vunpack.c.h.b16 %v219
    %v1062 = vunpack.c.l.b16 %v220
    %v1063 = vunpack.c.h.b16 %v220
    %v1064 = vunpack.c.l.b16 %v221
    %v1065 = vunpack.c.h.b16 %v221
    %v1066 = vunpack.c.l.b16 %v222
    %v1067 = vunpack.c.h.b16 %v222
    %v1068 = vunpack.c.l.b16 %v223
    %v1069 = vunpack.c.h.b16 %v223
    %v1070 = vunpack.c.l.b16 %v224
    %v1071 = vunpack.c.h.b16 %v224
    %v1072 = vunpack.c.l.b16 %v225
    %v1073 = vunpack.c.h.b16 %v225
    %v1074 = vunpack.c.l.b16 %v226
    %v1075 = vunpack.c.h.b16 %v226
    %v1076 = vunpack.c.l.b16 %v227
    %v1077 = vunpack.c.h.b16 %v227
    %v1078 = vunpack.c.l.b16 %v228
    %v1079 = vunpack.c.h.b16 %v228
    %v1080 = vunpack.c.l.b16 %v229
    %v1081 = vunpack.c.h.b16 %v229
    %v1082 = vunpack.c.l.b16 %v230
    %v1083 = vunpack.c.h.b16 %v230
    %v1084 = vunpack.c.l.b16 %v231
    %v1085 = vunpack.c.h.b16 %v231
    %v1086 = vunpack.c.l.b16 %v232
    %v1087 = vunpack.c.h.b16 %v232
    %v1088 = vunpack.c.l.b16 %v233
    %v1089 = vunpack.c.h.b16 %v233
    %v1090 = vunpack.c.l.b16 %v234
    %v1091 = vunpack.c.h.b16 %v234
    %v1092 = vunpack.c.l.b16 %v235
    %v1093 = vunpack.c.h.b16 %v235
    %v1094 = vunpack.c.l.b16 %v236
    %v1095 = vunpack.c.h.b16 %v236
    %v1096 = vunpack.c.l.b16 %v237
    %v1097 = vunpack.c.h.b16 %v237
    %v1098 = vunpack.c.l.b16 %v238
    %v1099 = vunpack.c.h.b16 %v238
    %v1100 = vunpack.c.l.b16 %v239
    %v1101 = vunpack.c.h.b16 %v239
    %v1102 = vunpack.c.l.b16 %v240
    %v1103 = vunpack.c.h.b16 %v240
    %v1104 = vunpack.c.l.b16 %v241
    %v1105 = vunpack.c.h.b16 %v241
    %v1106 = vunpack.c.l.b16 %v242
    %v1107 = vunpack.c.h.b16 %v242
    %v1108 = vunpack.c.l.b16 %v243
    %v1109 = vunpack.c.h.b16 %v243
    %v1110 = vunpack.c.l.b16 %v244
    %v1111 = vunpack.c.h.b16 %v244
    %v1112 = vunpack.c.l.b16 %v245
    %v1113 = vunpack.c.h.b16 %v245
    %v1114 = vunpack.c.l.b16 %v246
    %v1115 = vunpack.c.h.b16 %v246
    %v1116 = vunpack.c.l.b16 %v247
    %v1117 = vunpack.c.h.b16 %v247
    %v1118 = vunpack.c.l.b16 %v248
    %v1119 = vunpack.c.h.b16 %v248
    %v1120 = vunpack.c.l.b16 %v249
    %v1121 = vunpack.c.h.b16 %v249
    %v1122 = vunpack.c.l.b16 %v250
    %v1123 = vunpack.c.h.b16 %v250
    %v1124 = vunpack.c.l.b16 %v251
    %v1125 = vunpack.c.h.b16 %v251
    %v1126 = vunpack.c.l.b16 %v252
    %v1127 = vunpack.c.h.b16 %v252
    %v1128 = vunpack.c.l.b16 %v253
    %v1129 = vunpack.c.h.b16 %v253
    %v1130 = vunpack.c.l.b16 %v254
    %v1131 = vunpack.c.h.b16 %v254
    %v1132 = vunpack.c.l.b16 %v255
    %v1133 = vunpack.c.h.b16 %v255
    %v1134 = vunpack.c.l.b16 %v256
    %v1135 = vunpack.c.h.b16 %v256
    %v1136 = vunpack.c.l.b16 %v257
    %v1137 = vunpack.c.h.b16 %v257
    %v1138 = vunpack.c.l.b16 %v258
    %v1139 = vunpack.c.h.b16 %v258
    %v1140 = vunpack.c.l.b16 %v259
    %v1141 = vunpack.c.h.b16 %v259
    %v1142 = vunpack.c.l.b16 %v260
    %v1143 = vunpack.c.h.b16 %v260
    %v1144 = vunpack.c.l.b16 %v261
    %v1145 = vunpack.c.h.b16 %v261
    %v1146 = vunpack.c.l.b16 %v262
    %v1147 = vunpack.c.h.b16 %v262
    %v1148 = vunpack.c.l.b16 %v263
    %v1149 = vunpack.c.h.b16 %v263
    %v1150 = vunpack.c.l.b16 %v264
    %v1151 = vunpack.c.h.b16 %v264
    %v1152 = vunpack.c.l.b16 %v265
    %v1153 = vunpack.c.h.b16 %v265
    %v1154 = vunpack.c.l.b16 %v266
    %v1155 = vunpack.c.h.b16 %v266
    %v1156 = vunpack.c.l.b16 %v267
    %v1157 = vunpack.c.h.b16 %v267
    %v1158 = vunpack.c.l.b16 %v268
    %v1159 = vunpack.c.h.b16 %v268
    %v1160 = vunpack.c.l.b16 %v269
    %v1161 = vunpack.c.h.b16 %v269
    %v1162 = vunpack.c.l.b16 %v270
    %v1163 = vunpack.c.h.b16 %v270
    %v1164 = vunpack.c.l.b16 %v271
    %v1165 = vunpack.c.h.b16 %v271
    %v1166 = vunpack.c.l.b16 %v272
    %v1167 = vunpack.c.h.b16 %v272
    %v1168 = vunpack.c.l.b16 %v273
    %v1169 = vunpack.c.h.b16 %v273
    %v1170 = vunpack.c.l.b16 %v274
    %v1171 = vunpack.c.h.b16 %v274
    %v1172 = vunpack.c.l.b16 %v275
    %v1173 = vunpack.c.h.b16 %v275
    %v1174 = vunpack.c.l.b16 %v276
    %v1175 = vunpack.c.h.b16 %v276
    %v1176 = vunpack.c.l.b16 %v277
    %v1177 = vunpack.c.h.b16 %v277
    %v1178 = vunpack.c.l.b16 %v278
    %v1179 = vunpack.c.h.b16 %v278
    %v1180 = vunpack.c.l.b16 %v279
    %v1181 = vunpack.c.h.b16 %v279
    %v1182 = vunpack.c.l.b16 %v280
    %v1183 = vunpack.c.h.b16 %v280
    %v1184 = vunpack.c.l.b16 %v281
    %v1185 = vunpack.c.h.b16 %v281
    %v1186 = vunpack.c.l.b16 %v282
    %v1187 = vunpack.c.h.b16 %v282
    %v1188 = vunpack.c.l.b16 %v283
    %v1189 = vunpack.c.h.b16 %v283
    %v1190 = vunpack.c.l.b16 %v284
    %v1191 = vunpack.c.h.b16 %v284
    %v1192 = vunpack.c.l.b16 %v285
    %v1193 = vunpack.c.h.b16 %v285
    %v1194 = vunpack.c.l.b16 %v286
    %v1195 = vunpack.c.h.b16 %v286
    %v1196 = vunpack.c.l.b16 %v287
    %v1197 = vunpack.c.h.b16 %v287
    %v1198 = vunpack.c.l.b16 %v288
    %v1199 = vunpack.c.h.b16 %v288
    %v1200 = vunpack.c.l.b16 %v289
    %v1201 = vunpack.c.h.b16 %v289
    %v1202 = vunpack.c.l.b16 %v290
    %v1203 = vunpack.c.h.b16 %v290
    %v1204 = vunpack.c.l.b16 %v291
    %v1205 = vunpack.c.h.b16 %v291
    %v1206 = vunpack.c.l.b16 %v292
    %v1207 = vunpack.c.h.b16 %v292
    %v1208 = vunpack.c.l.b16 %v293
    %v1209 = vunpack.c.h.b16 %v293
    %v1210 = vunpack.c.l.b16 %v294
    %v1211 = vunpack.c.h.b16 %v294
    %v1212 = vunpack.c.l.b16 %v295
    %v1213 = vunpack.c.h.b16 %v295
    %v1214 = vunpack.c.l.b16 %v296
    %v1215 = vunpack.c.h.b16 %v296
    %v1216 = vunpack.c.l.b16 %v297
    %v1217 = vunpack.c.h.b16 %v297
    %v1218 = vunpack.c.l.b16 %v298
    %v1219 = vunpack.c.h.b16 %v298
    %v1220 = vunpack.c.l.b16 %v299
    %v1221 = vunpack.c.h.b16 %v299
    %v1222 = vunpack.c.l.b16 %v300
    %v1223 = vunpack.c.h.b16 %v300
    %v1224 = vunpack.c.l.b16 %v301
    %v1225 = vunpack.c.h.b16 %v301
    %v1226 = vunpack.c.l.b16 %v302
    %v1227 = vunpack.c.h.b16 %v302
    %v1228 = vunpack.c.l.b16 %v303
    %v1229 = vunpack.c.h.b16 %v303
    %v1230 = vunpack.c.l.b16 %v304
    %v1231 = vunpack.c.h.b16 %v304
    %v1232 = vunpack.c.l.b16 %v305
    %v1233 = vunpack.c.h.b16 %v305
    %v1234 = vunpack.c.l.b16 %v306
    %v1235 = vunpack.c.h.b16 %v306
    %v1236 = vunpack.c.l.b16 %v307
    %v1237 = vunpack.c.h.b16 %v307
    %v1238 = vunpack.c.l.b16 %v308
    %v1239 = vunpack.c.h.b16 %v308
    %v1240 = vunpack.c.l.b16 %v309
    %v1241 = vunpack.c.h.b16 %v309
    %v1242 = vunpack.c.l.b16 %v310
    %v1243 = vunpack.c.h.b16 %v310
    %v1244 = vunpack.c.l.b16 %v311
    %v1245 = vunpack.c.h.b16 %v311
    %v1246 = vunpack.c.l.b16 %v312
    %v1247 = vunpack.c.h.b16 %v312
    %v1248 = vunpack.c.l.b16 %v313
    %v1249 = vunpack.c.h.b16 %v313
    %v1250 = vunpack.c.l.b16 %v314
    %v1251 = vunpack.c.h.b16 %v314
    %v1252 = vunpack.c.l.b16 %v315
    %v1253 = vunpack.c.h.b16 %v315
    %v1254 = vunpack.c.l.b16 %v316
    %v1255 = vunpack.c.h.b16 %v316
    %v1256 = vunpack.c.l.b16 %v317
    %v1257 = vunpack.c.h.b16 %v317
    %v1258 = vunpack.c.l.b16 %v318
    %v1259 = vunpack.c.h.b16 %v318
    %v1260 = vunpack.c.l.b16 %v319
    %v1261 = vunpack.c.h.b16 %v319
    %v1262 = vpack.c.b16 %v782, %v750
    %v1263 = vpack.c.b16 %v783, %v751
    %v1264 = vpack.c.b16 %v784, %v752
    %v1265 = vpack.c.b16 %v785, %v753
    %v1266 = vpack.c.b16 %v786, %v754
    %v1267 = vpack.c.b16 %v787, %v755
    %v1268 = vpack.c.b16 %v788, %v756
    %v1269 = vpack.c.b16 %v789, %v757
    %v1270 = vpack.c.b16 %v790, %v758
    %v1271 = vpack.c.b16 %v791, %v759
    %v1272 = vpack.c.b16 %v792, %v760
    %v1273 = vpack.c.b16 %v793, %v761
    %v1274 = vpack.c.b16 %v794, %v762
    %v1275 = vpack.c.b16 %v795, %v763
    %v1276 = vpack.c.b16 %v796, %v764
    %v1277 = vpack.c.b16 %v797, %v765
    %v1278 = vpack.c.b16 %v798, %v766
    %v1279 = vpack.c.b16 %v799, %v767
    %v1280 = vpack.c.b16 %v800, %v768
    %v1281 = vpack.c.b16 %v801, %v769
    %v1282 = vpack.c.b16 %v802, %v770
    %v1283 = vpack.c.b16 %v803, %v771
    %v1284 = vpack.c.b16 %v804, %v772
    %v1285 = vpack.c.b16 %v805, %v773
    %v1286 = vpack.c.b16 %v806, %v774
    %v1287 = vpack.c.b16 %v807, %v775
    %v1288 = vpack.c.b16 %v808, %v776
    %v1289 = vpack.c.b16 %v809, %v777
    %v1290 = vpack.c.b16 %v810, %v778
    %v1291 = vpack.c.b16 %v811, %v779
    %v1292 = vpack.c.b16 %v812, %v780
    %v1293 = vpack.c.b16 %v813, %v781
    %v1294 = vpack.c.b16 %v846, %v814
    %v1295 = vpack.c.b16 %v847, %v815
    %v1296 = vpack.c.b16 %v848, %v816
    %v1297 = vpack.c.b16 %v849, %v817
    %v1298 = vpack.c.b16 %v850, %v818
    %v1299 = vpack.c.b16 %v851, %v819
    %v1300 = vpack.c.b16 %v852, %v820
    %v1301 = vpack.c.b16 %v853, %v821
    %v1302 = vpack.c.b16 %v854, %v822
    %v1303 = vpack.c.b16 %v855, %v823
    %v1304 = vpack.c.b16 %v856, %v824
    %v1305 = vpack.c.b16 %v857, %v825
    %v1306 = vpack.c.b16 %v858, %v826
    %v1307 = vpack.c.b16 %v859, %v827
    %v1308 = vpack.c.b16 %v860, %v828
    %v1309 = vpack.c.b16 %v861, %v829
    %v1310 = vpack.c.b16 %v862, %v830
    %v1311 = vpack.c.b16 %v863, %v831
    %v1312 = vpack.c.b16 %v864, %v832
    %v1313 = vpack.c.b16 %v865, %v833
    %v1314 = vpack.c.b16 %v866, %v834
    %v1315 = vpack.c.b16 %v867, %v835
    %v1316 = vpack.c.b16 %v868, %v836
    %v1317 = vpack.c.b16 %v869, %v837
    %v1318 = vpack.c.b16 %v870, %v838
    %v1319 = vpack.c.b16 %v871, %v839
    %v1320 = vpack.c.b16 %v872, %v840
    %v1321 = vpack.c.b16 %v873, %v841
    %v1322 = vpack.c.b16 %v874, %v842
    %v1323 = vpack.c.b16 %v875, %v843
    %v1324 = vpack.c.b16 %v876, %v844
    %v1325 = vpack.c.b16 %v877, %v845
    %v1326 = vpack.c.b16 %v910, %v878
    %v1327 = vpack.c.b16 %v911, %v879
    %v1328 = vpack.c.b16 %v912, %v880
    %v1329 = vpack.c.b16 %v913, %v881
    %v1330 = vpack.c.b16 %v914, %v882
    %v1331 = vpack.c.b16 %v915, %v883
    %v1332 = vpack.c.b16 %v916, %v884
    %v1333 = vpack.c.b16 %v917, %v885
    %v1334 = vpack.c.b16 %v918, %v886
    %v1335 = vpack.c.b16 %v919, %v887
    %v1336 = vpack.c.b16 %v920, %v888
    %v1337 = vpack.c.b16 %v921, %v889
    %v1338 = vpack.c.b16 %v922, %v890
    %v1339 = vpack.c.b16 %v923, %v891
    %v1340 = vpack.c.b16 %v924, %v892
    %v1341 = vpack.c.b16 %v925, %v893
    %v1342 = vpack.c.b16 %v926, %v894
    %v1343 = vpack.c.b16 %v927, %v895
    %v1344 = vpack.c.b16 %v928, %v896
    %v1345 = vpack.c.b16 %v929, %v897
    %v1346 = vpack.c.b16 %v930, %v898
    %v1347 = vpack.c.b16 %v931, %v899
    %v1348 = vpack.c.b16 %v932, %v900
    %v1349 = vpack.c.b16 %v933, %v901
    %v1350 = vpack.c.b16 %v934, %v902
    %v1351 = vpack.c.b16 %v935, %v903
    %v1352 = vpack.c.b16 %v936, %v904
    %v1353 = vpack.c.b16 %v937, %v905
    %v1354 = vpack.c.b16 %v938, %v906
    %v1355 = vpack.c.b16 %v939, %v907
    %v1356 = vpack.c.b16 %v940, %v908
    %v1357 = vpack.c.b16 %v941, %v909
    %v1358 = vpack.c.b16 %v974, %v942
    %v1359 = vpack.c.b16 %v975, %v943
    %v1360 = vpack.c.b16 %v976, %v944
    %v1361 = vpack.c.b16 %v977, %v945
    %v1362 = vpack.c.b16 %v978, %v946
    %v1363 = vpack.c.b16 %v979, %v947
    %v1364 = vpack.c.b16 %v980, %v948
    %v1365 = vpack.c.b16 %v981, %v949
    %v1366 = vpack.c.b16 %v982, %v950
    %v1367 = vpack.c.b16 %v983, %v951
    %v1368 = vpack.c.b16 %v984, %v952
    %v1369 = vpack.c.b16 %v985, %v953
    %v1370 = vpack.c.b16 %v986, %v954
    %v1371 = vpack.c.b16 %v987, %v955
    %v1372 = vpack.c.b16 %v988, %v956
    %v1373 = vpack.c.b16 %v989, %v957
    %v1374 = vpack.c.b16 %v990, %v958
    %v1375 = vpack.c.b16 %v991, %v959
    %v1376 = vpack.c.b16 %v992, %v960
    %v1377 = vpack.c.b16 %v993, %v961
    %v1378 = vpack.c.b16 %v994, %v962
    %v1379 = vpack.c.b16 %v995, %v963
    %v1380 = vpack.c.b16 %v996, %v964
    %v1381 = vpack.c.b16 %v997, %v965
    %v1382 = vpack.c.b16 %v998, %v966
    %v1383 = vpack.c.b16 %v999, %v967
    %v1384 = vpack.c.b16 %v1000, %v968
    %v1385 = vpack.c.b16 %v1001, %v969
    %v1386 = vpack.c.b16 %v1002, %v970
    %v1387 = vpack.c.b16 %v1003, %v971
    %v1388 = vpack.c.b16 %v1004, %v972
    %v1389 = vpack.c.b16 %v1005, %v973
    %v1390 = vpack.c.b16 %v1038, %v1006
    %v1391 = vpack.c.b16 %v1039, %v1007
    %v1392 = vpack.c.b16 %v1040, %v1008
    %v1393 = vpack.c.b16 %v1041, %v1009
    %v1394 = vpack.c.b16 %v1042, %v1010
    %v1395 = vpack.c.b16 %v1043, %v1011
    %v1396 = vpack.c.b16 %v1044, %v1012
    %v1397 = vpack.c.b16 %v1045, %v1013
    %v1398 = vpack.c.b16 %v1046, %v1014
    %v1399 = vpack.c.b16 %v1047, %v1015
    %v1400 = vpack.c.b16 %v1048, %v1016
    %v1401 = vpack.c.b16 %v1049, %v1017
    %v1402 = vpack.c.b16 %v1050, %v1018
    %v1403 = vpack.c.b16 %v1051, %v1019
    %v1404 = vpack.c.b16 %v1052, %v1020
    %v1405 = vpack.c.b16 %v1053, %v1021
    %v1406 = vpack.c.b16 %v1054, %v1022
    %v1407 = vpack.c.b16 %v1055, %v1023
    %v1408 = vpack.c.b16 %v1056, %v1024
    %v1409 = vpack.c.b16 %v1057, %v1025
    %v1410 = vpack.c.b16 %v1058, %v1026
    %v1411 = vpack.c.b16 %v1059, %v1027
    %v1412 = vpack.c.b16 %v1060, %v1028
    %v1413 = vpack.c.b16 %v1061, %v1029
    %v1414 = vpack.c.b16 %v1062, %v1030
    %v1415 = vpack.c.b16 %v1063, %v1031
    %v1416 = vpack.c.b16 %v1064, %v1032
    %v1417 = vpack.c.b16 %v1065, %v1033
    %v1418 = vpack.c.b16 %v1066, %v1034
    %v1419 = vpack.c.b16 %v1067, %v1035
    %v1420 = vpack.c.b16 %v1068, %v1036
    %v1421 = vpack.c.b16 %v1069, %v1037
    %v1422 = vpack.c.b16 %v1102, %v1070
    %v1423 = vpack.c.b16 %v1103, %v1071
    %v1424 = vpack.c.b16 %v1104, %v1072
    %v1425 = vpack.c.b16 %v1105, %v1073
    %v1426 = vpack.c.b16 %v1106, %v1074
    %v1427 = vpack.c.b16 %v1107, %v1075
    %v1428 = vpack.c.b16 %v1108, %v1076
    %v1429 = vpack.c.b16 %v1109, %v1077
    %v1430 = vpack.c.b16 %v1110, %v1078
    %v1431 = vpack.c.b16 %v1111, %v1079
    %v1432 = vpack.c.b16 %v1112, %v1080
    %v1433 = vpack.c.b16 %v1113, %v1081
    %v1434 = vpack.c.b16 %v1114, %v1082
    %v1435 = vpack.c.b16 %v1115, %v1083
    %v1436 = vpack.c.b16 %v1116, %v1084
    %v1437 = vpack.c.b16 %v1117, %v1085
    %v1438 = vpack.c.b16 %v1118, %v1086
    %v1439 = vpack.c.b16 %v1119, %v1087
    %v1440 = vpack.c.b16 %v1120, %v1088
    %v1441 = vpack.c.b16 %v1121, %v1089
    %v1442 = vpack.c.b16 %v1122, %v1090
    %v1443 = vpack.c.b16 %v1123, %v1091
    %v1444 = vpack.c.b16 %v1124, %v1092
    %v1445 = vpack.c.b16 %v1125, %v1093
    %v1446 = vpack.c.b16 %v1126, %v1094
    %v1447 = vpack.c.b16 %v1127, %v1095
    %v1448 = vpack.c.b16 %v1128, %v1096
    %v1449 = vpack.c.b16 %v1129, %v1097
    %v1450 = vpack.c.b16 %v1130, %v1098
    %v1451 = vpack.c.b16 %v1131, %v1099
    %v1452 = vpack.c.b16 %v1132, %v1100
    %v1453 = vpack.c.b16 %v1133, %v1101
    %v1454 = vpack.c.b16 %v1166, %v1134
    %v1455 = vpack.c.b16 %v1167, %v1135
    %v1456 = vpack.c.b16 %v1168, %v1136
    %v1457 = vpack.c.b16 %v1169, %v1137
    %v1458 = vpack.c.b16 %v1170, %v1138
    %v1459 = vpack.c.b16 %v1171, %v1139
    %v1460 = vpack.c.b16 %v1172, %v1140
    %v1461 = vpack.c.b16 %v1173, %v1141
    %v1462 = vpack.c.b16 %v1174, %v1142
    %v1463 = vpack.c.b16 %v1175, %v1143
    %v1464 = vpack.c.b16 %v1176, %v1144
    %v1465 = vpack.c.b16 %v1177, %v1145
    %v1466 = vpack.c.b16 %v1178, %v1146
    %v1467 = vpack.c.b16 %v1179, %v1147
    %v1468 = vpack.c.b16 %v1180, %v1148
    %v1469 = vpack.c.b16 %v1181, %v1149
    %v1470 = vpack.c.b16 %v1182, %v1150
    %v1471 = vpack.c.b16 %v1183, %v1151
    %v1472 = vpack.c.b16 %v1184, %v1152
    %v1473 = vpack.c.b16 %v1185, %v1153
    %v1474 = vpack.c.b16 %v1186, %v1154
    %v1475 = vpack.c.b16 %v1187, %v1155
    %v1476 = vpack.c.b16 %v1188, %v1156
    %v1477 = vpack.c.b16 %v1189, %v1157
    %v1478 = vpack.c.b16 %v1190, %v1158
    %v1479 = vpack.c.b16 %v1191, %v1159
    %v1480 = vpack.c.b16 %v1192, %v1160
    %v1481 = vpack.c.b16 %v1193, %v1161
    %v1482 = vpack.c.b16 %v1194, %v1162
    %v1483 = vpack.c.b16 %v1195, %v1163
    %v1484 = vpack.c.b16 %v1196, %v1164
    %v1485 = vpack.c.b16 %v1197, %v1165
    %v1486 = vpack.c.b16 %v1230, %v1198
    %v1487 = vpack.c.b16 %v1231, %v1199
    %v1488 = vpack.c.b16 %v1232, %v1200
    %v1489 = vpack.c.b16 %v1233, %v1201
    %v1490 = vpack.c.b16 %v1234, %v1202
    %v1491 = vpack.c.b16 %v1235, %v1203
    %v1492 = vpack.c.b16 %v1236, %v1204
    %v1493 = vpack.c.b16 %v1237, %v1205
    %v1494 = vpack.c.b16 %v1238, %v1206
    %v1495 = vpack.c.b16 %v1239, %v1207
    %v1496 = vpack.c.b16 %v1240, %v1208
    %v1497 = vpack.c.b16 %v1241, %v1209
    %v1498 = vpack.c.b16 %v1242, %v1210
    %v1499 = vpack.c.b16 %v1243, %v1211
    %v1500 = vpack.c.b16 %v1244, %v1212
    %v1501 = vpack.c.b16 %v1245, %v1213
    %v1502 = vpack.c.b16 %v1246, %v1214
    %v1503 = vpack.c.b16 %v1247, %v1215
    %v1504 = vpack.c.b16 %v1248, %v1216
    %v1505 = vpack.c.b16 %v1249, %v1217
    %v1506 = vpack.c.b16 %v1250, %v1218
    %v1507 = vpack.c.b16 %v1251, %v1219
    %v1508 = vpack.c.b16 %v1252, %v1220
    %v1509 = vpack.c.b16 %v1253, %v1221
    %v1510 = vpack.c.b16 %v1254, %v1222
    %v1511 = vpack.c.b16 %v1255, %v1223
    %v1512 = vpack.c.b16 %v1256, %v1224
    %v1513 = vpack.c.b16 %v1257, %v1225
    %v1514 = vpack.c.b16 %v1258, %v1226
    %v1515 = vpack.c.b16 %v1259, %v1227
    %v1516 = vpack.c.b16 %v1260, %v1228
    %v1517 = vpack.c.b16 %v1261, %v1229
    %1774 = vmatprep.subr.bf16.mxu0 %v1263
    %1775 = vmatpush1.bf16.msra.mxu0 %v1262
    %1776 = vmatprep.subr.bf16.mxu0 %v1295
    %1777 = vmatpush1.bf16.msra.mxu0 %v1294
    %1778 = vmatprep.subr.bf16.mxu0 %v1327
    %1779 = vmatpush1.bf16.msra.mxu0 %v1326
    %1780 = vmatprep.subr.bf16.mxu0 %v1359
    %1781 = vmatpush1.bf16.msra.mxu0 %v1358
    %1782 = vmatprep.subr.bf16.mxu0 %v1391
    %1783 = vmatpush1.bf16.msra.mxu0 %v1390
    %1784 = vmatprep.subr.bf16.mxu0 %v1423
    %1785 = vmatpush1.bf16.msra.mxu0 %v1422
    %1786 = vmatprep.subr.bf16.mxu0 %v1455
    %1787 = vmatpush1.bf16.msra.mxu0 %v1454
    %1788 = vmatprep.subr.bf16.mxu0 %v1487
    %1789 = vmatpush1.bf16.msra.mxu0 %v1486
    %1790 = vmatprep.subr.bf16.mxu0 0
    %1791 = vmatpush1.bf16.msra.mxu0 0
    %1792 = vmatprep.subr.bf16.mxu0 0
    %1793 = vmatpush1.bf16.msra.mxu0 0
    %1794 = vmatprep.subr.bf16.mxu0 0
    %1795 = vmatpush1.bf16.msra.mxu0 0
    %1796 = vmatprep.subr.bf16.mxu0 0
    %1797 = vmatpush1.bf16.msra.mxu0 0
    %1798 = vmatprep.subr.bf16.mxu0 0
    %1799 = vmatpush1.bf16.msra.mxu0 0
    %1800 = vmatprep.subr.bf16.mxu0 0
    %1801 = vmatpush1.bf16.msra.mxu0 0
    %1802 = vmatprep.subr.bf16.mxu0 0
    %1803 = vmatpush1.bf16.msra.mxu0 0
    %1804 = vmatprep.subr.bf16.mxu0 0
    %1805 = vmatpush1.bf16.msra.mxu0 0
    %1806 = vmatprep.mubr.bf16.mxu0 0
    %1807 = vmatmul.mubr.bf16.gmra.mrb[0].mxu0 %v492
    %v1808 = vpop.f32.mrb[0].mxu0
    %v1809 = vadd.f32 %v331, %v1808
    %v1810 = vpop.f32.mrb[0].mxu0
    %v1811 = vadd.f32 %v335, %v1810
    %v1812 = vpop.f32.mrb[0].mxu0
    %v1813 = vadd.f32 %v331, %v1812
    %v1814 = vpop.f32.mrb[0].mxu0
    %v1815 = vadd.f32 %v335, %v1814
    %1816 = vdwg.mxu0
    %1817 = vmatprep.subr.bf16.mxu0 %v1265
    %1818 = vmatpush1.bf16.msra.mxu0 %v1264
    %1819 = vmatprep.subr.bf16.mxu0 %v1297
    %1820 = vmatpush1.bf16.msra.mxu0 %v1296
    %1821 = vmatprep.subr.bf16.mxu0 %v1329
    %1822 = vmatpush1.bf16.msra.mxu0 %v1328
    %1823 = vmatprep.subr.bf16.mxu0 %v1361
    %1824 = vmatpush1.bf16.msra.mxu0 %v1360
    %1825 = vmatprep.subr.bf16.mxu0 %v1393
    %1826 = vmatpush1.bf16.msra.mxu0 %v1392
    %1827 = vmatprep.subr.bf16.mxu0 %v1425
    %1828 = vmatpush1.bf16.msra.mxu0 %v1424
    %1829 = vmatprep.subr.bf16.mxu0 %v1457
    %1830 = vmatpush1.bf16.msra.mxu0 %v1456
    %1831 = vmatprep.subr.bf16.mxu0 %v1489
    %1832 = vmatpush1.bf16.msra.mxu0 %v1488
    %1833 = vmatprep.subr.bf16.mxu0 0
    %1834 = vmatpush1.bf16.msra.mxu0 0
    %1835 = vmatprep.subr.bf16.mxu0 0
    %1836 = vmatpush1.bf16.msra.mxu0 0
    %1837 = vmatprep.subr.bf16.mxu0 0
    %1838 = vmatpush1.bf16.msra.mxu0 0
    %1839 = vmatprep.subr.bf16.mxu0 0
    %1840 = vmatpush1.bf16.msra.mxu0 0
    %1841 = vmatprep.subr.bf16.mxu0 0
    %1842 = vmatpush1.bf16.msra.mxu0 0
    %1843 = vmatprep.subr.bf16.mxu0 0
    %1844 = vmatpush1.bf16.msra.mxu0 0
    %1845 = vmatprep.subr.bf16.mxu0 0
    %1846 = vmatpush1.bf16.msra.mxu0 0
    %1847 = vmatprep.subr.bf16.mxu0 0
    %1848 = vmatpush1.bf16.msra.mxu0 0
    %1849 = vmatprep.mubr.bf16.mxu0 0
    %1850 = vmatmul.mubr.bf16.gmra.mrb[0].mxu0 %v492
    %v1851 = vpop.f32.mrb[0].mxu0
    %v1852 = vadd.f32 %v339, %v1851
    %v1853 = vpop.f32.mrb[0].mxu0
    %v1854 = vadd.f32 %v343, %v1853
    %v1855 = vpop.f32.mrb[0].mxu0
    %v1856 = vadd.f32 %v339, %v1855
    %v1857 = vpop.f32.mrb[0].mxu0
    %v1858 = vadd.f32 %v343, %v1857
    %1859 = vdwg.mxu0
    %1860 = vmatprep.subr.bf16.mxu0 %v1267
    %1861 = vmatpush1.bf16.msra.mxu0 %v1266
    %1862 = vmatprep.subr.bf16.mxu0 %v1299
    %1863 = vmatpush1.bf16.msra.mxu0 %v1298
    %1864 = vmatprep.subr.bf16.mxu0 %v1331
    %1865 = vmatpush1.bf16.msra.mxu0 %v1330
    %1866 = vmatprep.subr.bf16.mxu0 %v1363
    %1867 = vmatpush1.bf16.msra.mxu0 %v1362
    %1868 = vmatprep.subr.bf16.mxu0 %v1395
    %1869 = vmatpush1.bf16.msra.mxu0 %v1394
    %1870 = vmatprep.subr.bf16.mxu0 %v1427
    %1871 = vmatpush1.bf16.msra.mxu0 %v1426
    %1872 = vmatprep.subr.bf16.mxu0 %v1459
    %1873 = vmatpush1.bf16.msra.mxu0 %v1458
    %1874 = vmatprep.subr.bf16.mxu0 %v1491
    %1875 = vmatpush1.bf16.msra.mxu0 %v1490
    %1876 = vmatprep.subr.bf16.mxu0 0
    %1877 = vmatpush1.bf16.msra.mxu0 0
    %1878 = vmatprep.subr.bf16.mxu0 0
    %1879 = vmatpush1.bf16.msra.mxu0 0
    %1880 = vmatprep.subr.bf16.mxu0 0
    %1881 = vmatpush1.bf16.msra.mxu0 0
    %1882 = vmatprep.subr.bf16.mxu0 0
    %1883 = vmatpush1.bf16.msra.mxu0 0
    %1884 = vmatprep.subr.bf16.mxu0 0
    %1885 = vmatpush1.bf16.msra.mxu0 0
    %1886 = vmatprep.subr.bf16.mxu0 0
    %1887 = vmatpush1.bf16.msra.mxu0 0
    %1888 = vmatprep.subr.bf16.mxu0 0
    %1889 = vmatpush1.bf16.msra.mxu0 0
    %1890 = vmatprep.subr.bf16.mxu0 0
    %1891 = vmatpush1.bf16.msra.mxu0 0
    %1892 = vmatprep.mubr.bf16.mxu0 0
    %1893 = vmatmul.mubr.bf16.gmra.mrb[0].mxu0 %v492
    %v1894 = vpop.f32.mrb[0].mxu0
    %v1895 = vadd.f32 %v347, %v1894
    %v1896 = vpop.f32.mrb[0].mxu0
    %v1897 = vadd.f32 %v351, %v1896
    %v1898 = vpop.f32.mrb[0].mxu0
    %v1899 = vadd.f32 %v347, %v1898
    %v1900 = vpop.f32.mrb[0].mxu0
    %v1901 = vadd.f32 %v351, %v1900
    %1902 = vdwg.mxu0
    %1903 = vmatprep.subr.bf16.mxu0 %v1269
    %1904 = vmatpush1.bf16.msra.mxu0 %v1268
    %1905 = vmatprep.subr.bf16.mxu0 %v1301
    %1906 = vmatpush1.bf16.msra.mxu0 %v1300
    %1907 = vmatprep.subr.bf16.mxu0 %v1333
    %1908 = vmatpush1.bf16.msra.mxu0 %v1332
    %1909 = vmatprep.subr.bf16.mxu0 %v1365
    %1910 = vmatpush1.bf16.msra.mxu0 %v1364
    %1911 = vmatprep.subr.bf16.mxu0 %v1397
    %1912 = vmatpush1.bf16.msra.mxu0 %v1396
    %1913 = vmatprep.subr.bf16.mxu0 %v1429
    %1914 = vmatpush1.bf16.msra.mxu0 %v1428
    %1915 = vmatprep.subr.bf16.mxu0 %v1461
    %1916 = vmatpush1.bf16.msra.mxu0 %v1460
    %1917 = vmatprep.subr.bf16.mxu0 %v1493
    %1918 = vmatpush1.bf16.msra.mxu0 %v1492
    %1919 = vmatprep.subr.bf16.mxu0 0
    %1920 = vmatpush1.bf16.msra.mxu0 0
    %1921 = vmatprep.subr.bf16.mxu0 0
    %1922 = vmatpush1.bf16.msra.mxu0 0
    %1923 = vmatprep.subr.bf16.mxu0 0
    %1924 = vmatpush1.bf16.msra.mxu0 0
    %1925 = vmatprep.subr.bf16.mxu0 0
    %1926 = vmatpush1.bf16.msra.mxu0 0
    %1927 = vmatprep.subr.bf16.mxu0 0
    %1928 = vmatpush1.bf16.msra.mxu0 0
    %1929 = vmatprep.subr.bf16.mxu0 0
    %1930 = vmatpush1.bf16.msra.mxu0 0
    %1931 = vmatprep.subr.bf16.mxu0 0
    %1932 = vmatpush1.bf16.msra.mxu0 0
    %1933 = vmatprep.subr.bf16.mxu0 0
    %1934 = vmatpush1.bf16.msra.mxu0 0
    %1935 = vmatprep.mubr.bf16.mxu0 0
    %1936 = vmatmul.mubr.bf16.gmra.mrb[0].mxu0 %v492
    %v1937 = vpop.f32.mrb[0].mxu0
    %v1938 = vadd.f32 %v355, %v1937
    %v1939 = vpop.f32.mrb[0].mxu0
    %v1940 = vadd.f32 %v359, %v1939
    %v1941 = vpop.f32.mrb[0].mxu0
    %v1942 = vadd.f32 %v355, %v1941
    %v1943 = vpop.f32.mrb[0].mxu0
    %v1944 = vadd.f32 %v359, %v1943
    %1945 = vdwg.mxu0
    %1946 = vmatprep.subr.bf16.mxu0 %v1271
    %1947 = vmatpush1.bf16.msra.mxu0 %v1270
    %1948 = vmatprep.subr.bf16.mxu0 %v1303
    %1949 = vmatpush1.bf16.msra.mxu0 %v1302
    %1950 = vmatprep.subr.bf16.mxu0 %v1335
    %1951 = vmatpush1.bf16.msra.mxu0 %v1334
    %1952 = vmatprep.subr.bf16.mxu0 %v1367
    %1953 = vmatpush1.bf16.msra.mxu0 %v1366
    %1954 = vmatprep.subr.bf16.mxu0 %v1399
    %1955 = vmatpush1.bf16.msra.mxu0 %v1398
    %1956 = vmatprep.subr.bf16.mxu0 %v1431
    %1957 = vmatpush1.bf16.msra.mxu0 %v1430
    %1958 = vmatprep.subr.bf16.mxu0 %v1463
    %1959 = vmatpush1.bf16.msra.mxu0 %v1462
    %1960 = vmatprep.subr.bf16.mxu0 %v1495
    %1961 = vmatpush1.bf16.msra.mxu0 %v1494
    %1962 = vmatprep.subr.bf16.mxu0 0
    %1963 = vmatpush1.bf16.msra.mxu0 0
    %1964 = vmatprep.subr.bf16.mxu0 0
    %1965 = vmatpush1.bf16.msra.mxu0 0
    %1966 = vmatprep.subr.bf16.mxu0 0
    %1967 = vmatpush1.bf16.msra.mxu0 0
    %1968 = vmatprep.subr.bf16.mxu0 0
    %1969 = vmatpush1.bf16.msra.mxu0 0
    %1970 = vmatprep.subr.bf16.mxu0 0
    %1971 = vmatpush1.bf16.msra.mxu0 0
    %1972 = vmatprep.subr.bf16.mxu0 0
    %1973 = vmatpush1.bf16.msra.mxu0 0
    %1974 = vmatprep.subr.bf16.mxu0 0
    %1975 = vmatpush1.bf16.msra.mxu0 0
    %1976 = vmatprep.subr.bf16.mxu0 0
    %1977 = vmatpush1.bf16.msra.mxu0 0
    %1978 = vmatprep.mubr.bf16.mxu0 0
    %1979 = vmatmul.mubr.bf16.gmra.mrb[0].mxu0 %v492
    %v1980 = vpop.f32.mrb[0].mxu0
    %v1981 = vadd.f32 %v363, %v1980
    %v1982 = vpop.f32.mrb[0].mxu0
    %v1983 = vadd.f32 %v367, %v1982
    %v1984 = vpop.f32.mrb[0].mxu0
    %v1985 = vadd.f32 %v363, %v1984
    %v1986 = vpop.f32.mrb[0].mxu0
    %v1987 = vadd.f32 %v367, %v1986
    %1988 = vdwg.mxu0
    %1989 = vmatprep.subr.bf16.mxu0 %v1273
    %1990 = vmatpush1.bf16.msra.mxu0 %v1272
    %1991 = vmatprep.subr.bf16.mxu0 %v1305
    %1992 = vmatpush1.bf16.msra.mxu0 %v1304
    %1993 = vmatprep.subr.bf16.mxu0 %v1337
    %1994 = vmatpush1.bf16.msra.mxu0 %v1336
    %1995 = vmatprep.subr.bf16.mxu0 %v1369
    %1996 = vmatpush1.bf16.msra.mxu0 %v1368
    %1997 = vmatprep.subr.bf16.mxu0 %v1401
    %1998 = vmatpush1.bf16.msra.mxu0 %v1400
    %1999 = vmatprep.subr.bf16.mxu0 %v1433
    %2000 = vmatpush1.bf16.msra.mxu0 %v1432
    %2001 = vmatprep.subr.bf16.mxu0 %v1465
    %2002 = vmatpush1.bf16.msra.mxu0 %v1464
    %2003 = vmatprep.subr.bf16.mxu0 %v1497
    %2004 = vmatpush1.bf16.msra.mxu0 %v1496
    %2005 = vmatprep.subr.bf16.mxu0 0
    %2006 = vmatpush1.bf16.msra.mxu0 0
    %2007 = vmatprep.subr.bf16.mxu0 0
    %2008 = vmatpush1.bf16.msra.mxu0 0
    %2009 = vmatprep.subr.bf16.mxu0 0
    %2010 = vmatpush1.bf16.msra.mxu0 0
    %2011 = vmatprep.subr.bf16.mxu0 0
    %2012 = vmatpush1.bf16.msra.mxu0 0
    %2013 = vmatprep.subr.bf16.mxu0 0
    %2014 = vmatpush1.bf16.msra.mxu0 0
    %2015 = vmatprep.subr.bf16.mxu0 0
    %2016 = vmatpush1.bf16.msra.mxu0 0
    %2017 = vmatprep.subr.bf16.mxu0 0
    %2018 = vmatpush1.bf16.msra.mxu0 0
    %2019 = vmatprep.subr.bf16.mxu0 0
    %2020 = vmatpush1.bf16.msra.mxu0 0
    %2021 = vmatprep.mubr.bf16.mxu0 0
    %2022 = vmatmul.mubr.bf16.gmra.mrb[0].mxu0 %v492
    %v2023 = vpop.f32.mrb[0].mxu0
    %v2024 = vadd.f32 %v371, %v2023
    %v2025 = vpop.f32.mrb[0].mxu0
    %v2026 = vadd.f32 %v375, %v2025
    %v2027 = vpop.f32.mrb[0].mxu0
    %v2028 = vadd.f32 %v371, %v2027
    %v2029 = vpop.f32.mrb[0].mxu0
    %v2030 = vadd.f32 %v375, %v2029
    %2031 = vdwg.mxu0
    %2032 = vmatprep.subr.bf16.mxu0 %v1275
    %2033 = vmatpush1.bf16.msra.mxu0 %v1274
    %2034 = vmatprep.subr.bf16.mxu0 %v1307
    %2035 = vmatpush1.bf16.msra.mxu0 %v1306
    %2036 = vmatprep.subr.bf16.mxu0 %v1339
    %2037 = vmatpush1.bf16.msra.mxu0 %v1338
    %2038 = vmatprep.subr.bf16.mxu0 %v1371
    %2039 = vmatpush1.bf16.msra.mxu0 %v1370
    %2040 = vmatprep.subr.bf16.mxu0 %v1403
    %2041 = vmatpush1.bf16.msra.mxu0 %v1402
    %2042 = vmatprep.subr.bf16.mxu0 %v1435
    %2043 = vmatpush1.bf16.msra.mxu0 %v1434
    %2044 = vmatprep.subr.bf16.mxu0 %v1467
    %2045 = vmatpush1.bf16.msra.mxu0 %v1466
    %2046 = vmatprep.subr.bf16.mxu0 %v1499
    %2047 = vmatpush1.bf16.msra.mxu0 %v1498
    %2048 = vmatprep.subr.bf16.mxu0 0
    %2049 = vmatpush1.bf16.msra.mxu0 0
    %2050 = vmatprep.subr.bf16.mxu0 0
    %2051 = vmatpush1.bf16.msra.mxu0 0
    %2052 = vmatprep.subr.bf16.mxu0 0
    %2053 = vmatpush1.bf16.msra.mxu0 0
    %2054 = vmatprep.subr.bf16.mxu0 0
    %2055 = vmatpush1.bf16.msra.mxu0 0
    %2056 = vmatprep.subr.bf16.mxu0 0
    %2057 = vmatpush1.bf16.msra.mxu0 0
    %2058 = vmatprep.subr.bf16.mxu0 0
    %2059 = vmatpush1.bf16.msra.mxu0 0
    %2060 = vmatprep.subr.bf16.mxu0 0
    %2061 = vmatpush1.bf16.msra.mxu0 0
    %2062 = vmatprep.subr.bf16.mxu0 0
    %2063 = vmatpush1.bf16.msra.mxu0 0
    %2064 = vmatprep.mubr.bf16.mxu0 0
    %2065 = vmatmul.mubr.bf16.gmra.mrb[0].mxu0 %v492
    %v2066 = vpop.f32.mrb[0].mxu0
    %v2067 = vadd.f32 %v379, %v2066
    %v2068 = vpop.f32.mrb[0].mxu0
    %v2069 = vadd.f32 %v383, %v2068
    %v2070 = vpop.f32.mrb[0].mxu0
    %v2071 = vadd.f32 %v379, %v2070
    %v2072 = vpop.f32.mrb[0].mxu0
    %v2073 = vadd.f32 %v383, %v2072
    %2074 = vdwg.mxu0
    %2075 = vmatprep.subr.bf16.mxu0 %v1277
    %2076 = vmatpush1.bf16.msra.mxu0 %v1276
    %2077 = vmatprep.subr.bf16.mxu0 %v1309
    %2078 = vmatpush1.bf16.msra.mxu0 %v1308
    %2079 = vmatprep.subr.bf16.mxu0 %v1341
    %2080 = vmatpush1.bf16.msra.mxu0 %v1340
    %2081 = vmatprep.subr.bf16.mxu0 %v1373
    %2082 = vmatpush1.bf16.msra.mxu0 %v1372
    %2083 = vmatprep.subr.bf16.mxu0 %v1405
    %2084 = vmatpush1.bf16.msra.mxu0 %v1404
    %2085 = vmatprep.subr.bf16.mxu0 %v1437
    %2086 = vmatpush1.bf16.msra.mxu0 %v1436
    %2087 = vmatprep.subr.bf16.mxu0 %v1469
    %2088 = vmatpush1.bf16.msra.mxu0 %v1468
    %2089 = vmatprep.subr.bf16.mxu0 %v1501
    %2090 = vmatpush1.bf16.msra.mxu0 %v1500
    %2091 = vmatprep.subr.bf16.mxu0 0
    %2092 = vmatpush1.bf16.msra.mxu0 0
    %2093 = vmatprep.subr.bf16.mxu0 0
    %2094 = vmatpush1.bf16.msra.mxu0 0
    %2095 = vmatprep.subr.bf16.mxu0 0
    %2096 = vmatpush1.bf16.msra.mxu0 0
    %2097 = vmatprep.subr.bf16.mxu0 0
    %2098 = vmatpush1.bf16.msra.mxu0 0
    %2099 = vmatprep.subr.bf16.mxu0 0
    %2100 = vmatpush1.bf16.msra.mxu0 0
    %2101 = vmatprep.subr.bf16.mxu0 0
    %2102 = vmatpush1.bf16.msra.mxu0 0
    %2103 = vmatprep.subr.bf16.mxu0 0
    %2104 = vmatpush1.bf16.msra.mxu0 0
    %2105 = vmatprep.subr.bf16.mxu0 0
    %2106 = vmatpush1.bf16.msra.mxu0 0
    %2107 = vmatprep.mubr.bf16.mxu0 0
    %2108 = vmatmul.mubr.bf16.gmra.mrb[0].mxu0 %v492
    %v2109 = vpop.f32.mrb[0].mxu0
    %v2110 = vadd.f32 %v387, %v2109
    %v2111 = vpop.f32.mrb[0].mxu0
    %v2112 = vadd.f32 %v391, %v2111
    %v2113 = vpop.f32.mrb[0].mxu0
    %v2114 = vadd.f32 %v387, %v2113
    %v2115 = vpop.f32.mrb[0].mxu0
    %v2116 = vadd.f32 %v391, %v2115
    %2117 = vdwg.mxu0
    %2118 = vmatprep.subr.bf16.mxu0 %v1279
    %2119 = vmatpush1.bf16.msra.mxu0 %v1278
    %2120 = vmatprep.subr.bf16.mxu0 %v1311
    %2121 = vmatpush1.bf16.msra.mxu0 %v1310
    %2122 = vmatprep.subr.bf16.mxu0 %v1343
    %2123 = vmatpush1.bf16.msra.mxu0 %v1342
    %2124 = vmatprep.subr.bf16.mxu0 %v1375
    %2125 = vmatpush1.bf16.msra.mxu0 %v1374
    %2126 = vmatprep.subr.bf16.mxu0 %v1407
    %2127 = vmatpush1.bf16.msra.mxu0 %v1406
    %2128 = vmatprep.subr.bf16.mxu0 %v1439
    %2129 = vmatpush1.bf16.msra.mxu0 %v1438
    %2130 = vmatprep.subr.bf16.mxu0 %v1471
    %2131 = vmatpush1.bf16.msra.mxu0 %v1470
    %2132 = vmatprep.subr.bf16.mxu0 %v1503
    %2133 = vmatpush1.bf16.msra.mxu0 %v1502
    %2134 = vmatprep.subr.bf16.mxu0 0
    %2135 = vmatpush1.bf16.msra.mxu0 0
    %2136 = vmatprep.subr.bf16.mxu0 0
    %2137 = vmatpush1.bf16.msra.mxu0 0
    %2138 = vmatprep.subr.bf16.mxu0 0
    %2139 = vmatpush1.bf16.msra.mxu0 0
    %2140 = vmatprep.subr.bf16.mxu0 0
    %2141 = vmatpush1.bf16.msra.mxu0 0
    %2142 = vmatprep.subr.bf16.mxu0 0
    %2143 = vmatpush1.bf16.msra.mxu0 0
    %2144 = vmatprep.subr.bf16.mxu0 0
    %2145 = vmatpush1.bf16.msra.mxu0 0
    %2146 = vmatprep.subr.bf16.mxu0 0
    %2147 = vmatpush1.bf16.msra.mxu0 0
    %2148 = vmatprep.subr.bf16.mxu0 0
    %2149 = vmatpush1.bf16.msra.mxu0 0
    %2150 = vmatprep.mubr.bf16.mxu0 0
    %2151 = vmatmul.mubr.bf16.gmra.mrb[0].mxu0 %v492
    %v2152 = vpop.f32.mrb[0].mxu0
    %v2153 = vadd.f32 %v395, %v2152
    %v2154 = vpop.f32.mrb[0].mxu0
    %v2155 = vadd.f32 %v399, %v2154
    %v2156 = vpop.f32.mrb[0].mxu0
    %v2157 = vadd.f32 %v395, %v2156
    %v2158 = vpop.f32.mrb[0].mxu0
    %v2159 = vadd.f32 %v399, %v2158
    %2160 = vdwg.mxu0
    %2161 = vmatprep.subr.bf16.mxu0 %v1281
    %2162 = vmatpush1.bf16.msra.mxu0 %v1280
    %2163 = vmatprep.subr.bf16.mxu0 %v1313
    %2164 = vmatpush1.bf16.msra.mxu0 %v1312
    %2165 = vmatprep.subr.bf16.mxu0 %v1345
    %2166 = vmatpush1.bf16.msra.mxu0 %v1344
    %2167 = vmatprep.subr.bf16.mxu0 %v1377
    %2168 = vmatpush1.bf16.msra.mxu0 %v1376
    %2169 = vmatprep.subr.bf16.mxu0 %v1409
    %2170 = vmatpush1.bf16.msra.mxu0 %v1408
    %2171 = vmatprep.subr.bf16.mxu0 %v1441
    %2172 = vmatpush1.bf16.msra.mxu0 %v1440
    %2173 = vmatprep.subr.bf16.mxu0 %v1473
    %2174 = vmatpush1.bf16.msra.mxu0 %v1472
    %2175 = vmatprep.subr.bf16.mxu0 %v1505
    %2176 = vmatpush1.bf16.msra.mxu0 %v1504
    %2177 = vmatprep.subr.bf16.mxu0 0
    %2178 = vmatpush1.bf16.msra.mxu0 0
    %2179 = vmatprep.subr.bf16.mxu0 0
    %2180 = vmatpush1.bf16.msra.mxu0 0
    %2181 = vmatprep.subr.bf16.mxu0 0
    %2182 = vmatpush1.bf16.msra.mxu0 0
    %2183 = vmatprep.subr.bf16.mxu0 0
    %2184 = vmatpush1.bf16.msra.mxu0 0
    %2185 = vmatprep.subr.bf16.mxu0 0
    %2186 = vmatpush1.bf16.msra.mxu0 0
    %2187 = vmatprep.subr.bf16.mxu0 0
    %2188 = vmatpush1.bf16.msra.mxu0 0
    %2189 = vmatprep.subr.bf16.mxu0 0
    %2190 = vmatpush1.bf16.msra.mxu0 0
    %2191 = vmatprep.subr.bf16.mxu0 0
    %2192 = vmatpush1.bf16.msra.mxu0 0
    %2193 = vmatprep.mubr.bf16.mxu0 0
    %2194 = vmatmul.mubr.bf16.gmra.mrb[0].mxu0 %v492
    %v2195 = vpop.f32.mrb[0].mxu0
    %v2196 = vadd.f32 %v403, %v2195
    %v2197 = vpop.f32.mrb[0].mxu0
    %v2198 = vadd.f32 %v407, %v2197
    %v2199 = vpop.f32.mrb[0].mxu0
    %v2200 = vadd.f32 %v403, %v2199
    %v2201 = vpop.f32.mrb[0].mxu0
    %v2202 = vadd.f32 %v407, %v2201
    %2203 = vdwg.mxu0
    %2204 = vmatprep.subr.bf16.mxu0 %v1283
    %2205 = vmatpush1.bf16.msra.mxu0 %v1282
    %2206 = vmatprep.subr.bf16.mxu0 %v1315
    %2207 = vmatpush1.bf16.msra.mxu0 %v1314
    %2208 = vmatprep.subr.bf16.mxu0 %v1347
    %2209 = vmatpush1.bf16.msra.mxu0 %v1346
    %2210 = vmatprep.subr.bf16.mxu0 %v1379
    %2211 = vmatpush1.bf16.msra.mxu0 %v1378
    %2212 = vmatprep.subr.bf16.mxu0 %v1411
    %2213 = vmatpush1.bf16.msra.mxu0 %v1410
    %2214 = vmatprep.subr.bf16.mxu0 %v1443
    %2215 = vmatpush1.bf16.msra.mxu0 %v1442
    %2216 = vmatprep.subr.bf16.mxu0 %v1475
    %2217 = vmatpush1.bf16.msra.mxu0 %v1474
    %2218 = vmatprep.subr.bf16.mxu0 %v1507
    %2219 = vmatpush1.bf16.msra.mxu0 %v1506
    %2220 = vmatprep.subr.bf16.mxu0 0
    %2221 = vmatpush1.bf16.msra.mxu0 0
    %2222 = vmatprep.subr.bf16.mxu0 0
    %2223 = vmatpush1.bf16.msra.mxu0 0
    %2224 = vmatprep.subr.bf16.mxu0 0
    %2225 = vmatpush1.bf16.msra.mxu0 0
    %2226 = vmatprep.subr.bf16.mxu0 0
    %2227 = vmatpush1.bf16.msra.mxu0 0
    %2228 = vmatprep.subr.bf16.mxu0 0
    %2229 = vmatpush1.bf16.msra.mxu0 0
    %2230 = vmatprep.subr.bf16.mxu0 0
    %2231 = vmatpush1.bf16.msra.mxu0 0
    %2232 = vmatprep.subr.bf16.mxu0 0
    %2233 = vmatpush1.bf16.msra.mxu0 0
    %2234 = vmatprep.subr.bf16.mxu0 0
    %2235 = vmatpush1.bf16.msra.mxu0 0
    %2236 = vmatprep.mubr.bf16.mxu0 0
    %2237 = vmatmul.mubr.bf16.gmra.mrb[0].mxu0 %v492
    %v2238 = vpop.f32.mrb[0].mxu0
    %v2239 = vadd.f32 %v411, %v2238
    %v2240 = vpop.f32.mrb[0].mxu0
    %v2241 = vadd.f32 %v415, %v2240
    %v2242 = vpop.f32.mrb[0].mxu0
    %v2243 = vadd.f32 %v411, %v2242
    %v2244 = vpop.f32.mrb[0].mxu0
    %v2245 = vadd.f32 %v415, %v2244
    %2246 = vdwg.mxu0
    %2247 = vmatprep.subr.bf16.mxu0 %v1285
    %2248 = vmatpush1.bf16.msra.mxu0 %v1284
    %2249 = vmatprep.subr.bf16.mxu0 %v1317
    %2250 = vmatpush1.bf16.msra.mxu0 %v1316
    %2251 = vmatprep.subr.bf16.mxu0 %v1349
    %2252 = vmatpush1.bf16.msra.mxu0 %v1348
    %2253 = vmatprep.subr.bf16.mxu0 %v1381
    %2254 = vmatpush1.bf16.msra.mxu0 %v1380
    %2255 = vmatprep.subr.bf16.mxu0 %v1413
    %2256 = vmatpush1.bf16.msra.mxu0 %v1412
    %2257 = vmatprep.subr.bf16.mxu0 %v1445
    %2258 = vmatpush1.bf16.msra.mxu0 %v1444
    %2259 = vmatprep.subr.bf16.mxu0 %v1477
    %2260 = vmatpush1.bf16.msra.mxu0 %v1476
    %2261 = vmatprep.subr.bf16.mxu0 %v1509
    %2262 = vmatpush1.bf16.msra.mxu0 %v1508
    %2263 = vmatprep.subr.bf16.mxu0 0
    %2264 = vmatpush1.bf16.msra.mxu0 0
    %2265 = vmatprep.subr.bf16.mxu0 0
    %2266 = vmatpush1.bf16.msra.mxu0 0
    %2267 = vmatprep.subr.bf16.mxu0 0
    %2268 = vmatpush1.bf16.msra.mxu0 0
    %2269 = vmatprep.subr.bf16.mxu0 0
    %2270 = vmatpush1.bf16.msra.mxu0 0
    %2271 = vmatprep.subr.bf16.mxu0 0
    %2272 = vmatpush1.bf16.msra.mxu0 0
    %2273 = vmatprep.subr.bf16.mxu0 0
    %2274 = vmatpush1.bf16.msra.mxu0 0
    %2275 = vmatprep.subr.bf16.mxu0 0
    %2276 = vmatpush1.bf16.msra.mxu0 0
    %2277 = vmatprep.subr.bf16.mxu0 0
    %2278 = vmatpush1.bf16.msra.mxu0 0
    %2279 = vmatprep.mubr.bf16.mxu0 0
    %2280 = vmatmul.mubr.bf16.gmra.mrb[0].mxu0 %v492
    %v2281 = vpop.f32.mrb[0].mxu0
    %v2282 = vadd.f32 %v419, %v2281
    %v2283 = vpop.f32.mrb[0].mxu0
    %v2284 = vadd.f32 %v423, %v2283
    %v2285 = vpop.f32.mrb[0].mxu0
    %v2286 = vadd.f32 %v419, %v2285
    %v2287 = vpop.f32.mrb[0].mxu0
    %v2288 = vadd.f32 %v423, %v2287
    %2289 = vdwg.mxu0
    %2290 = vmatprep.subr.bf16.mxu0 %v1287
    %2291 = vmatpush1.bf16.msra.mxu0 %v1286
    %2292 = vmatprep.subr.bf16.mxu0 %v1319
    %2293 = vmatpush1.bf16.msra.mxu0 %v1318
    %2294 = vmatprep.subr.bf16.mxu0 %v1351
    %2295 = vmatpush1.bf16.msra.mxu0 %v1350
    %2296 = vmatprep.subr.bf16.mxu0 %v1383
    %2297 = vmatpush1.bf16.msra.mxu0 %v1382
    %2298 = vmatprep.subr.bf16.mxu0 %v1415
    %2299 = vmatpush1.bf16.msra.mxu0 %v1414
    %2300 = vmatprep.subr.bf16.mxu0 %v1447
    %2301 = vmatpush1.bf16.msra.mxu0 %v1446
    %2302 = vmatprep.subr.bf16.mxu0 %v1479
    %2303 = vmatpush1.bf16.msra.mxu0 %v1478
    %2304 = vmatprep.subr.bf16.mxu0 %v1511
    %2305 = vmatpush1.bf16.msra.mxu0 %v1510
    %2306 = vmatprep.subr.bf16.mxu0 0
    %2307 = vmatpush1.bf16.msra.mxu0 0
    %2308 = vmatprep.subr.bf16.mxu0 0
    %2309 = vmatpush1.bf16.msra.mxu0 0
    %2310 = vmatprep.subr.bf16.mxu0 0
    %2311 = vmatpush1.bf16.msra.mxu0 0
    %2312 = vmatprep.subr.bf16.mxu0 0
    %2313 = vmatpush1.bf16.msra.mxu0 0
    %2314 = vmatprep.subr.bf16.mxu0 0
    %2315 = vmatpush1.bf16.msra.mxu0 0
    %2316 = vmatprep.subr.bf16.mxu0 0
    %2317 = vmatpush1.bf16.msra.mxu0 0
    %2318 = vmatprep.subr.bf16.mxu0 0
    %2319 = vmatpush1.bf16.msra.mxu0 0
    %2320 = vmatprep.subr.bf16.mxu0 0
    %2321 = vmatpush1.bf16.msra.mxu0 0
    %2322 = vmatprep.mubr.bf16.mxu0 0
    %2323 = vmatmul.mubr.bf16.gmra.mrb[0].mxu0 %v492
    %v2324 = vpop.f32.mrb[0].mxu0
    %v2325 = vadd.f32 %v427, %v2324
    %v2326 = vpop.f32.mrb[0].mxu0
    %v2327 = vadd.f32 %v431, %v2326
    %v2328 = vpop.f32.mrb[0].mxu0
    %v2329 = vadd.f32 %v427, %v2328
    %v2330 = vpop.f32.mrb[0].mxu0
    %v2331 = vadd.f32 %v431, %v2330
    %2332 = vdwg.mxu0
    %2333 = vmatprep.subr.bf16.mxu0 %v1289
    %2334 = vmatpush1.bf16.msra.mxu0 %v1288
    %2335 = vmatprep.subr.bf16.mxu0 %v1321
    %2336 = vmatpush1.bf16.msra.mxu0 %v1320
    %2337 = vmatprep.subr.bf16.mxu0 %v1353
    %2338 = vmatpush1.bf16.msra.mxu0 %v1352
    %2339 = vmatprep.subr.bf16.mxu0 %v1385
    %2340 = vmatpush1.bf16.msra.mxu0 %v1384
    %2341 = vmatprep.subr.bf16.mxu0 %v1417
    %2342 = vmatpush1.bf16.msra.mxu0 %v1416
    %2343 = vmatprep.subr.bf16.mxu0 %v1449
    %2344 = vmatpush1.bf16.msra.mxu0 %v1448
    %2345 = vmatprep.subr.bf16.mxu0 %v1481
    %2346 = vmatpush1.bf16.msra.mxu0 %v1480
    %2347 = vmatprep.subr.bf16.mxu0 %v1513
    %2348 = vmatpush1.bf16.msra.mxu0 %v1512
    %2349 = vmatprep.subr.bf16.mxu0 0
    %2350 = vmatpush1.bf16.msra.mxu0 0
    %2351 = vmatprep.subr.bf16.mxu0 0
    %2352 = vmatpush1.bf16.msra.mxu0 0
    %2353 = vmatprep.subr.bf16.mxu0 0
    %2354 = vmatpush1.bf16.msra.mxu0 0
    %2355 = vmatprep.subr.bf16.mxu0 0
    %2356 = vmatpush1.bf16.msra.mxu0 0
    %2357 = vmatprep.subr.bf16.mxu0 0
    %2358 = vmatpush1.bf16.msra.mxu0 0
    %2359 = vmatprep.subr.bf16.mxu0 0
    %2360 = vmatpush1.bf16.msra.mxu0 0
    %2361 = vmatprep.subr.bf16.mxu0 0
    %2362 = vmatpush1.bf16.msra.mxu0 0
    %2363 = vmatprep.subr.bf16.mxu0 0
    %2364 = vmatpush1.bf16.msra.mxu0 0
    %2365 = vmatprep.mubr.bf16.mxu0 0
    %2366 = vmatmul.mubr.bf16.gmra.mrb[0].mxu0 %v492
    %v2367 = vpop.f32.mrb[0].mxu0
    %v2368 = vadd.f32 %v435, %v2367
    %v2369 = vpop.f32.mrb[0].mxu0
    %v2370 = vadd.f32 %v439, %v2369
    %v2371 = vpop.f32.mrb[0].mxu0
    %v2372 = vadd.f32 %v435, %v2371
    %v2373 = vpop.f32.mrb[0].mxu0
    %v2374 = vadd.f32 %v439, %v2373
    %2375 = vdwg.mxu0
    %2376 = vmatprep.subr.bf16.mxu0 %v1291
    %2377 = vmatpush1.bf16.msra.mxu0 %v1290
    %2378 = vmatprep.subr.bf16.mxu0 %v1323
    %2379 = vmatpush1.bf16.msra.mxu0 %v1322
    %2380 = vmatprep.subr.bf16.mxu0 %v1355
    %2381 = vmatpush1.bf16.msra.mxu0 %v1354
    %2382 = vmatprep.subr.bf16.mxu0 %v1387
    %2383 = vmatpush1.bf16.msra.mxu0 %v1386
    %2384 = vmatprep.subr.bf16.mxu0 %v1419
    %2385 = vmatpush1.bf16.msra.mxu0 %v1418
    %2386 = vmatprep.subr.bf16.mxu0 %v1451
    %2387 = vmatpush1.bf16.msra.mxu0 %v1450
    %2388 = vmatprep.subr.bf16.mxu0 %v1483
    %2389 = vmatpush1.bf16.msra.mxu0 %v1482
    %2390 = vmatprep.subr.bf16.mxu0 %v1515
    %2391 = vmatpush1.bf16.msra.mxu0 %v1514
    %2392 = vmatprep.subr.bf16.mxu0 0
    %2393 = vmatpush1.bf16.msra.mxu0 0
    %2394 = vmatprep.subr.bf16.mxu0 0
    %2395 = vmatpush1.bf16.msra.mxu0 0
    %2396 = vmatprep.subr.bf16.mxu0 0
    %2397 = vmatpush1.bf16.msra.mxu0 0
    %2398 = vmatprep.subr.bf16.mxu0 0
    %2399 = vmatpush1.bf16.msra.mxu0 0
    %2400 = vmatprep.subr.bf16.mxu0 0
    %2401 = vmatpush1.bf16.msra.mxu0 0
    %2402 = vmatprep.subr.bf16.mxu0 0
    %2403 = vmatpush1.bf16.msra.mxu0 0
    %2404 = vmatprep.subr.bf16.mxu0 0
    %2405 = vmatpush1.bf16.msra.mxu0 0
    %2406 = vmatprep.subr.bf16.mxu0 0
    %2407 = vmatpush1.bf16.msra.mxu0 0
    %2408 = vmatprep.mubr.bf16.mxu0 0
    %2409 = vmatmul.mubr.bf16.gmra.mrb[0].mxu0 %v492
    %v2410 = vpop.f32.mrb[0].mxu0
    %v2411 = vadd.f32 %v443, %v2410
    %v2412 = vpop.f32.mrb[0].mxu0
    %v2413 = vadd.f32 %v447, %v2412
    %v2414 = vpop.f32.mrb[0].mxu0
    %v2415 = vadd.f32 %v443, %v2414
    %v2416 = vpop.f32.mrb[0].mxu0
    %v2417 = vadd.f32 %v447, %v2416
    %2418 = vdwg.mxu0
    %2419 = vmatprep.subr.bf16.mxu0 %v1293
    %2420 = vmatpush1.bf16.msra.mxu0 %v1292
    %2421 = vmatprep.subr.bf16.mxu0 %v1325
    %2422 = vmatpush1.bf16.msra.mxu0 %v1324
    %2423 = vmatprep.subr.bf16.mxu0 %v1357
    %2424 = vmatpush1.bf16.msra.mxu0 %v1356
    %2425 = vmatprep.subr.bf16.mxu0 %v1389
    %2426 = vmatpush1.bf16.msra.mxu0 %v1388
    %2427 = vmatprep.subr.bf16.mxu0 %v1421
    %2428 = vmatpush1.bf16.msra.mxu0 %v1420
    %2429 = vmatprep.subr.bf16.mxu0 %v1453
    %2430 = vmatpush1.bf16.msra.mxu0 %v1452
    %2431 = vmatprep.subr.bf16.mxu0 %v1485
    %2432 = vmatpush1.bf16.msra.mxu0 %v1484
    %2433 = vmatprep.subr.bf16.mxu0 %v1517
    %2434 = vmatpush1.bf16.msra.mxu0 %v1516
    %2435 = vmatprep.subr.bf16.mxu0 0
    %2436 = vmatpush1.bf16.msra.mxu0 0
    %2437 = vmatprep.subr.bf16.mxu0 0
    %2438 = vmatpush1.bf16.msra.mxu0 0
    %2439 = vmatprep.subr.bf16.mxu0 0
    %2440 = vmatpush1.bf16.msra.mxu0 0
    %2441 = vmatprep.subr.bf16.mxu0 0
    %2442 = vmatpush1.bf16.msra.mxu0 0
    %2443 = vmatprep.subr.bf16.mxu0 0
    %2444 = vmatpush1.bf16.msra.mxu0 0
    %2445 = vmatprep.subr.bf16.mxu0 0
    %2446 = vmatpush1.bf16.msra.mxu0 0
    %2447 = vmatprep.subr.bf16.mxu0 0
    %2448 = vmatpush1.bf16.msra.mxu0 0
    %2449 = vmatprep.subr.bf16.mxu0 0
    %2450 = vmatpush1.bf16.msra.mxu0 0
    %2451 = vmatprep.mubr.bf16.mxu0 0
    %2452 = vmatmul.mubr.bf16.gmra.mrb[0].mxu0 %v492
    %v2453 = vpop.f32.mrb[0].mxu0
    %v2454 = vadd.f32 %v451, %v2453
    %v2455 = vpop.f32.mrb[0].mxu0
    %v2456 = vadd.f32 %v455, %v2455
    %v2457 = vpop.f32.mrb[0].mxu0
    %v2458 = vadd.f32 %v451, %v2457
    %v2459 = vpop.f32.mrb[0].mxu0
    %v2460 = vadd.f32 %v455, %v2459
    %2461 = vdwg.mxu0
    %v2462 = vmax.f32 %v1809, 0.0
    %v2463 = vmax.f32 %v1811, 0.0
    %v2464 = vmax.f32 %v1852, 0.0
    %v2465 = vmax.f32 %v1854, 0.0
    %v2466 = vmax.f32 %v1895, 0.0
    %v2467 = vmax.f32 %v1897, 0.0
    %v2468 = vmax.f32 %v1938, 0.0
    %v2469 = vmax.f32 %v1940, 0.0
    %v2470 = vmax.f32 %v1981, 0.0
    %v2471 = vmax.f32 %v1983, 0.0
    %v2472 = vmax.f32 %v2024, 0.0
    %v2473 = vmax.f32 %v2026, 0.0
    %v2474 = vmax.f32 %v2067, 0.0
    %v2475 = vmax.f32 %v2069, 0.0
    %v2476 = vmax.f32 %v2110, 0.0
    %v2477 = vmax.f32 %v2112, 0.0
    %v2478 = vmax.f32 %v2153, 0.0
    %v2479 = vmax.f32 %v2155, 0.0
    %v2480 = vmax.f32 %v2196, 0.0
    %v2481 = vmax.f32 %v2198, 0.0
    %v2482 = vmax.f32 %v2239, 0.0
    %v2483 = vmax.f32 %v2241, 0.0
    %v2484 = vmax.f32 %v2282, 0.0
    %v2485 = vmax.f32 %v2284, 0.0
    %v2486 = vmax.f32 %v2325, 0.0
    %v2487 = vmax.f32 %v2327, 0.0
    %v2488 = vmax.f32 %v2368, 0.0
    %v2489 = vmax.f32 %v2370, 0.0
    %v2490 = vmax.f32 %v2411, 0.0
    %v2491 = vmax.f32 %v2413, 0.0
    %v2492 = vmax.f32 %v2454, 0.0
    %v2493 = vmax.f32 %v2456, 0.0
    %v2494 = vmax.f32 %v1813, 0.0
    %v2495 = vmax.f32 %v1815, 0.0
    %v2496 = vmax.f32 %v1856, 0.0
    %v2497 = vmax.f32 %v1858, 0.0
    %v2498 = vmax.f32 %v1899, 0.0
    %v2499 = vmax.f32 %v1901, 0.0
    %v2500 = vmax.f32 %v1942, 0.0
    %v2501 = vmax.f32 %v1944, 0.0
    %v2502 = vmax.f32 %v1985, 0.0
    %v2503 = vmax.f32 %v1987, 0.0
    %v2504 = vmax.f32 %v2028, 0.0
    %v2505 = vmax.f32 %v2030, 0.0
    %v2506 = vmax.f32 %v2071, 0.0
    %v2507 = vmax.f32 %v2073, 0.0
    %v2508 = vmax.f32 %v2114, 0.0
    %v2509 = vmax.f32 %v2116, 0.0
    %v2510 = vmax.f32 %v2157, 0.0
    %v2511 = vmax.f32 %v2159, 0.0
    %v2512 = vmax.f32 %v2200, 0.0
    %v2513 = vmax.f32 %v2202, 0.0
    %v2514 = vmax.f32 %v2243, 0.0
    %v2515 = vmax.f32 %v2245, 0.0
    %v2516 = vmax.f32 %v2286, 0.0
    %v2517 = vmax.f32 %v2288, 0.0
    %v2518 = vmax.f32 %v2329, 0.0
    %v2519 = vmax.f32 %v2331, 0.0
    %v2520 = vmax.f32 %v2372, 0.0
    %v2521 = vmax.f32 %v2374, 0.0
    %v2522 = vmax.f32 %v2415, 0.0
    %v2523 = vmax.f32 %v2417, 0.0
    %v2524 = vmax.f32 %v2458, 0.0
    %v2525 = vmax.f32 %v2460, 0.0
    %v2526 = vpack.c.bf16 %v2494, %v2462
    %v2527 = vpack.c.bf16 %v2495, %v2463
    %v2528 = vpack.c.bf16 %v2496, %v2464
    %v2529 = vpack.c.bf16 %v2497, %v2465
    %v2530 = vpack.c.bf16 %v2498, %v2466
    %v2531 = vpack.c.bf16 %v2499, %v2467
    %v2532 = vpack.c.bf16 %v2500, %v2468
    %v2533 = vpack.c.bf16 %v2501, %v2469
    %v2534 = vpack.c.bf16 %v2502, %v2470
    %v2535 = vpack.c.bf16 %v2503, %v2471
    %v2536 = vpack.c.bf16 %v2504, %v2472
    %v2537 = vpack.c.bf16 %v2505, %v2473
    %v2538 = vpack.c.bf16 %v2506, %v2474
    %v2539 = vpack.c.bf16 %v2507, %v2475
    %v2540 = vpack.c.bf16 %v2508, %v2476
    %v2541 = vpack.c.bf16 %v2509, %v2477
    %v2542 = vpack.c.bf16 %v2510, %v2478
    %v2543 = vpack.c.bf16 %v2511, %v2479
    %v2544 = vpack.c.bf16 %v2512, %v2480
    %v2545 = vpack.c.bf16 %v2513, %v2481
    %v2546 = vpack.c.bf16 %v2514, %v2482
    %v2547 = vpack.c.bf16 %v2515, %v2483
    %v2548 = vpack.c.bf16 %v2516, %v2484
    %v2549 = vpack.c.bf16 %v2517, %v2485
    %v2550 = vpack.c.bf16 %v2518, %v2486
    %v2551 = vpack.c.bf16 %v2519, %v2487
    %v2552 = vpack.c.bf16 %v2520, %v2488
    %v2553 = vpack.c.bf16 %v2521, %v2489
    %v2554 = vpack.c.bf16 %v2522, %v2490
    %v2555 = vpack.c.bf16 %v2523, %v2491
    %v2556 = vpack.c.bf16 %v2524, %v2492
    %v2557 = vpack.c.bf16 %v2525, %v2493
    %v2558 = vld [vmem:[#allocation6] sm:$0xf]
    %v2559 = vld [vmem:[#allocation6 + $0x4] sm:$0xf]
    %v2560 = vld [vmem:[#allocation6 + $0x8] sm:$0xf]
    %v2561 = vld [vmem:[#allocation6 + $0xc] sm:$0xf]
    %v2562 = vld [vmem:[#allocation6 + $0x10] sm:$0xf]
    %v2563 = vld [vmem:[#allocation6 + $0x14] sm:$0xf]
    %v2564 = vld [vmem:[#allocation6 + $0x18] sm:$0xf]
    %v2565 = vld [vmem:[#allocation6 + $0x1c] sm:$0xf]
    %v2566 = vld [vmem:[#allocation6 + $0x20] sm:$0xf]
    %v2567 = vld [vmem:[#allocation6 + $0x24] sm:$0xf]
    %v2568 = vld [vmem:[#allocation6 + $0x28] sm:$0xf]
    %v2569 = vld [vmem:[#allocation6 + $0x2c] sm:$0xf]
    %v2570 = vld [vmem:[#allocation6 + $0x30] sm:$0xf]
    %v2571 = vld [vmem:[#allocation6 + $0x34] sm:$0xf]
    %v2572 = vld [vmem:[#allocation6 + $0x38] sm:$0xf]
    %v2573 = vld [vmem:[#allocation6 + $0x3c] sm:$0xf]
    %v2574 = vld [vmem:[#allocation6 + $0x40] sm:$0xf]
    %v2575 = vld [vmem:[#allocation6 + $0x44] sm:$0xf]
    %v2576 = vld [vmem:[#allocation6 + $0x48] sm:$0xf]
    %v2577 = vld [vmem:[#allocation6 + $0x4c] sm:$0xf]
    %v2578 = vld [vmem:[#allocation6 + $0x50] sm:$0xf]
    %v2579 = vld [vmem:[#allocation6 + $0x54] sm:$0xf]
    %v2580 = vld [vmem:[#allocation6 + $0x58] sm:$0xf]
    %v2581 = vld [vmem:[#allocation6 + $0x5c] sm:$0xf]
    %v2582 = vld [vmem:[#allocation6 + $0x60] sm:$0xf]
    %v2583 = vld [vmem:[#allocation6 + $0x64] sm:$0xf]
    %v2584 = vld [vmem:[#allocation6 + $0x68] sm:$0xf]
    %v2585 = vld [vmem:[#allocation6 + $0x6c] sm:$0xf]
    %v2586 = vld [vmem:[#allocation6 + $0x70] sm:$0xf]
    %v2587 = vld [vmem:[#allocation6 + $0x74] sm:$0xf]
    %v2588 = vld [vmem:[#allocation6 + $0x78] sm:$0xf]
    %v2589 = vld [vmem:[#allocation6 + $0x7c] sm:$0xf]
    %v2590 = vld [vmem:[#allocation6 + $0x80] sm:$0xf]
    %v2591 = vld [vmem:[#allocation6 + $0x84] sm:$0xf]
    %v2592 = vld [vmem:[#allocation6 + $0x88] sm:$0xf]
    %v2593 = vld [vmem:[#allocation6 + $0x8c] sm:$0xf]
    %v2594 = vld [vmem:[#allocation6 + $0x90] sm:$0xf]
    %v2595 = vld [vmem:[#allocation6 + $0x94] sm:$0xf]
    %v2596 = vld [vmem:[#allocation6 + $0x98] sm:$0xf]
    %v2597 = vld [vmem:[#allocation6 + $0x9c] sm:$0xf]
    %v2598 = vld [vmem:[#allocation6 + $0xa0] sm:$0xf]
    %v2599 = vld [vmem:[#allocation6 + $0xa4] sm:$0xf]
    %v2600 = vld [vmem:[#allocation6 + $0xa8] sm:$0xf]
    %v2601 = vld [vmem:[#allocation6 + $0xac] sm:$0xf]
    %v2602 = vld [vmem:[#allocation6 + $0xb0] sm:$0xf]
    %v2603 = vld [vmem:[#allocation6 + $0xb4] sm:$0xf]
    %v2604 = vld [vmem:[#allocation6 + $0xb8] sm:$0xf]
    %v2605 = vld [vmem:[#allocation6 + $0xbc] sm:$0xf]
    %v2606 = vld [vmem:[#allocation6 + $0xc0] sm:$0xf]
    %v2607 = vld [vmem:[#allocation6 + $0xc4] sm:$0xf]
    %v2608 = vld [vmem:[#allocation6 + $0xc8] sm:$0xf]
    %v2609 = vld [vmem:[#allocation6 + $0xcc] sm:$0xf]
    %v2610 = vld [vmem:[#allocation6 + $0xd0] sm:$0xf]
    %v2611 = vld [vmem:[#allocation6 + $0xd4] sm:$0xf]
    %v2612 = vld [vmem:[#allocation6 + $0xd8] sm:$0xf]
    %v2613 = vld [vmem:[#allocation6 + $0xdc] sm:$0xf]
    %v2614 = vld [vmem:[#allocation6 + $0xe0] sm:$0xf]
    %v2615 = vld [vmem:[#allocation6 + $0xe4] sm:$0xf]
    %v2616 = vld [vmem:[#allocation6 + $0xe8] sm:$0xf]
    %v2617 = vld [vmem:[#allocation6 + $0xec] sm:$0xf]
    %v2618 = vld [vmem:[#allocation6 + $0xf0] sm:$0xf]
    %v2619 = vld [vmem:[#allocation6 + $0xf4] sm:$0xf]
    %v2620 = vld [vmem:[#allocation6 + $0xf8] sm:$0xf]
    %v2621 = vld [vmem:[#allocation6 + $0xfc] sm:$0xf]
    %v2622 = vld [vmem:[#allocation6 + $0x100] sm:$0xf]
    %v2623 = vld [vmem:[#allocation6 + $0x104] sm:$0xf]
    %v2624 = vld [vmem:[#allocation6 + $0x108] sm:$0xf]
    %v2625 = vld [vmem:[#allocation6 + $0x10c] sm:$0xf]
    %v2626 = vld [vmem:[#allocation6 + $0x110] sm:$0xf]
    %v2627 = vld [vmem:[#allocation6 + $0x114] sm:$0xf]
    %v2628 = vld [vmem:[#allocation6 + $0x118] sm:$0xf]
    %v2629 = vld [vmem:[#allocation6 + $0x11c] sm:$0xf]
    %v2630 = vld [vmem:[#allocation6 + $0x120] sm:$0xf]
    %v2631 = vld [vmem:[#allocation6 + $0x124] sm:$0xf]
    %v2632 = vld [vmem:[#allocation6 + $0x128] sm:$0xf]
    %v2633 = vld [vmem:[#allocation6 + $0x12c] sm:$0xf]
    %v2634 = vld [vmem:[#allocation6 + $0x130] sm:$0xf]
    %v2635 = vld [vmem:[#allocation6 + $0x134] sm:$0xf]
    %v2636 = vld [vmem:[#allocation6 + $0x138] sm:$0xf]
    %v2637 = vld [vmem:[#allocation6 + $0x13c] sm:$0xf]
    %v2638 = vld [vmem:[#allocation6 + $0x140] sm:$0xf]
    %v2639 = vld [vmem:[#allocation6 + $0x144] sm:$0xf]
    %v2640 = vld [vmem:[#allocation6 + $0x148] sm:$0xf]
    %v2641 = vld [vmem:[#allocation6 + $0x14c] sm:$0xf]
    %v2642 = vld [vmem:[#allocation6 + $0x150] sm:$0xf]
    %v2643 = vld [vmem:[#allocation6 + $0x154] sm:$0xf]
    %v2644 = vld [vmem:[#allocation6 + $0x158] sm:$0xf]
    %v2645 = vld [vmem:[#allocation6 + $0x15c] sm:$0xf]
    %v2646 = vld [vmem:[#allocation6 + $0x160] sm:$0xf]
    %v2647 = vld [vmem:[#allocation6 + $0x164] sm:$0xf]
    %v2648 = vld [vmem:[#allocation6 + $0x168] sm:$0xf]
    %v2649 = vld [vmem:[#allocation6 + $0x16c] sm:$0xf]
    %v2650 = vld [vmem:[#allocation6 + $0x170] sm:$0xf]
    %v2651 = vld [vmem:[#allocation6 + $0x174] sm:$0xf]
    %v2652 = vld [vmem:[#allocation6 + $0x178] sm:$0xf]
    %v2653 = vld [vmem:[#allocation6 + $0x17c] sm:$0xf]
    %v2654 = vld [vmem:[#allocation6 + $0x180] sm:$0xf]
    %v2655 = vld [vmem:[#allocation6 + $0x184] sm:$0xf]
    %v2656 = vld [vmem:[#allocation6 + $0x188] sm:$0xf]
    %v2657 = vld [vmem:[#allocation6 + $0x18c] sm:$0xf]
    %v2658 = vld [vmem:[#allocation6 + $0x190] sm:$0xf]
    %v2659 = vld [vmem:[#allocation6 + $0x194] sm:$0xf]
    %v2660 = vld [vmem:[#allocation6 + $0x198] sm:$0xf]
    %v2661 = vld [vmem:[#allocation6 + $0x19c] sm:$0xf]
    %v2662 = vld [vmem:[#allocation6 + $0x1a0] sm:$0xf]
    %v2663 = vld [vmem:[#allocation6 + $0x1a4] sm:$0xf]
    %v2664 = vld [vmem:[#allocation6 + $0x1a8] sm:$0xf]
    %v2665 = vld [vmem:[#allocation6 + $0x1ac] sm:$0xf]
    %v2666 = vld [vmem:[#allocation6 + $0x1b0] sm:$0xf]
    %v2667 = vld [vmem:[#allocation6 + $0x1b4] sm:$0xf]
    %v2668 = vld [vmem:[#allocation6 + $0x1b8] sm:$0xf]
    %v2669 = vld [vmem:[#allocation6 + $0x1bc] sm:$0xf]
    %v2670 = vld [vmem:[#allocation6 + $0x1c0] sm:$0xf]
    %v2671 = vld [vmem:[#allocation6 + $0x1c4] sm:$0xf]
    %v2672 = vld [vmem:[#allocation6 + $0x1c8] sm:$0xf]
    %v2673 = vld [vmem:[#allocation6 + $0x1cc] sm:$0xf]
    %v2674 = vld [vmem:[#allocation6 + $0x1d0] sm:$0xf]
    %v2675 = vld [vmem:[#allocation6 + $0x1d4] sm:$0xf]
    %v2676 = vld [vmem:[#allocation6 + $0x1d8] sm:$0xf]
    %v2677 = vld [vmem:[#allocation6 + $0x1dc] sm:$0xf]
    %v2678 = vld [vmem:[#allocation6 + $0x1e0] sm:$0xf]
    %v2679 = vld [vmem:[#allocation6 + $0x1e4] sm:$0xf]
    %v2680 = vld [vmem:[#allocation6 + $0x1e8] sm:$0xf]
    %v2681 = vld [vmem:[#allocation6 + $0x1ec] sm:$0xf]
    %v2682 = vld [vmem:[#allocation6 + $0x1f0] sm:$0xf]
    %v2683 = vld [vmem:[#allocation6 + $0x1f4] sm:$0xf]
    %v2684 = vld [vmem:[#allocation6 + $0x1f8] sm:$0xf]
    %v2685 = vld [vmem:[#allocation6 + $0x1fc] sm:$0xf]
    %v2686 = vld [vmem:[#allocation6 + $0x200] sm:$0xf]
    %v2687 = vld [vmem:[#allocation6 + $0x204] sm:$0xf]
    %v2688 = vld [vmem:[#allocation6 + $0x208] sm:$0xf]
    %v2689 = vld [vmem:[#allocation6 + $0x20c] sm:$0xf]
    %v2690 = vld [vmem:[#allocation6 + $0x210] sm:$0xf]
    %v2691 = vld [vmem:[#allocation6 + $0x214] sm:$0xf]
    %v2692 = vld [vmem:[#allocation6 + $0x218] sm:$0xf]
    %v2693 = vld [vmem:[#allocation6 + $0x21c] sm:$0xf]
    %v2694 = vld [vmem:[#allocation6 + $0x220] sm:$0xf]
    %v2695 = vld [vmem:[#allocation6 + $0x224] sm:$0xf]
    %v2696 = vld [vmem:[#allocation6 + $0x228] sm:$0xf]
    %v2697 = vld [vmem:[#allocation6 + $0x22c] sm:$0xf]
    %v2698 = vld [vmem:[#allocation6 + $0x230] sm:$0xf]
    %v2699 = vld [vmem:[#allocation6 + $0x234] sm:$0xf]
    %v2700 = vld [vmem:[#allocation6 + $0x238] sm:$0xf]
    %v2701 = vld [vmem:[#allocation6 + $0x23c] sm:$0xf]
    %v2702 = vld [vmem:[#allocation6 + $0x240] sm:$0xf]
    %v2703 = vld [vmem:[#allocation6 + $0x244] sm:$0xf]
    %v2704 = vld [vmem:[#allocation6 + $0x248] sm:$0xf]
    %v2705 = vld [vmem:[#allocation6 + $0x24c] sm:$0xf]
    %v2706 = vld [vmem:[#allocation6 + $0x250] sm:$0xf]
    %v2707 = vld [vmem:[#allocation6 + $0x254] sm:$0xf]
    %v2708 = vld [vmem:[#allocation6 + $0x258] sm:$0xf]
    %v2709 = vld [vmem:[#allocation6 + $0x25c] sm:$0xf]
    %v2710 = vld [vmem:[#allocation6 + $0x260] sm:$0xf]
    %v2711 = vld [vmem:[#allocation6 + $0x264] sm:$0xf]
    %v2712 = vld [vmem:[#allocation6 + $0x268] sm:$0xf]
    %v2713 = vld [vmem:[#allocation6 + $0x26c] sm:$0xf]
    %v2714 = vld [vmem:[#allocation6 + $0x270] sm:$0xf]
    %v2715 = vld [vmem:[#allocation6 + $0x274] sm:$0xf]
    %v2716 = vld [vmem:[#allocation6 + $0x278] sm:$0xf]
    %v2717 = vld [vmem:[#allocation6 + $0x27c] sm:$0xf]
    %v2718 = vld [vmem:[#allocation6 + $0x280] sm:$0xf]
    %v2719 = vld [vmem:[#allocation6 + $0x284] sm:$0xf]
    %v2720 = vld [vmem:[#allocation6 + $0x288] sm:$0xf]
    %v2721 = vld [vmem:[#allocation6 + $0x28c] sm:$0xf]
    %v2722 = vld [vmem:[#allocation6 + $0x290] sm:$0xf]
    %v2723 = vld [vmem:[#allocation6 + $0x294] sm:$0xf]
    %v2724 = vld [vmem:[#allocation6 + $0x298] sm:$0xf]
    %v2725 = vld [vmem:[#allocation6 + $0x29c] sm:$0xf]
    %v2726 = vld [vmem:[#allocation6 + $0x2a0] sm:$0xf]
    %v2727 = vld [vmem:[#allocation6 + $0x2a4] sm:$0xf]
    %v2728 = vld [vmem:[#allocation6 + $0x2a8] sm:$0xf]
    %v2729 = vld [vmem:[#allocation6 + $0x2ac] sm:$0xf]
    %v2730 = vld [vmem:[#allocation6 + $0x2b0] sm:$0xf]
    %v2731 = vld [vmem:[#allocation6 + $0x2b4] sm:$0xf]
    %v2732 = vld [vmem:[#allocation6 + $0x2b8] sm:$0xf]
    %v2733 = vld [vmem:[#allocation6 + $0x2bc] sm:$0xf]
    %v2734 = vld [vmem:[#allocation6 + $0x2c0] sm:$0xf]
    %v2735 = vld [vmem:[#allocation6 + $0x2c4] sm:$0xf]
    %v2736 = vld [vmem:[#allocation6 + $0x2c8] sm:$0xf]
    %v2737 = vld [vmem:[#allocation6 + $0x2cc] sm:$0xf]
    %v2738 = vld [vmem:[#allocation6 + $0x2d0] sm:$0xf]
    %v2739 = vld [vmem:[#allocation6 + $0x2d4] sm:$0xf]
    %v2740 = vld [vmem:[#allocation6 + $0x2d8] sm:$0xf]
    %v2741 = vld [vmem:[#allocation6 + $0x2dc] sm:$0xf]
    %v2742 = vld [vmem:[#allocation6 + $0x2e0] sm:$0xf]
    %v2743 = vld [vmem:[#allocation6 + $0x2e4] sm:$0xf]
    %v2744 = vld [vmem:[#allocation6 + $0x2e8] sm:$0xf]
    %v2745 = vld [vmem:[#allocation6 + $0x2ec] sm:$0xf]
    %v2746 = vld [vmem:[#allocation6 + $0x2f0] sm:$0xf]
    %v2747 = vld [vmem:[#allocation6 + $0x2f4] sm:$0xf]
    %v2748 = vld [vmem:[#allocation6 + $0x2f8] sm:$0xf]
    %v2749 = vld [vmem:[#allocation6 + $0x2fc] sm:$0xf]
    %v2750 = vld [vmem:[#allocation6 + $0x300] sm:$0xf]
    %v2751 = vld [vmem:[#allocation6 + $0x304] sm:$0xf]
    %v2752 = vld [vmem:[#allocation6 + $0x308] sm:$0xf]
    %v2753 = vld [vmem:[#allocation6 + $0x30c] sm:$0xf]
    %v2754 = vld [vmem:[#allocation6 + $0x310] sm:$0xf]
    %v2755 = vld [vmem:[#allocation6 + $0x314] sm:$0xf]
    %v2756 = vld [vmem:[#allocation6 + $0x318] sm:$0xf]
    %v2757 = vld [vmem:[#allocation6 + $0x31c] sm:$0xf]
    %v2758 = vld [vmem:[#allocation6 + $0x320] sm:$0xf]
    %v2759 = vld [vmem:[#allocation6 + $0x324] sm:$0xf]
    %v2760 = vld [vmem:[#allocation6 + $0x328] sm:$0xf]
    %v2761 = vld [vmem:[#allocation6 + $0x32c] sm:$0xf]
    %v2762 = vld [vmem:[#allocation6 + $0x330] sm:$0xf]
    %v2763 = vld [vmem:[#allocation6 + $0x334] sm:$0xf]
    %v2764 = vld [vmem:[#allocation6 + $0x338] sm:$0xf]
    %v2765 = vld [vmem:[#allocation6 + $0x33c] sm:$0xf]
    %v2766 = vld [vmem:[#allocation6 + $0x340] sm:$0xf]
    %v2767 = vld [vmem:[#allocation6 + $0x344] sm:$0xf]
    %v2768 = vld [vmem:[#allocation6 + $0x348] sm:$0xf]
    %v2769 = vld [vmem:[#allocation6 + $0x34c] sm:$0xf]
    %v2770 = vld [vmem:[#allocation6 + $0x350] sm:$0xf]
    %v2771 = vld [vmem:[#allocation6 + $0x354] sm:$0xf]
    %v2772 = vld [vmem:[#allocation6 + $0x358] sm:$0xf]
    %v2773 = vld [vmem:[#allocation6 + $0x35c] sm:$0xf]
    %v2774 = vld [vmem:[#allocation6 + $0x360] sm:$0xf]
    %v2775 = vld [vmem:[#allocation6 + $0x364] sm:$0xf]
    %v2776 = vld [vmem:[#allocation6 + $0x368] sm:$0xf]
    %v2777 = vld [vmem:[#allocation6 + $0x36c] sm:$0xf]
    %v2778 = vld [vmem:[#allocation6 + $0x370] sm:$0xf]
    %v2779 = vld [vmem:[#allocation6 + $0x374] sm:$0xf]
    %v2780 = vld [vmem:[#allocation6 + $0x378] sm:$0xf]
    %v2781 = vld [vmem:[#allocation6 + $0x37c] sm:$0xf]
    %v2782 = vld [vmem:[#allocation6 + $0x380] sm:$0xf]
    %v2783 = vld [vmem:[#allocation6 + $0x384] sm:$0xf]
    %v2784 = vld [vmem:[#allocation6 + $0x388] sm:$0xf]
    %v2785 = vld [vmem:[#allocation6 + $0x38c] sm:$0xf]
    %v2786 = vld [vmem:[#allocation6 + $0x390] sm:$0xf]
    %v2787 = vld [vmem:[#allocation6 + $0x394] sm:$0xf]
    %v2788 = vld [vmem:[#allocation6 + $0x398] sm:$0xf]
    %v2789 = vld [vmem:[#allocation6 + $0x39c] sm:$0xf]
    %v2790 = vld [vmem:[#allocation6 + $0x3a0] sm:$0xf]
    %v2791 = vld [vmem:[#allocation6 + $0x3a4] sm:$0xf]
    %v2792 = vld [vmem:[#allocation6 + $0x3a8] sm:$0xf]
    %v2793 = vld [vmem:[#allocation6 + $0x3ac] sm:$0xf]
    %v2794 = vld [vmem:[#allocation6 + $0x3b0] sm:$0xf]
    %v2795 = vld [vmem:[#allocation6 + $0x3b4] sm:$0xf]
    %v2796 = vld [vmem:[#allocation6 + $0x3b8] sm:$0xf]
    %v2797 = vld [vmem:[#allocation6 + $0x3bc] sm:$0xf]
    %v2798 = vld [vmem:[#allocation6 + $0x3c0] sm:$0xf]
    %v2799 = vld [vmem:[#allocation6 + $0x3c4] sm:$0xf]
    %v2800 = vld [vmem:[#allocation6 + $0x3c8] sm:$0xf]
    %v2801 = vld [vmem:[#allocation6 + $0x3cc] sm:$0xf]
    %v2802 = vld [vmem:[#allocation6 + $0x3d0] sm:$0xf]
    %v2803 = vld [vmem:[#allocation6 + $0x3d4] sm:$0xf]
    %v2804 = vld [vmem:[#allocation6 + $0x3d8] sm:$0xf]
    %v2805 = vld [vmem:[#allocation6 + $0x3dc] sm:$0xf]
    %v2806 = vld [vmem:[#allocation6 + $0x3e0] sm:$0xf]
    %v2807 = vld [vmem:[#allocation6 + $0x3e4] sm:$0xf]
    %v2808 = vld [vmem:[#allocation6 + $0x3e8] sm:$0xf]
    %v2809 = vld [vmem:[#allocation6 + $0x3ec] sm:$0xf]
    %v2810 = vld [vmem:[#allocation6 + $0x3f0] sm:$0xf]
    %v2811 = vld [vmem:[#allocation6 + $0x3f4] sm:$0xf]
    %v2812 = vld [vmem:[#allocation6 + $0x3f8] sm:$0xf]
    %v2813 = vld [vmem:[#allocation6 + $0x3fc] sm:$0xf]
    %v2814 = vld [vmem:[#allocation6 + $0x400] sm:$0xf]
    %v2815 = vld [vmem:[#allocation6 + $0x404] sm:$0xf]
    %v2816 = vld [vmem:[#allocation6 + $0x408] sm:$0xf]
    %v2817 = vld [vmem:[#allocation6 + $0x40c] sm:$0xf]
    %v2818 = vld [vmem:[#allocation6 + $0x410] sm:$0xf]
    %v2819 = vld [vmem:[#allocation6 + $0x414] sm:$0xf]
    %v2820 = vld [vmem:[#allocation6 + $0x418] sm:$0xf]
    %v2821 = vld [vmem:[#allocation6 + $0x41c] sm:$0xf]
    %v2822 = vld [vmem:[#allocation6 + $0x420] sm:$0xf]
    %v2823 = vld [vmem:[#allocation6 + $0x424] sm:$0xf]
    %v2824 = vld [vmem:[#allocation6 + $0x428] sm:$0xf]
    %v2825 = vld [vmem:[#allocation6 + $0x42c] sm:$0xf]
    %v2826 = vld [vmem:[#allocation6 + $0x430] sm:$0xf]
    %v2827 = vld [vmem:[#allocation6 + $0x434] sm:$0xf]
    %v2828 = vld [vmem:[#allocation6 + $0x438] sm:$0xf]
    %v2829 = vld [vmem:[#allocation6 + $0x43c] sm:$0xf]
    %v2830 = vld [vmem:[#allocation6 + $0x440] sm:$0xf]
    %v2831 = vld [vmem:[#allocation6 + $0x444] sm:$0xf]
    %v2832 = vld [vmem:[#allocation6 + $0x448] sm:$0xf]
    %v2833 = vld [vmem:[#allocation6 + $0x44c] sm:$0xf]
    %v2834 = vld [vmem:[#allocation6 + $0x450] sm:$0xf]
    %v2835 = vld [vmem:[#allocation6 + $0x454] sm:$0xf]
    %v2836 = vld [vmem:[#allocation6 + $0x458] sm:$0xf]
    %v2837 = vld [vmem:[#allocation6 + $0x45c] sm:$0xf]
    %v2838 = vld [vmem:[#allocation6 + $0x460] sm:$0xf]
    %v2839 = vld [vmem:[#allocation6 + $0x464] sm:$0xf]
    %v2840 = vld [vmem:[#allocation6 + $0x468] sm:$0xf]
    %v2841 = vld [vmem:[#allocation6 + $0x46c] sm:$0xf]
    %v2842 = vld [vmem:[#allocation6 + $0x470] sm:$0xf]
    %v2843 = vld [vmem:[#allocation6 + $0x474] sm:$0xf]
    %v2844 = vld [vmem:[#allocation6 + $0x478] sm:$0xf]
    %v2845 = vld [vmem:[#allocation6 + $0x47c] sm:$0xf]
    %v2846 = vld [vmem:[#allocation6 + $0x480] sm:$0xf]
    %v2847 = vld [vmem:[#allocation6 + $0x484] sm:$0xf]
    %v2848 = vld [vmem:[#allocation6 + $0x488] sm:$0xf]
    %v2849 = vld [vmem:[#allocation6 + $0x48c] sm:$0xf]
    %v2850 = vld [vmem:[#allocation6 + $0x490] sm:$0xf]
    %v2851 = vld [vmem:[#allocation6 + $0x494] sm:$0xf]
    %v2852 = vld [vmem:[#allocation6 + $0x498] sm:$0xf]
    %v2853 = vld [vmem:[#allocation6 + $0x49c] sm:$0xf]
    %v2854 = vld [vmem:[#allocation6 + $0x4a0] sm:$0xf]
    %v2855 = vld [vmem:[#allocation6 + $0x4a4] sm:$0xf]
    %v2856 = vld [vmem:[#allocation6 + $0x4a8] sm:$0xf]
    %v2857 = vld [vmem:[#allocation6 + $0x4ac] sm:$0xf]
    %v2858 = vld [vmem:[#allocation6 + $0x4b0] sm:$0xf]
    %v2859 = vld [vmem:[#allocation6 + $0x4b4] sm:$0xf]
    %v2860 = vld [vmem:[#allocation6 + $0x4b8] sm:$0xf]
    %v2861 = vld [vmem:[#allocation6 + $0x4bc] sm:$0xf]
    %v2862 = vld [vmem:[#allocation6 + $0x4c0] sm:$0xf]
    %v2863 = vld [vmem:[#allocation6 + $0x4c4] sm:$0xf]
    %v2864 = vld [vmem:[#allocation6 + $0x4c8] sm:$0xf]
    %v2865 = vld [vmem:[#allocation6 + $0x4cc] sm:$0xf]
    %v2866 = vld [vmem:[#allocation6 + $0x4d0] sm:$0xf]
    %v2867 = vld [vmem:[#allocation6 + $0x4d4] sm:$0xf]
    %v2868 = vld [vmem:[#allocation6 + $0x4d8] sm:$0xf]
    %v2869 = vld [vmem:[#allocation6 + $0x4dc] sm:$0xf]
    %v2870 = vld [vmem:[#allocation6 + $0x4e0] sm:$0xf]
    %v2871 = vld [vmem:[#allocation6 + $0x4e4] sm:$0xf]
    %v2872 = vld [vmem:[#allocation6 + $0x4e8] sm:$0xf]
    %v2873 = vld [vmem:[#allocation6 + $0x4ec] sm:$0xf]
    %v2874 = vld [vmem:[#allocation6 + $0x4f0] sm:$0xf]
    %v2875 = vld [vmem:[#allocation6 + $0x4f4] sm:$0xf]
    %v2876 = vld [vmem:[#allocation6 + $0x4f8] sm:$0xf]
    %v2877 = vld [vmem:[#allocation6 + $0x4fc] sm:$0xf]
    %v2878 = vld [vmem:[#allocation6 + $0x500] sm:$0xf]
    %v2879 = vld [vmem:[#allocation6 + $0x504] sm:$0xf]
    %v2880 = vld [vmem:[#allocation6 + $0x508] sm:$0xf]
    %v2881 = vld [vmem:[#allocation6 + $0x50c] sm:$0xf]
    %v2882 = vld [vmem:[#allocation6 + $0x510] sm:$0xf]
    %v2883 = vld [vmem:[#allocation6 + $0x514] sm:$0xf]
    %v2884 = vld [vmem:[#allocation6 + $0x518] sm:$0xf]
    %v2885 = vld [vmem:[#allocation6 + $0x51c] sm:$0xf]
    %v2886 = vld [vmem:[#allocation6 + $0x520] sm:$0xf]
    %v2887 = vld [vmem:[#allocation6 + $0x524] sm:$0xf]
    %v2888 = vld [vmem:[#allocation6 + $0x528] sm:$0xf]
    %v2889 = vld [vmem:[#allocation6 + $0x52c] sm:$0xf]
    %v2890 = vld [vmem:[#allocation6 + $0x530] sm:$0xf]
    %v2891 = vld [vmem:[#allocation6 + $0x534] sm:$0xf]
    %v2892 = vld [vmem:[#allocation6 + $0x538] sm:$0xf]
    %v2893 = vld [vmem:[#allocation6 + $0x53c] sm:$0xf]
    %v2894 = vld [vmem:[#allocation6 + $0x540] sm:$0xf]
    %v2895 = vld [vmem:[#allocation6 + $0x544] sm:$0xf]
    %v2896 = vld [vmem:[#allocation6 + $0x548] sm:$0xf]
    %v2897 = vld [vmem:[#allocation6 + $0x54c] sm:$0xf]
    %v2898 = vld [vmem:[#allocation6 + $0x550] sm:$0xf]
    %v2899 = vld [vmem:[#allocation6 + $0x554] sm:$0xf]
    %v2900 = vld [vmem:[#allocation6 + $0x558] sm:$0xf]
    %v2901 = vld [vmem:[#allocation6 + $0x55c] sm:$0xf]
    %v2902 = vld [vmem:[#allocation6 + $0x560] sm:$0xf]
    %v2903 = vld [vmem:[#allocation6 + $0x564] sm:$0xf]
    %v2904 = vld [vmem:[#allocation6 + $0x568] sm:$0xf]
    %v2905 = vld [vmem:[#allocation6 + $0x56c] sm:$0xf]
    %v2906 = vld [vmem:[#allocation6 + $0x570] sm:$0xf]
    %v2907 = vld [vmem:[#allocation6 + $0x574] sm:$0xf]
    %v2908 = vld [vmem:[#allocation6 + $0x578] sm:$0xf]
    %v2909 = vld [vmem:[#allocation6 + $0x57c] sm:$0xf]
    %v2910 = vld [vmem:[#allocation6 + $0x580] sm:$0xf]
    %v2911 = vld [vmem:[#allocation6 + $0x584] sm:$0xf]
    %v2912 = vld [vmem:[#allocation6 + $0x588] sm:$0xf]
    %v2913 = vld [vmem:[#allocation6 + $0x58c] sm:$0xf]
    %v2914 = vld [vmem:[#allocation6 + $0x590] sm:$0xf]
    %v2915 = vld [vmem:[#allocation6 + $0x594] sm:$0xf]
    %v2916 = vld [vmem:[#allocation6 + $0x598] sm:$0xf]
    %v2917 = vld [vmem:[#allocation6 + $0x59c] sm:$0xf]
    %v2918 = vld [vmem:[#allocation6 + $0x5a0] sm:$0xf]
    %v2919 = vld [vmem:[#allocation6 + $0x5a4] sm:$0xf]
    %v2920 = vld [vmem:[#allocation6 + $0x5a8] sm:$0xf]
    %v2921 = vld [vmem:[#allocation6 + $0x5ac] sm:$0xf]
    %v2922 = vld [vmem:[#allocation6 + $0x5b0] sm:$0xf]
    %v2923 = vld [vmem:[#allocation6 + $0x5b4] sm:$0xf]
    %v2924 = vld [vmem:[#allocation6 + $0x5b8] sm:$0xf]
    %v2925 = vld [vmem:[#allocation6 + $0x5bc] sm:$0xf]
    %v2926 = vld [vmem:[#allocation6 + $0x5c0] sm:$0xf]
    %v2927 = vld [vmem:[#allocation6 + $0x5c4] sm:$0xf]
    %v2928 = vld [vmem:[#allocation6 + $0x5c8] sm:$0xf]
    %v2929 = vld [vmem:[#allocation6 + $0x5cc] sm:$0xf]
    %v2930 = vld [vmem:[#allocation6 + $0x5d0] sm:$0xf]
    %v2931 = vld [vmem:[#allocation6 + $0x5d4] sm:$0xf]
    %v2932 = vld [vmem:[#allocation6 + $0x5d8] sm:$0xf]
    %v2933 = vld [vmem:[#allocation6 + $0x5dc] sm:$0xf]
    %v2934 = vld [vmem:[#allocation6 + $0x5e0] sm:$0xf]
    %v2935 = vld [vmem:[#allocation6 + $0x5e4] sm:$0xf]
    %v2936 = vld [vmem:[#allocation6 + $0x5e8] sm:$0xf]
    %v2937 = vld [vmem:[#allocation6 + $0x5ec] sm:$0xf]
    %v2938 = vld [vmem:[#allocation6 + $0x5f0] sm:$0xf]
    %v2939 = vld [vmem:[#allocation6 + $0x5f4] sm:$0xf]
    %v2940 = vld [vmem:[#allocation6 + $0x5f8] sm:$0xf]
    %v2941 = vld [vmem:[#allocation6 + $0x5fc] sm:$0xf]
    %v2942 = vld [vmem:[#allocation6 + $0x600] sm:$0xf]
    %v2943 = vld [vmem:[#allocation6 + $0x604] sm:$0xf]
    %v2944 = vld [vmem:[#allocation6 + $0x608] sm:$0xf]
    %v2945 = vld [vmem:[#allocation6 + $0x60c] sm:$0xf]
    %v2946 = vld [vmem:[#allocation6 + $0x610] sm:$0xf]
    %v2947 = vld [vmem:[#allocation6 + $0x614] sm:$0xf]
    %v2948 = vld [vmem:[#allocation6 + $0x618] sm:$0xf]
    %v2949 = vld [vmem:[#allocation6 + $0x61c] sm:$0xf]
    %v2950 = vld [vmem:[#allocation6 + $0x620] sm:$0xf]
    %v2951 = vld [vmem:[#allocation6 + $0x624] sm:$0xf]
    %v2952 = vld [vmem:[#allocation6 + $0x628] sm:$0xf]
    %v2953 = vld [vmem:[#allocation6 + $0x62c] sm:$0xf]
    %v2954 = vld [vmem:[#allocation6 + $0x630] sm:$0xf]
    %v2955 = vld [vmem:[#allocation6 + $0x634] sm:$0xf]
    %v2956 = vld [vmem:[#allocation6 + $0x638] sm:$0xf]
    %v2957 = vld [vmem:[#allocation6 + $0x63c] sm:$0xf]
    %v2958 = vld [vmem:[#allocation6 + $0x640] sm:$0xf]
    %v2959 = vld [vmem:[#allocation6 + $0x644] sm:$0xf]
    %v2960 = vld [vmem:[#allocation6 + $0x648] sm:$0xf]
    %v2961 = vld [vmem:[#allocation6 + $0x64c] sm:$0xf]
    %v2962 = vld [vmem:[#allocation6 + $0x650] sm:$0xf]
    %v2963 = vld [vmem:[#allocation6 + $0x654] sm:$0xf]
    %v2964 = vld [vmem:[#allocation6 + $0x658] sm:$0xf]
    %v2965 = vld [vmem:[#allocation6 + $0x65c] sm:$0xf]
    %v2966 = vld [vmem:[#allocation6 + $0x660] sm:$0xf]
    %v2967 = vld [vmem:[#allocation6 + $0x664] sm:$0xf]
    %v2968 = vld [vmem:[#allocation6 + $0x668] sm:$0xf]
    %v2969 = vld [vmem:[#allocation6 + $0x66c] sm:$0xf]
    %v2970 = vld [vmem:[#allocation6 + $0x670] sm:$0xf]
    %v2971 = vld [vmem:[#allocation6 + $0x674] sm:$0xf]
    %v2972 = vld [vmem:[#allocation6 + $0x678] sm:$0xf]
    %v2973 = vld [vmem:[#allocation6 + $0x67c] sm:$0xf]
    %v2974 = vld [vmem:[#allocation6 + $0x680] sm:$0xf]
    %v2975 = vld [vmem:[#allocation6 + $0x684] sm:$0xf]
    %v2976 = vld [vmem:[#allocation6 + $0x688] sm:$0xf]
    %v2977 = vld [vmem:[#allocation6 + $0x68c] sm:$0xf]
    %v2978 = vld [vmem:[#allocation6 + $0x690] sm:$0xf]
    %v2979 = vld [vmem:[#allocation6 + $0x694] sm:$0xf]
    %v2980 = vld [vmem:[#allocation6 + $0x698] sm:$0xf]
    %v2981 = vld [vmem:[#allocation6 + $0x69c] sm:$0xf]
    %v2982 = vld [vmem:[#allocation6 + $0x6a0] sm:$0xf]
    %v2983 = vld [vmem:[#allocation6 + $0x6a4] sm:$0xf]
    %v2984 = vld [vmem:[#allocation6 + $0x6a8] sm:$0xf]
    %v2985 = vld [vmem:[#allocation6 + $0x6ac] sm:$0xf]
    %v2986 = vld [vmem:[#allocation6 + $0x6b0] sm:$0xf]
    %v2987 = vld [vmem:[#allocation6 + $0x6b4] sm:$0xf]
    %v2988 = vld [vmem:[#allocation6 + $0x6b8] sm:$0xf]
    %v2989 = vld [vmem:[#allocation6 + $0x6bc] sm:$0xf]
    %v2990 = vld [vmem:[#allocation6 + $0x6c0] sm:$0xf]
    %v2991 = vld [vmem:[#allocation6 + $0x6c4] sm:$0xf]
    %v2992 = vld [vmem:[#allocation6 + $0x6c8] sm:$0xf]
    %v2993 = vld [vmem:[#allocation6 + $0x6cc] sm:$0xf]
    %v2994 = vld [vmem:[#allocation6 + $0x6d0] sm:$0xf]
    %v2995 = vld [vmem:[#allocation6 + $0x6d4] sm:$0xf]
    %v2996 = vld [vmem:[#allocation6 + $0x6d8] sm:$0xf]
    %v2997 = vld [vmem:[#allocation6 + $0x6dc] sm:$0xf]
    %v2998 = vld [vmem:[#allocation6 + $0x6e0] sm:$0xf]
    %v2999 = vld [vmem:[#allocation6 + $0x6e4] sm:$0xf]
    %v3000 = vld [vmem:[#allocation6 + $0x6e8] sm:$0xf]
    %v3001 = vld [vmem:[#allocation6 + $0x6ec] sm:$0xf]
    %v3002 = vld [vmem:[#allocation6 + $0x6f0] sm:$0xf]
    %v3003 = vld [vmem:[#allocation6 + $0x6f4] sm:$0xf]
    %v3004 = vld [vmem:[#allocation6 + $0x6f8] sm:$0xf]
    %v3005 = vld [vmem:[#allocation6 + $0x6fc] sm:$0xf]
    %v3006 = vld [vmem:[#allocation6 + $0x700] sm:$0xf]
    %v3007 = vld [vmem:[#allocation6 + $0x704] sm:$0xf]
    %v3008 = vld [vmem:[#allocation6 + $0x708] sm:$0xf]
    %v3009 = vld [vmem:[#allocation6 + $0x70c] sm:$0xf]
    %v3010 = vld [vmem:[#allocation6 + $0x710] sm:$0xf]
    %v3011 = vld [vmem:[#allocation6 + $0x714] sm:$0xf]
    %v3012 = vld [vmem:[#allocation6 + $0x718] sm:$0xf]
    %v3013 = vld [vmem:[#allocation6 + $0x71c] sm:$0xf]
    %v3014 = vld [vmem:[#allocation6 + $0x720] sm:$0xf]
    %v3015 = vld [vmem:[#allocation6 + $0x724] sm:$0xf]
    %v3016 = vld [vmem:[#allocation6 + $0x728] sm:$0xf]
    %v3017 = vld [vmem:[#allocation6 + $0x72c] sm:$0xf]
    %v3018 = vld [vmem:[#allocation6 + $0x730] sm:$0xf]
    %v3019 = vld [vmem:[#allocation6 + $0x734] sm:$0xf]
    %v3020 = vld [vmem:[#allocation6 + $0x738] sm:$0xf]
    %v3021 = vld [vmem:[#allocation6 + $0x73c] sm:$0xf]
    %v3022 = vld [vmem:[#allocation6 + $0x740] sm:$0xf]
    %v3023 = vld [vmem:[#allocation6 + $0x744] sm:$0xf]
    %v3024 = vld [vmem:[#allocation6 + $0x748] sm:$0xf]
    %v3025 = vld [vmem:[#allocation6 + $0x74c] sm:$0xf]
    %v3026 = vld [vmem:[#allocation6 + $0x750] sm:$0xf]
    %v3027 = vld [vmem:[#allocation6 + $0x754] sm:$0xf]
    %v3028 = vld [vmem:[#allocation6 + $0x758] sm:$0xf]
    %v3029 = vld [vmem:[#allocation6 + $0x75c] sm:$0xf]
    %v3030 = vld [vmem:[#allocation6 + $0x760] sm:$0xf]
    %v3031 = vld [vmem:[#allocation6 + $0x764] sm:$0xf]
    %v3032 = vld [vmem:[#allocation6 + $0x768] sm:$0xf]
    %v3033 = vld [vmem:[#allocation6 + $0x76c] sm:$0xf]
    %v3034 = vld [vmem:[#allocation6 + $0x770] sm:$0xf]
    %v3035 = vld [vmem:[#allocation6 + $0x774] sm:$0xf]
    %v3036 = vld [vmem:[#allocation6 + $0x778] sm:$0xf]
    %v3037 = vld [vmem:[#allocation6 + $0x77c] sm:$0xf]
    %v3038 = vld [vmem:[#allocation6 + $0x780] sm:$0xf]
    %v3039 = vld [vmem:[#allocation6 + $0x784] sm:$0xf]
    %v3040 = vld [vmem:[#allocation6 + $0x788] sm:$0xf]
    %v3041 = vld [vmem:[#allocation6 + $0x78c] sm:$0xf]
    %v3042 = vld [vmem:[#allocation6 + $0x790] sm:$0xf]
    %v3043 = vld [vmem:[#allocation6 + $0x794] sm:$0xf]
    %v3044 = vld [vmem:[#allocation6 + $0x798] sm:$0xf]
    %v3045 = vld [vmem:[#allocation6 + $0x79c] sm:$0xf]
    %v3046 = vld [vmem:[#allocation6 + $0x7a0] sm:$0xf]
    %v3047 = vld [vmem:[#allocation6 + $0x7a4] sm:$0xf]
    %v3048 = vld [vmem:[#allocation6 + $0x7a8] sm:$0xf]
    %v3049 = vld [vmem:[#allocation6 + $0x7ac] sm:$0xf]
    %v3050 = vld [vmem:[#allocation6 + $0x7b0] sm:$0xf]
    %v3051 = vld [vmem:[#allocation6 + $0x7b4] sm:$0xf]
    %v3052 = vld [vmem:[#allocation6 + $0x7b8] sm:$0xf]
    %v3053 = vld [vmem:[#allocation6 + $0x7bc] sm:$0xf]
    %v3054 = vld [vmem:[#allocation6 + $0x7c0] sm:$0xf]
    %v3055 = vld [vmem:[#allocation6 + $0x7c4] sm:$0xf]
    %v3056 = vld [vmem:[#allocation6 + $0x7c8] sm:$0xf]
    %v3057 = vld [vmem:[#allocation6 + $0x7cc] sm:$0xf]
    %v3058 = vld [vmem:[#allocation6 + $0x7d0] sm:$0xf]
    %v3059 = vld [vmem:[#allocation6 + $0x7d4] sm:$0xf]
    %v3060 = vld [vmem:[#allocation6 + $0x7d8] sm:$0xf]
    %v3061 = vld [vmem:[#allocation6 + $0x7dc] sm:$0xf]
    %v3062 = vld [vmem:[#allocation6 + $0x7e0] sm:$0xf]
    %v3063 = vld [vmem:[#allocation6 + $0x7e4] sm:$0xf]
    %v3064 = vld [vmem:[#allocation6 + $0x7e8] sm:$0xf]
    %v3065 = vld [vmem:[#allocation6 + $0x7ec] sm:$0xf]
    %v3066 = vld [vmem:[#allocation6 + $0x7f0] sm:$0xf]
    %v3067 = vld [vmem:[#allocation6 + $0x7f4] sm:$0xf]
    %v3068 = vld [vmem:[#allocation6 + $0x7f8] sm:$0xf]
    %v3069 = vld [vmem:[#allocation6 + $0x7fc] sm:$0xf]
    %v3070 = vld [vmem:[%s4] sm:$0x1]
    %v3072 = vlaneseq
    %v3073 = vshrl.u32 %v3072, 7
    %v3074 = vsub.s32 0, %v3073
    %v3075 = vrot.slane %v3070, %v3074
    %v3589 = vunpack.c.l.b16 %v2558
    %v3590 = vunpack.c.l.b16 %v2559
    %v3591 = vunpack.c.l.b16 %v2560
    %v3592 = vunpack.c.l.b16 %v2561
    %v3593 = vunpack.c.l.b16 %v2562
    %v3594 = vunpack.c.l.b16 %v2563
    %v3595 = vunpack.c.l.b16 %v2564
    %v3596 = vunpack.c.l.b16 %v2565
    %v3597 = vunpack.c.l.b16 %v2566
    %v3598 = vunpack.c.l.b16 %v2567
    %v3599 = vunpack.c.l.b16 %v2568
    %v3600 = vunpack.c.l.b16 %v2569
    %v3601 = vunpack.c.l.b16 %v2570
    %v3602 = vunpack.c.l.b16 %v2571
    %v3603 = vunpack.c.l.b16 %v2572
    %v3604 = vunpack.c.l.b16 %v2573
    %v3605 = vunpack.c.l.b16 %v2574
    %v3606 = vunpack.c.l.b16 %v2575
    %v3607 = vunpack.c.l.b16 %v2576
    %v3608 = vunpack.c.l.b16 %v2577
    %v3609 = vunpack.c.l.b16 %v2578
    %v3610 = vunpack.c.l.b16 %v2579
    %v3611 = vunpack.c.l.b16 %v2580
    %v3612 = vunpack.c.l.b16 %v2581
    %v3613 = vunpack.c.l.b16 %v2582
    %v3614 = vunpack.c.l.b16 %v2583
    %v3615 = vunpack.c.l.b16 %v2584
    %v3616 = vunpack.c.l.b16 %v2585
    %v3617 = vunpack.c.l.b16 %v2586
    %v3618 = vunpack.c.l.b16 %v2587
    %v3619 = vunpack.c.l.b16 %v2588
    %v3620 = vunpack.c.l.b16 %v2589
    %v3621 = vunpack.c.l.b16 %v2590
    %v3622 = vunpack.c.l.b16 %v2591
    %v3623 = vunpack.c.l.b16 %v2592
    %v3624 = vunpack.c.l.b16 %v2593
    %v3625 = vunpack.c.l.b16 %v2594
    %v3626 = vunpack.c.l.b16 %v2595
    %v3627 = vunpack.c.l.b16 %v2596
    %v3628 = vunpack.c.l.b16 %v2597
    %v3629 = vunpack.c.l.b16 %v2598
    %v3630 = vunpack.c.l.b16 %v2599
    %v3631 = vunpack.c.l.b16 %v2600
    %v3632 = vunpack.c.l.b16 %v2601
    %v3633 = vunpack.c.l.b16 %v2602
    %v3634 = vunpack.c.l.b16 %v2603
    %v3635 = vunpack.c.l.b16 %v2604
    %v3636 = vunpack.c.l.b16 %v2605
    %v3637 = vunpack.c.l.b16 %v2606
    %v3638 = vunpack.c.l.b16 %v2607
    %v3639 = vunpack.c.l.b16 %v2608
    %v3640 = vunpack.c.l.b16 %v2609
    %v3641 = vunpack.c.l.b16 %v2610
    %v3642 = vunpack.c.l.b16 %v2611
    %v3643 = vunpack.c.l.b16 %v2612
    %v3644 = vunpack.c.l.b16 %v2613
    %v3645 = vunpack.c.l.b16 %v2614
    %v3646 = vunpack.c.l.b16 %v2615
    %v3647 = vunpack.c.l.b16 %v2616
    %v3648 = vunpack.c.l.b16 %v2617
    %v3649 = vunpack.c.l.b16 %v2618
    %v3650 = vunpack.c.l.b16 %v2619
    %v3651 = vunpack.c.l.b16 %v2620
    %v3652 = vunpack.c.l.b16 %v2621
    %v3653 = vunpack.c.l.b16 %v2622
    %v3654 = vunpack.c.l.b16 %v2623
    %v3655 = vunpack.c.l.b16 %v2624
    %v3656 = vunpack.c.l.b16 %v2625
    %v3657 = vunpack.c.l.b16 %v2626
    %v3658 = vunpack.c.l.b16 %v2627
    %v3659 = vunpack.c.l.b16 %v2628
    %v3660 = vunpack.c.l.b16 %v2629
    %v3661 = vunpack.c.l.b16 %v2630
    %v3662 = vunpack.c.l.b16 %v2631
    %v3663 = vunpack.c.l.b16 %v2632
    %v3664 = vunpack.c.l.b16 %v2633
    %v3665 = vunpack.c.l.b16 %v2634
    %v3666 = vunpack.c.l.b16 %v2635
    %v3667 = vunpack.c.l.b16 %v2636
    %v3668 = vunpack.c.l.b16 %v2637
    %v3669 = vunpack.c.l.b16 %v2638
    %v3670 = vunpack.c.l.b16 %v2639
    %v3671 = vunpack.c.l.b16 %v2640
    %v3672 = vunpack.c.l.b16 %v2641
    %v3673 = vunpack.c.l.b16 %v2642
    %v3674 = vunpack.c.l.b16 %v2643
    %v3675 = vunpack.c.l.b16 %v2644
    %v3676 = vunpack.c.l.b16 %v2645
    %v3677 = vunpack.c.l.b16 %v2646
    %v3678 = vunpack.c.l.b16 %v2647
    %v3679 = vunpack.c.l.b16 %v2648
    %v3680 = vunpack.c.l.b16 %v2649
    %v3681 = vunpack.c.l.b16 %v2650
    %v3682 = vunpack.c.l.b16 %v2651
    %v3683 = vunpack.c.l.b16 %v2652
    %v3684 = vunpack.c.l.b16 %v2653
    %v3685 = vunpack.c.l.b16 %v2654
    %v3686 = vunpack.c.l.b16 %v2655
    %v3687 = vunpack.c.l.b16 %v2656
    %v3688 = vunpack.c.l.b16 %v2657
    %v3689 = vunpack.c.l.b16 %v2658
    %v3690 = vunpack.c.l.b16 %v2659
    %v3691 = vunpack.c.l.b16 %v2660
    %v3692 = vunpack.c.l.b16 %v2661
    %v3693 = vunpack.c.l.b16 %v2662
    %v3694 = vunpack.c.l.b16 %v2663
    %v3695 = vunpack.c.l.b16 %v2664
    %v3696 = vunpack.c.l.b16 %v2665
    %v3697 = vunpack.c.l.b16 %v2666
    %v3698 = vunpack.c.l.b16 %v2667
    %v3699 = vunpack.c.l.b16 %v2668
    %v3700 = vunpack.c.l.b16 %v2669
    %v3701 = vunpack.c.l.b16 %v2670
    %v3702 = vunpack.c.l.b16 %v2671
    %v3703 = vunpack.c.l.b16 %v2672
    %v3704 = vunpack.c.l.b16 %v2673
    %v3705 = vunpack.c.l.b16 %v2674
    %v3706 = vunpack.c.l.b16 %v2675
    %v3707 = vunpack.c.l.b16 %v2676
    %v3708 = vunpack.c.l.b16 %v2677
    %v3709 = vunpack.c.l.b16 %v2678
    %v3710 = vunpack.c.l.b16 %v2679
    %v3711 = vunpack.c.l.b16 %v2680
    %v3712 = vunpack.c.l.b16 %v2681
    %v3713 = vunpack.c.l.b16 %v2682
    %v3714 = vunpack.c.l.b16 %v2683
    %v3715 = vunpack.c.l.b16 %v2684
    %v3716 = vunpack.c.l.b16 %v2685
    %v3717 = vunpack.c.l.b16 %v2686
    %v3718 = vunpack.c.l.b16 %v2687
    %v3719 = vunpack.c.l.b16 %v2688
    %v3720 = vunpack.c.l.b16 %v2689
    %v3721 = vunpack.c.l.b16 %v2690
    %v3722 = vunpack.c.l.b16 %v2691
    %v3723 = vunpack.c.l.b16 %v2692
    %v3724 = vunpack.c.l.b16 %v2693
    %v3725 = vunpack.c.l.b16 %v2694
    %v3726 = vunpack.c.l.b16 %v2695
    %v3727 = vunpack.c.l.b16 %v2696
    %v3728 = vunpack.c.l.b16 %v2697
    %v3729 = vunpack.c.l.b16 %v2698
    %v3730 = vunpack.c.l.b16 %v2699
    %v3731 = vunpack.c.l.b16 %v2700
    %v3732 = vunpack.c.l.b16 %v2701
    %v3733 = vunpack.c.l.b16 %v2702
    %v3734 = vunpack.c.l.b16 %v2703
    %v3735 = vunpack.c.l.b16 %v2704
    %v3736 = vunpack.c.l.b16 %v2705
    %v3737 = vunpack.c.l.b16 %v2706
    %v3738 = vunpack.c.l.b16 %v2707
    %v3739 = vunpack.c.l.b16 %v2708
    %v3740 = vunpack.c.l.b16 %v2709
    %v3741 = vunpack.c.l.b16 %v2710
    %v3742 = vunpack.c.l.b16 %v2711
    %v3743 = vunpack.c.l.b16 %v2712
    %v3744 = vunpack.c.l.b16 %v2713
    %v3745 = vunpack.c.l.b16 %v2714
    %v3746 = vunpack.c.l.b16 %v2715
    %v3747 = vunpack.c.l.b16 %v2716
    %v3748 = vunpack.c.l.b16 %v2717
    %v3749 = vunpack.c.l.b16 %v2718
    %v3750 = vunpack.c.l.b16 %v2719
    %v3751 = vunpack.c.l.b16 %v2720
    %v3752 = vunpack.c.l.b16 %v2721
    %v3753 = vunpack.c.l.b16 %v2722
    %v3754 = vunpack.c.l.b16 %v2723
    %v3755 = vunpack.c.l.b16 %v2724
    %v3756 = vunpack.c.l.b16 %v2725
    %v3757 = vunpack.c.l.b16 %v2726
    %v3758 = vunpack.c.l.b16 %v2727
    %v3759 = vunpack.c.l.b16 %v2728
    %v3760 = vunpack.c.l.b16 %v2729
    %v3761 = vunpack.c.l.b16 %v2730
    %v3762 = vunpack.c.l.b16 %v2731
    %v3763 = vunpack.c.l.b16 %v2732
    %v3764 = vunpack.c.l.b16 %v2733
    %v3765 = vunpack.c.l.b16 %v2734
    %v3766 = vunpack.c.l.b16 %v2735
    %v3767 = vunpack.c.l.b16 %v2736
    %v3768 = vunpack.c.l.b16 %v2737
    %v3769 = vunpack.c.l.b16 %v2738
    %v3770 = vunpack.c.l.b16 %v2739
    %v3771 = vunpack.c.l.b16 %v2740
    %v3772 = vunpack.c.l.b16 %v2741
    %v3773 = vunpack.c.l.b16 %v2742
    %v3774 = vunpack.c.l.b16 %v2743
    %v3775 = vunpack.c.l.b16 %v2744
    %v3776 = vunpack.c.l.b16 %v2745
    %v3777 = vunpack.c.l.b16 %v2746
    %v3778 = vunpack.c.l.b16 %v2747
    %v3779 = vunpack.c.l.b16 %v2748
    %v3780 = vunpack.c.l.b16 %v2749
    %v3781 = vunpack.c.l.b16 %v2750
    %v3782 = vunpack.c.l.b16 %v2751
    %v3783 = vunpack.c.l.b16 %v2752
    %v3784 = vunpack.c.l.b16 %v2753
    %v3785 = vunpack.c.l.b16 %v2754
    %v3786 = vunpack.c.l.b16 %v2755
    %v3787 = vunpack.c.l.b16 %v2756
    %v3788 = vunpack.c.l.b16 %v2757
    %v3789 = vunpack.c.l.b16 %v2758
    %v3790 = vunpack.c.l.b16 %v2759
    %v3791 = vunpack.c.l.b16 %v2760
    %v3792 = vunpack.c.l.b16 %v2761
    %v3793 = vunpack.c.l.b16 %v2762
    %v3794 = vunpack.c.l.b16 %v2763
    %v3795 = vunpack.c.l.b16 %v2764
    %v3796 = vunpack.c.l.b16 %v2765
    %v3797 = vunpack.c.l.b16 %v2766
    %v3798 = vunpack.c.l.b16 %v2767
    %v3799 = vunpack.c.l.b16 %v2768
    %v3800 = vunpack.c.l.b16 %v2769
    %v3801 = vunpack.c.l.b16 %v2770
    %v3802 = vunpack.c.l.b16 %v2771
    %v3803 = vunpack.c.l.b16 %v2772
    %v3804 = vunpack.c.l.b16 %v2773
    %v3805 = vunpack.c.l.b16 %v2774
    %v3806 = vunpack.c.l.b16 %v2775
    %v3807 = vunpack.c.l.b16 %v2776
    %v3808 = vunpack.c.l.b16 %v2777
    %v3809 = vunpack.c.l.b16 %v2778
    %v3810 = vunpack.c.l.b16 %v2779
    %v3811 = vunpack.c.l.b16 %v2780
    %v3812 = vunpack.c.l.b16 %v2781
    %v3813 = vunpack.c.l.b16 %v2782
    %v3814 = vunpack.c.l.b16 %v2783
    %v3815 = vunpack.c.l.b16 %v2784
    %v3816 = vunpack.c.l.b16 %v2785
    %v3817 = vunpack.c.l.b16 %v2786
    %v3818 = vunpack.c.l.b16 %v2787
    %v3819 = vunpack.c.l.b16 %v2788
    %v3820 = vunpack.c.l.b16 %v2789
    %v3821 = vunpack.c.l.b16 %v2790
    %v3822 = vunpack.c.l.b16 %v2791
    %v3823 = vunpack.c.l.b16 %v2792
    %v3824 = vunpack.c.l.b16 %v2793
    %v3825 = vunpack.c.l.b16 %v2794
    %v3826 = vunpack.c.l.b16 %v2795
    %v3827 = vunpack.c.l.b16 %v2796
    %v3828 = vunpack.c.l.b16 %v2797
    %v3829 = vunpack.c.l.b16 %v2798
    %v3830 = vunpack.c.l.b16 %v2799
    %v3831 = vunpack.c.l.b16 %v2800
    %v3832 = vunpack.c.l.b16 %v2801
    %v3833 = vunpack.c.l.b16 %v2802
    %v3834 = vunpack.c.l.b16 %v2803
    %v3835 = vunpack.c.l.b16 %v2804
    %v3836 = vunpack.c.l.b16 %v2805
    %v3837 = vunpack.c.l.b16 %v2806
    %v3838 = vunpack.c.l.b16 %v2807
    %v3839 = vunpack.c.l.b16 %v2808
    %v3840 = vunpack.c.l.b16 %v2809
    %v3841 = vunpack.c.l.b16 %v2810
    %v3842 = vunpack.c.l.b16 %v2811
    %v3843 = vunpack.c.l.b16 %v2812
    %v3844 = vunpack.c.l.b16 %v2813
    %v3845 = vunpack.c.l.b16 %v2814
    %v3846 = vunpack.c.l.b16 %v2815
    %v3847 = vunpack.c.l.b16 %v2816
    %v3848 = vunpack.c.l.b16 %v2817
    %v3849 = vunpack.c.l.b16 %v2818
    %v3850 = vunpack.c.l.b16 %v2819
    %v3851 = vunpack.c.l.b16 %v2820
    %v3852 = vunpack.c.l.b16 %v2821
    %v3853 = vunpack.c.l.b16 %v2822
    %v3854 = vunpack.c.l.b16 %v2823
    %v3855 = vunpack.c.l.b16 %v2824
    %v3856 = vunpack.c.l.b16 %v2825
    %v3857 = vunpack.c.l.b16 %v2826
    %v3858 = vunpack.c.l.b16 %v2827
    %v3859 = vunpack.c.l.b16 %v2828
    %v3860 = vunpack.c.l.b16 %v2829
    %v3861 = vunpack.c.l.b16 %v2830
    %v3862 = vunpack.c.l.b16 %v2831
    %v3863 = vunpack.c.l.b16 %v2832
    %v3864 = vunpack.c.l.b16 %v2833
    %v3865 = vunpack.c.l.b16 %v2834
    %v3866 = vunpack.c.l.b16 %v2835
    %v3867 = vunpack.c.l.b16 %v2836
    %v3868 = vunpack.c.l.b16 %v2837
    %v3869 = vunpack.c.l.b16 %v2838
    %v3870 = vunpack.c.l.b16 %v2839
    %v3871 = vunpack.c.l.b16 %v2840
    %v3872 = vunpack.c.l.b16 %v2841
    %v3873 = vunpack.c.l.b16 %v2842
    %v3874 = vunpack.c.l.b16 %v2843
    %v3875 = vunpack.c.l.b16 %v2844
    %v3876 = vunpack.c.l.b16 %v2845
    %v3877 = vunpack.c.l.b16 %v2846
    %v3878 = vunpack.c.l.b16 %v2847
    %v3879 = vunpack.c.l.b16 %v2848
    %v3880 = vunpack.c.l.b16 %v2849
    %v3881 = vunpack.c.l.b16 %v2850
    %v3882 = vunpack.c.l.b16 %v2851
    %v3883 = vunpack.c.l.b16 %v2852
    %v3884 = vunpack.c.l.b16 %v2853
    %v3885 = vunpack.c.l.b16 %v2854
    %v3886 = vunpack.c.l.b16 %v2855
    %v3887 = vunpack.c.l.b16 %v2856
    %v3888 = vunpack.c.l.b16 %v2857
    %v3889 = vunpack.c.l.b16 %v2858
    %v3890 = vunpack.c.l.b16 %v2859
    %v3891 = vunpack.c.l.b16 %v2860
    %v3892 = vunpack.c.l.b16 %v2861
    %v3893 = vunpack.c.l.b16 %v2862
    %v3894 = vunpack.c.l.b16 %v2863
    %v3895 = vunpack.c.l.b16 %v2864
    %v3896 = vunpack.c.l.b16 %v2865
    %v3897 = vunpack.c.l.b16 %v2866
    %v3898 = vunpack.c.l.b16 %v2867
    %v3899 = vunpack.c.l.b16 %v2868
    %v3900 = vunpack.c.l.b16 %v2869
    %v3901 = vunpack.c.l.b16 %v2870
    %v3902 = vunpack.c.l.b16 %v2871
    %v3903 = vunpack.c.l.b16 %v2872
    %v3904 = vunpack.c.l.b16 %v2873
    %v3905 = vunpack.c.l.b16 %v2874
    %v3906 = vunpack.c.l.b16 %v2875
    %v3907 = vunpack.c.l.b16 %v2876
    %v3908 = vunpack.c.l.b16 %v2877
    %v3909 = vunpack.c.l.b16 %v2878
    %v3910 = vunpack.c.l.b16 %v2879
    %v3911 = vunpack.c.l.b16 %v2880
    %v3912 = vunpack.c.l.b16 %v2881
    %v3913 = vunpack.c.l.b16 %v2882
    %v3914 = vunpack.c.l.b16 %v2883
    %v3915 = vunpack.c.l.b16 %v2884
    %v3916 = vunpack.c.l.b16 %v2885
    %v3917 = vunpack.c.l.b16 %v2886
    %v3918 = vunpack.c.l.b16 %v2887
    %v3919 = vunpack.c.l.b16 %v2888
    %v3920 = vunpack.c.l.b16 %v2889
    %v3921 = vunpack.c.l.b16 %v2890
    %v3922 = vunpack.c.l.b16 %v2891
    %v3923 = vunpack.c.l.b16 %v2892
    %v3924 = vunpack.c.l.b16 %v2893
    %v3925 = vunpack.c.l.b16 %v2894
    %v3926 = vunpack.c.l.b16 %v2895
    %v3927 = vunpack.c.l.b16 %v2896
    %v3928 = vunpack.c.l.b16 %v2897
    %v3929 = vunpack.c.l.b16 %v2898
    %v3930 = vunpack.c.l.b16 %v2899
    %v3931 = vunpack.c.l.b16 %v2900
    %v3932 = vunpack.c.l.b16 %v2901
    %v3933 = vunpack.c.l.b16 %v2902
    %v3934 = vunpack.c.l.b16 %v2903
    %v3935 = vunpack.c.l.b16 %v2904
    %v3936 = vunpack.c.l.b16 %v2905
    %v3937 = vunpack.c.l.b16 %v2906
    %v3938 = vunpack.c.l.b16 %v2907
    %v3939 = vunpack.c.l.b16 %v2908
    %v3940 = vunpack.c.l.b16 %v2909
    %v3941 = vunpack.c.l.b16 %v2910
    %v3942 = vunpack.c.l.b16 %v2911
    %v3943 = vunpack.c.l.b16 %v2912
    %v3944 = vunpack.c.l.b16 %v2913
    %v3945 = vunpack.c.l.b16 %v2914
    %v3946 = vunpack.c.l.b16 %v2915
    %v3947 = vunpack.c.l.b16 %v2916
    %v3948 = vunpack.c.l.b16 %v2917
    %v3949 = vunpack.c.l.b16 %v2918
    %v3950 = vunpack.c.l.b16 %v2919
    %v3951 = vunpack.c.l.b16 %v2920
    %v3952 = vunpack.c.l.b16 %v2921
    %v3953 = vunpack.c.l.b16 %v2922
    %v3954 = vunpack.c.l.b16 %v2923
    %v3955 = vunpack.c.l.b16 %v2924
    %v3956 = vunpack.c.l.b16 %v2925
    %v3957 = vunpack.c.l.b16 %v2926
    %v3958 = vunpack.c.l.b16 %v2927
    %v3959 = vunpack.c.l.b16 %v2928
    %v3960 = vunpack.c.l.b16 %v2929
    %v3961 = vunpack.c.l.b16 %v2930
    %v3962 = vunpack.c.l.b16 %v2931
    %v3963 = vunpack.c.l.b16 %v2932
    %v3964 = vunpack.c.l.b16 %v2933
    %v3965 = vunpack.c.l.b16 %v2934
    %v3966 = vunpack.c.l.b16 %v2935
    %v3967 = vunpack.c.l.b16 %v2936
    %v3968 = vunpack.c.l.b16 %v2937
    %v3969 = vunpack.c.l.b16 %v2938
    %v3970 = vunpack.c.l.b16 %v2939
    %v3971 = vunpack.c.l.b16 %v2940
    %v3972 = vunpack.c.l.b16 %v2941
    %v3973 = vunpack.c.l.b16 %v2942
    %v3974 = vunpack.c.l.b16 %v2943
    %v3975 = vunpack.c.l.b16 %v2944
    %v3976 = vunpack.c.l.b16 %v2945
    %v3977 = vunpack.c.l.b16 %v2946
    %v3978 = vunpack.c.l.b16 %v2947
    %v3979 = vunpack.c.l.b16 %v2948
    %v3980 = vunpack.c.l.b16 %v2949
    %v3981 = vunpack.c.l.b16 %v2950
    %v3982 = vunpack.c.l.b16 %v2951
    %v3983 = vunpack.c.l.b16 %v2952
    %v3984 = vunpack.c.l.b16 %v2953
    %v3985 = vunpack.c.l.b16 %v2954
    %v3986 = vunpack.c.l.b16 %v2955
    %v3987 = vunpack.c.l.b16 %v2956
    %v3988 = vunpack.c.l.b16 %v2957
    %v3989 = vunpack.c.l.b16 %v2958
    %v3990 = vunpack.c.l.b16 %v2959
    %v3991 = vunpack.c.l.b16 %v2960
    %v3992 = vunpack.c.l.b16 %v2961
    %v3993 = vunpack.c.l.b16 %v2962
    %v3994 = vunpack.c.l.b16 %v2963
    %v3995 = vunpack.c.l.b16 %v2964
    %v3996 = vunpack.c.l.b16 %v2965
    %v3997 = vunpack.c.l.b16 %v2966
    %v3998 = vunpack.c.l.b16 %v2967
    %v3999 = vunpack.c.l.b16 %v2968
    %v4000 = vunpack.c.l.b16 %v2969
    %v4001 = vunpack.c.l.b16 %v2970
    %v4002 = vunpack.c.l.b16 %v2971
    %v4003 = vunpack.c.l.b16 %v2972
    %v4004 = vunpack.c.l.b16 %v2973
    %v4005 = vunpack.c.l.b16 %v2974
    %v4006 = vunpack.c.l.b16 %v2975
    %v4007 = vunpack.c.l.b16 %v2976
    %v4008 = vunpack.c.l.b16 %v2977
    %v4009 = vunpack.c.l.b16 %v2978
    %v4010 = vunpack.c.l.b16 %v2979
    %v4011 = vunpack.c.l.b16 %v2980
    %v4012 = vunpack.c.l.b16 %v2981
    %v4013 = vunpack.c.l.b16 %v2982
    %v4014 = vunpack.c.l.b16 %v2983
    %v4015 = vunpack.c.l.b16 %v2984
    %v4016 = vunpack.c.l.b16 %v2985
    %v4017 = vunpack.c.l.b16 %v2986
    %v4018 = vunpack.c.l.b16 %v2987
    %v4019 = vunpack.c.l.b16 %v2988
    %v4020 = vunpack.c.l.b16 %v2989
    %v4021 = vunpack.c.l.b16 %v2990
    %v4022 = vunpack.c.l.b16 %v2991
    %v4023 = vunpack.c.l.b16 %v2992
    %v4024 = vunpack.c.l.b16 %v2993
    %v4025 = vunpack.c.l.b16 %v2994
    %v4026 = vunpack.c.l.b16 %v2995
    %v4027 = vunpack.c.l.b16 %v2996
    %v4028 = vunpack.c.l.b16 %v2997
    %v4029 = vunpack.c.l.b16 %v2998
    %v4030 = vunpack.c.l.b16 %v2999
    %v4031 = vunpack.c.l.b16 %v3000
    %v4032 = vunpack.c.l.b16 %v3001
    %v4033 = vunpack.c.l.b16 %v3002
    %v4034 = vunpack.c.l.b16 %v3003
    %v4035 = vunpack.c.l.b16 %v3004
    %v4036 = vunpack.c.l.b16 %v3005
    %v4037 = vunpack.c.l.b16 %v3006
    %v4038 = vunpack.c.l.b16 %v3007
    %v4039 = vunpack.c.l.b16 %v3008
    %v4040 = vunpack.c.l.b16 %v3009
    %v4041 = vunpack.c.l.b16 %v3010
    %v4042 = vunpack.c.l.b16 %v3011
    %v4043 = vunpack.c.l.b16 %v3012
    %v4044 = vunpack.c.l.b16 %v3013
    %v4045 = vunpack.c.l.b16 %v3014
    %v4046 = vunpack.c.l.b16 %v3015
    %v4047 = vunpack.c.l.b16 %v3016
    %v4048 = vunpack.c.l.b16 %v3017
    %v4049 = vunpack.c.l.b16 %v3018
    %v4050 = vunpack.c.l.b16 %v3019
    %v4051 = vunpack.c.l.b16 %v3020
    %v4052 = vunpack.c.l.b16 %v3021
    %v4053 = vunpack.c.l.b16 %v3022
    %v4054 = vunpack.c.l.b16 %v3023
    %v4055 = vunpack.c.l.b16 %v3024
    %v4056 = vunpack.c.l.b16 %v3025
    %v4057 = vunpack.c.l.b16 %v3026
    %v4058 = vunpack.c.l.b16 %v3027
    %v4059 = vunpack.c.l.b16 %v3028
    %v4060 = vunpack.c.l.b16 %v3029
    %v4061 = vunpack.c.l.b16 %v3030
    %v4062 = vunpack.c.l.b16 %v3031
    %v4063 = vunpack.c.l.b16 %v3032
    %v4064 = vunpack.c.l.b16 %v3033
    %v4065 = vunpack.c.l.b16 %v3034
    %v4066 = vunpack.c.l.b16 %v3035
    %v4067 = vunpack.c.l.b16 %v3036
    %v4068 = vunpack.c.l.b16 %v3037
    %v4069 = vunpack.c.l.b16 %v3038
    %v4070 = vunpack.c.l.b16 %v3039
    %v4071 = vunpack.c.l.b16 %v3040
    %v4072 = vunpack.c.l.b16 %v3041
    %v4073 = vunpack.c.l.b16 %v3042
    %v4074 = vunpack.c.l.b16 %v3043
    %v4075 = vunpack.c.l.b16 %v3044
    %v4076 = vunpack.c.l.b16 %v3045
    %v4077 = vunpack.c.l.b16 %v3046
    %v4078 = vunpack.c.l.b16 %v3047
    %v4079 = vunpack.c.l.b16 %v3048
    %v4080 = vunpack.c.l.b16 %v3049
    %v4081 = vunpack.c.l.b16 %v3050
    %v4082 = vunpack.c.l.b16 %v3051
    %v4083 = vunpack.c.l.b16 %v3052
    %v4084 = vunpack.c.l.b16 %v3053
    %v4085 = vunpack.c.l.b16 %v3054
    %v4086 = vunpack.c.l.b16 %v3055
    %v4087 = vunpack.c.l.b16 %v3056
    %v4088 = vunpack.c.l.b16 %v3057
    %v4089 = vunpack.c.l.b16 %v3058
    %v4090 = vunpack.c.l.b16 %v3059
    %v4091 = vunpack.c.l.b16 %v3060
    %v4092 = vunpack.c.l.b16 %v3061
    %v4093 = vunpack.c.l.b16 %v3062
    %v4094 = vunpack.c.l.b16 %v3063
    %v4095 = vunpack.c.l.b16 %v3064
    %v4096 = vunpack.c.l.b16 %v3065
    %v4097 = vunpack.c.l.b16 %v3066
    %v4098 = vunpack.c.l.b16 %v3067
    %v4099 = vunpack.c.l.b16 %v3068
    %v4100 = vunpack.c.l.b16 %v3069
    %v4101 = vpack.c.b16 %v3590, %v3589
    %v4102 = vpack.c.b16 %v3592, %v3591
    %v4103 = vpack.c.b16 %v3594, %v3593
    %v4104 = vpack.c.b16 %v3596, %v3595
    %v4105 = vpack.c.b16 %v3598, %v3597
    %v4106 = vpack.c.b16 %v3600, %v3599
    %v4107 = vpack.c.b16 %v3602, %v3601
    %v4108 = vpack.c.b16 %v3604, %v3603
    %v4109 = vpack.c.b16 %v3606, %v3605
    %v4110 = vpack.c.b16 %v3608, %v3607
    %v4111 = vpack.c.b16 %v3610, %v3609
    %v4112 = vpack.c.b16 %v3612, %v3611
    %v4113 = vpack.c.b16 %v3614, %v3613
    %v4114 = vpack.c.b16 %v3616, %v3615
    %v4115 = vpack.c.b16 %v3618, %v3617
    %v4116 = vpack.c.b16 %v3620, %v3619
    %v4117 = vpack.c.b16 %v3622, %v3621
    %v4118 = vpack.c.b16 %v3624, %v3623
    %v4119 = vpack.c.b16 %v3626, %v3625
    %v4120 = vpack.c.b16 %v3628, %v3627
    %v4121 = vpack.c.b16 %v3630, %v3629
    %v4122 = vpack.c.b16 %v3632, %v3631
    %v4123 = vpack.c.b16 %v3634, %v3633
    %v4124 = vpack.c.b16 %v3636, %v3635
    %v4125 = vpack.c.b16 %v3638, %v3637
    %v4126 = vpack.c.b16 %v3640, %v3639
    %v4127 = vpack.c.b16 %v3642, %v3641
    %v4128 = vpack.c.b16 %v3644, %v3643
    %v4129 = vpack.c.b16 %v3646, %v3645
    %v4130 = vpack.c.b16 %v3648, %v3647
    %v4131 = vpack.c.b16 %v3650, %v3649
    %v4132 = vpack.c.b16 %v3652, %v3651
    %v4133 = vpack.c.b16 %v3654, %v3653
    %v4134 = vpack.c.b16 %v3656, %v3655
    %v4135 = vpack.c.b16 %v3658, %v3657
    %v4136 = vpack.c.b16 %v3660, %v3659
    %v4137 = vpack.c.b16 %v3662, %v3661
    %v4138 = vpack.c.b16 %v3664, %v3663
    %v4139 = vpack.c.b16 %v3666, %v3665
    %v4140 = vpack.c.b16 %v3668, %v3667
    %v4141 = vpack.c.b16 %v3670, %v3669
    %v4142 = vpack.c.b16 %v3672, %v3671
    %v4143 = vpack.c.b16 %v3674, %v3673
    %v4144 = vpack.c.b16 %v3676, %v3675
    %v4145 = vpack.c.b16 %v3678, %v3677
    %v4146 = vpack.c.b16 %v3680, %v3679
    %v4147 = vpack.c.b16 %v3682, %v3681
    %v4148 = vpack.c.b16 %v3684, %v3683
    %v4149 = vpack.c.b16 %v3686, %v3685
    %v4150 = vpack.c.b16 %v3688, %v3687
    %v4151 = vpack.c.b16 %v3690, %v3689
    %v4152 = vpack.c.b16 %v3692, %v3691
    %v4153 = vpack.c.b16 %v3694, %v3693
    %v4154 = vpack.c.b16 %v3696, %v3695
    %v4155 = vpack.c.b16 %v3698, %v3697
    %v4156 = vpack.c.b16 %v3700, %v3699
    %v4157 = vpack.c.b16 %v3702, %v3701
    %v4158 = vpack.c.b16 %v3704, %v3703
    %v4159 = vpack.c.b16 %v3706, %v3705
    %v4160 = vpack.c.b16 %v3708, %v3707
    %v4161 = vpack.c.b16 %v3710, %v3709
    %v4162 = vpack.c.b16 %v3712, %v3711
    %v4163 = vpack.c.b16 %v3714, %v3713
    %v4164 = vpack.c.b16 %v3716, %v3715
    %v4165 = vpack.c.b16 %v3718, %v3717
    %v4166 = vpack.c.b16 %v3720, %v3719
    %v4167 = vpack.c.b16 %v3722, %v3721
    %v4168 = vpack.c.b16 %v3724, %v3723
    %v4169 = vpack.c.b16 %v3726, %v3725
    %v4170 = vpack.c.b16 %v3728, %v3727
    %v4171 = vpack.c.b16 %v3730, %v3729
    %v4172 = vpack.c.b16 %v3732, %v3731
    %v4173 = vpack.c.b16 %v3734, %v3733
    %v4174 = vpack.c.b16 %v3736, %v3735
    %v4175 = vpack.c.b16 %v3738, %v3737
    %v4176 = vpack.c.b16 %v3740, %v3739
    %v4177 = vpack.c.b16 %v3742, %v3741
    %v4178 = vpack.c.b16 %v3744, %v3743
    %v4179 = vpack.c.b16 %v3746, %v3745
    %v4180 = vpack.c.b16 %v3748, %v3747
    %v4181 = vpack.c.b16 %v3750, %v3749
    %v4182 = vpack.c.b16 %v3752, %v3751
    %v4183 = vpack.c.b16 %v3754, %v3753
    %v4184 = vpack.c.b16 %v3756, %v3755
    %v4185 = vpack.c.b16 %v3758, %v3757
    %v4186 = vpack.c.b16 %v3760, %v3759
    %v4187 = vpack.c.b16 %v3762, %v3761
    %v4188 = vpack.c.b16 %v3764, %v3763
    %v4189 = vpack.c.b16 %v3766, %v3765
    %v4190 = vpack.c.b16 %v3768, %v3767
    %v4191 = vpack.c.b16 %v3770, %v3769
    %v4192 = vpack.c.b16 %v3772, %v3771
    %v4193 = vpack.c.b16 %v3774, %v3773
    %v4194 = vpack.c.b16 %v3776, %v3775
    %v4195 = vpack.c.b16 %v3778, %v3777
    %v4196 = vpack.c.b16 %v3780, %v3779
    %v4197 = vpack.c.b16 %v3782, %v3781
    %v4198 = vpack.c.b16 %v3784, %v3783
    %v4199 = vpack.c.b16 %v3786, %v3785
    %v4200 = vpack.c.b16 %v3788, %v3787
    %v4201 = vpack.c.b16 %v3790, %v3789
    %v4202 = vpack.c.b16 %v3792, %v3791
    %v4203 = vpack.c.b16 %v3794, %v3793
    %v4204 = vpack.c.b16 %v3796, %v3795
    %v4205 = vpack.c.b16 %v3798, %v3797
    %v4206 = vpack.c.b16 %v3800, %v3799
    %v4207 = vpack.c.b16 %v3802, %v3801
    %v4208 = vpack.c.b16 %v3804, %v3803
    %v4209 = vpack.c.b16 %v3806, %v3805
    %v4210 = vpack.c.b16 %v3808, %v3807
    %v4211 = vpack.c.b16 %v3810, %v3809
    %v4212 = vpack.c.b16 %v3812, %v3811
    %v4213 = vpack.c.b16 %v3814, %v3813
    %v4214 = vpack.c.b16 %v3816, %v3815
    %v4215 = vpack.c.b16 %v3818, %v3817
    %v4216 = vpack.c.b16 %v3820, %v3819
    %v4217 = vpack.c.b16 %v3822, %v3821
    %v4218 = vpack.c.b16 %v3824, %v3823
    %v4219 = vpack.c.b16 %v3826, %v3825
    %v4220 = vpack.c.b16 %v3828, %v3827
    %v4221 = vpack.c.b16 %v3830, %v3829
    %v4222 = vpack.c.b16 %v3832, %v3831
    %v4223 = vpack.c.b16 %v3834, %v3833
    %v4224 = vpack.c.b16 %v3836, %v3835
    %v4225 = vpack.c.b16 %v3838, %v3837
    %v4226 = vpack.c.b16 %v3840, %v3839
    %v4227 = vpack.c.b16 %v3842, %v3841
    %v4228 = vpack.c.b16 %v3844, %v3843
    %v4229 = vpack.c.b16 %v3846, %v3845
    %v4230 = vpack.c.b16 %v3848, %v3847
    %v4231 = vpack.c.b16 %v3850, %v3849
    %v4232 = vpack.c.b16 %v3852, %v3851
    %v4233 = vpack.c.b16 %v3854, %v3853
    %v4234 = vpack.c.b16 %v3856, %v3855
    %v4235 = vpack.c.b16 %v3858, %v3857
    %v4236 = vpack.c.b16 %v3860, %v3859
    %v4237 = vpack.c.b16 %v3862, %v3861
    %v4238 = vpack.c.b16 %v3864, %v3863
    %v4239 = vpack.c.b16 %v3866, %v3865
    %v4240 = vpack.c.b16 %v3868, %v3867
    %v4241 = vpack.c.b16 %v3870, %v3869
    %v4242 = vpack.c.b16 %v3872, %v3871
    %v4243 = vpack.c.b16 %v3874, %v3873
    %v4244 = vpack.c.b16 %v3876, %v3875
    %v4245 = vpack.c.b16 %v3878, %v3877
    %v4246 = vpack.c.b16 %v3880, %v3879
    %v4247 = vpack.c.b16 %v3882, %v3881
    %v4248 = vpack.c.b16 %v3884, %v3883
    %v4249 = vpack.c.b16 %v3886, %v3885
    %v4250 = vpack.c.b16 %v3888, %v3887
    %v4251 = vpack.c.b16 %v3890, %v3889
    %v4252 = vpack.c.b16 %v3892, %v3891
    %v4253 = vpack.c.b16 %v3894, %v3893
    %v4254 = vpack.c.b16 %v3896, %v3895
    %v4255 = vpack.c.b16 %v3898, %v3897
    %v4256 = vpack.c.b16 %v3900, %v3899
    %v4257 = vpack.c.b16 %v3902, %v3901
    %v4258 = vpack.c.b16 %v3904, %v3903
    %v4259 = vpack.c.b16 %v3906, %v3905
    %v4260 = vpack.c.b16 %v3908, %v3907
    %v4261 = vpack.c.b16 %v3910, %v3909
    %v4262 = vpack.c.b16 %v3912, %v3911
    %v4263 = vpack.c.b16 %v3914, %v3913
    %v4264 = vpack.c.b16 %v3916, %v3915
    %v4265 = vpack.c.b16 %v3918, %v3917
    %v4266 = vpack.c.b16 %v3920, %v3919
    %v4267 = vpack.c.b16 %v3922, %v3921
    %v4268 = vpack.c.b16 %v3924, %v3923
    %v4269 = vpack.c.b16 %v3926, %v3925
    %v4270 = vpack.c.b16 %v3928, %v3927
    %v4271 = vpack.c.b16 %v3930, %v3929
    %v4272 = vpack.c.b16 %v3932, %v3931
    %v4273 = vpack.c.b16 %v3934, %v3933
    %v4274 = vpack.c.b16 %v3936, %v3935
    %v4275 = vpack.c.b16 %v3938, %v3937
    %v4276 = vpack.c.b16 %v3940, %v3939
    %v4277 = vpack.c.b16 %v3942, %v3941
    %v4278 = vpack.c.b16 %v3944, %v3943
    %v4279 = vpack.c.b16 %v3946, %v3945
    %v4280 = vpack.c.b16 %v3948, %v3947
    %v4281 = vpack.c.b16 %v3950, %v3949
    %v4282 = vpack.c.b16 %v3952, %v3951
    %v4283 = vpack.c.b16 %v3954, %v3953
    %v4284 = vpack.c.b16 %v3956, %v3955
    %v4285 = vpack.c.b16 %v3958, %v3957
    %v4286 = vpack.c.b16 %v3960, %v3959
    %v4287 = vpack.c.b16 %v3962, %v3961
    %v4288 = vpack.c.b16 %v3964, %v3963
    %v4289 = vpack.c.b16 %v3966, %v3965
    %v4290 = vpack.c.b16 %v3968, %v3967
    %v4291 = vpack.c.b16 %v3970, %v3969
    %v4292 = vpack.c.b16 %v3972, %v3971
    %v4293 = vpack.c.b16 %v3974, %v3973
    %v4294 = vpack.c.b16 %v3976, %v3975
    %v4295 = vpack.c.b16 %v3978, %v3977
    %v4296 = vpack.c.b16 %v3980, %v3979
    %v4297 = vpack.c.b16 %v3982, %v3981
    %v4298 = vpack.c.b16 %v3984, %v3983
    %v4299 = vpack.c.b16 %v3986, %v3985
    %v4300 = vpack.c.b16 %v3988, %v3987
    %v4301 = vpack.c.b16 %v3990, %v3989
    %v4302 = vpack.c.b16 %v3992, %v3991
    %v4303 = vpack.c.b16 %v3994, %v3993
    %v4304 = vpack.c.b16 %v3996, %v3995
    %v4305 = vpack.c.b16 %v3998, %v3997
    %v4306 = vpack.c.b16 %v4000, %v3999
    %v4307 = vpack.c.b16 %v4002, %v4001
    %v4308 = vpack.c.b16 %v4004, %v4003
    %v4309 = vpack.c.b16 %v4006, %v4005
    %v4310 = vpack.c.b16 %v4008, %v4007
    %v4311 = vpack.c.b16 %v4010, %v4009
    %v4312 = vpack.c.b16 %v4012, %v4011
    %v4313 = vpack.c.b16 %v4014, %v4013
    %v4314 = vpack.c.b16 %v4016, %v4015
    %v4315 = vpack.c.b16 %v4018, %v4017
    %v4316 = vpack.c.b16 %v4020, %v4019
    %v4317 = vpack.c.b16 %v4022, %v4021
    %v4318 = vpack.c.b16 %v4024, %v4023
    %v4319 = vpack.c.b16 %v4026, %v4025
    %v4320 = vpack.c.b16 %v4028, %v4027
    %v4321 = vpack.c.b16 %v4030, %v4029
    %v4322 = vpack.c.b16 %v4032, %v4031
    %v4323 = vpack.c.b16 %v4034, %v4033
    %v4324 = vpack.c.b16 %v4036, %v4035
    %v4325 = vpack.c.b16 %v4038, %v4037
    %v4326 = vpack.c.b16 %v4040, %v4039
    %v4327 = vpack.c.b16 %v4042, %v4041
    %v4328 = vpack.c.b16 %v4044, %v4043
    %v4329 = vpack.c.b16 %v4046, %v4045
    %v4330 = vpack.c.b16 %v4048, %v4047
    %v4331 = vpack.c.b16 %v4050, %v4049
    %v4332 = vpack.c.b16 %v4052, %v4051
    %v4333 = vpack.c.b16 %v4054, %v4053
    %v4334 = vpack.c.b16 %v4056, %v4055
    %v4335 = vpack.c.b16 %v4058, %v4057
    %v4336 = vpack.c.b16 %v4060, %v4059
    %v4337 = vpack.c.b16 %v4062, %v4061
    %v4338 = vpack.c.b16 %v4064, %v4063
    %v4339 = vpack.c.b16 %v4066, %v4065
    %v4340 = vpack.c.b16 %v4068, %v4067
    %v4341 = vpack.c.b16 %v4070, %v4069
    %v4342 = vpack.c.b16 %v4072, %v4071
    %v4343 = vpack.c.b16 %v4074, %v4073
    %v4344 = vpack.c.b16 %v4076, %v4075
    %v4345 = vpack.c.b16 %v4078, %v4077
    %v4346 = vpack.c.b16 %v4080, %v4079
    %v4347 = vpack.c.b16 %v4082, %v4081
    %v4348 = vpack.c.b16 %v4084, %v4083
    %v4349 = vpack.c.b16 %v4086, %v4085
    %v4350 = vpack.c.b16 %v4088, %v4087
    %v4351 = vpack.c.b16 %v4090, %v4089
    %v4352 = vpack.c.b16 %v4092, %v4091
    %v4353 = vpack.c.b16 %v4094, %v4093
    %v4354 = vpack.c.b16 %v4096, %v4095
    %v4355 = vpack.c.b16 %v4098, %v4097
    %v4356 = vpack.c.b16 %v4100, %v4099
    %4613 = vmatprep.subr.bf16.mxu0 0
    %4614 = vmatpush1.bf16.msra.mxu0 %v4101
    %4615 = vmatprep.subr.bf16.mxu0 0
    %4616 = vmatpush1.bf16.msra.mxu0 %v4102
    %4617 = vmatprep.subr.bf16.mxu0 0
    %4618 = vmatpush1.bf16.msra.mxu0 %v4103
    %4619 = vmatprep.subr.bf16.mxu0 0
    %4620 = vmatpush1.bf16.msra.mxu0 %v4104
    %4621 = vmatprep.subr.bf16.mxu0 0
    %4622 = vmatpush1.bf16.msra.mxu0 %v4105
    %4623 = vmatprep.subr.bf16.mxu0 0
    %4624 = vmatpush1.bf16.msra.mxu0 %v4106
    %4625 = vmatprep.subr.bf16.mxu0 0
    %4626 = vmatpush1.bf16.msra.mxu0 %v4107
    %4627 = vmatprep.subr.bf16.mxu0 0
    %4628 = vmatpush1.bf16.msra.mxu0 %v4108
    %4629 = vmatprep.subr.bf16.mxu0 0
    %4630 = vmatpush1.bf16.msra.mxu0 %v4109
    %4631 = vmatprep.subr.bf16.mxu0 0
    %4632 = vmatpush1.bf16.msra.mxu0 %v4110
    %4633 = vmatprep.subr.bf16.mxu0 0
    %4634 = vmatpush1.bf16.msra.mxu0 %v4111
    %4635 = vmatprep.subr.bf16.mxu0 0
    %4636 = vmatpush1.bf16.msra.mxu0 %v4112
    %4637 = vmatprep.subr.bf16.mxu0 0
    %4638 = vmatpush1.bf16.msra.mxu0 %v4113
    %4639 = vmatprep.subr.bf16.mxu0 0
    %4640 = vmatpush1.bf16.msra.mxu0 %v4114
    %4641 = vmatprep.subr.bf16.mxu0 0
    %4642 = vmatpush1.bf16.msra.mxu0 %v4115
    %4643 = vmatprep.subr.bf16.mxu0 0
    %4644 = vmatpush1.bf16.msra.mxu0 %v4116
    %4645 = vmatprep.mubr.bf16.mxu0 %v2527
    %4646 = vmatmul.mubr.bf16.gmra.mrb[0].mxu0 %v2526
    %v4647 = vpop.f32.mrb[0].mxu0
    %v4648 = vadd.f32 %v3075, %v4647
    %v4649 = vpop.f32.mrb[0].mxu0
    %v4650 = vpop.f32.mrb[0].mxu0
    %v4651 = vadd.f32 %v3075, %v4650
    %v4652 = vpop.f32.mrb[0].mxu0
    %4653 = vdwg.mxu0
    %4654 = vmatprep.subr.bf16.mxu0 0
    %4655 = vmatpush1.bf16.msra.mxu0 %v4117
    %4656 = vmatprep.subr.bf16.mxu0 0
    %4657 = vmatpush1.bf16.msra.mxu0 %v4118
    %4658 = vmatprep.subr.bf16.mxu0 0
    %4659 = vmatpush1.bf16.msra.mxu0 %v4119
    %4660 = vmatprep.subr.bf16.mxu0 0
    %4661 = vmatpush1.bf16.msra.mxu0 %v4120
    %4662 = vmatprep.subr.bf16.mxu0 0
    %4663 = vmatpush1.bf16.msra.mxu0 %v4121
    %4664 = vmatprep.subr.bf16.mxu0 0
    %4665 = vmatpush1.bf16.msra.mxu0 %v4122
    %4666 = vmatprep.subr.bf16.mxu0 0
    %4667 = vmatpush1.bf16.msra.mxu0 %v4123
    %4668 = vmatprep.subr.bf16.mxu0 0
    %4669 = vmatpush1.bf16.msra.mxu0 %v4124
    %4670 = vmatprep.subr.bf16.mxu0 0
    %4671 = vmatpush1.bf16.msra.mxu0 %v4125
    %4672 = vmatprep.subr.bf16.mxu0 0
    %4673 = vmatpush1.bf16.msra.mxu0 %v4126
    %4674 = vmatprep.subr.bf16.mxu0 0
    %4675 = vmatpush1.bf16.msra.mxu0 %v4127
    %4676 = vmatprep.subr.bf16.mxu0 0
    %4677 = vmatpush1.bf16.msra.mxu0 %v4128
    %4678 = vmatprep.subr.bf16.mxu0 0
    %4679 = vmatpush1.bf16.msra.mxu0 %v4129
    %4680 = vmatprep.subr.bf16.mxu0 0
    %4681 = vmatpush1.bf16.msra.mxu0 %v4130
    %4682 = vmatprep.subr.bf16.mxu0 0
    %4683 = vmatpush1.bf16.msra.mxu0 %v4131
    %4684 = vmatprep.subr.bf16.mxu0 0
    %4685 = vmatpush1.bf16.msra.mxu0 %v4132
    %4686 = vmatprep.mubr.bf16.mxu0 %v2529
    %4687 = vmatmul.mubr.bf16.gmra.mrb[0].mxu0 %v2528
    %v4688 = vpop.f32.mrb[0].mxu0
    %v4689 = vadd.f32 %v4648, %v4688
    %v4690 = vpop.f32.mrb[0].mxu0
    %v4691 = vpop.f32.mrb[0].mxu0
    %v4692 = vadd.f32 %v4651, %v4691
    %v4693 = vpop.f32.mrb[0].mxu0
    %4694 = vdwg.mxu0
    %4695 = vmatprep.subr.bf16.mxu0 0
    %4696 = vmatpush1.bf16.msra.mxu0 %v4133
    %4697 = vmatprep.subr.bf16.mxu0 0
    %4698 = vmatpush1.bf16.msra.mxu0 %v4134
    %4699 = vmatprep.subr.bf16.mxu0 0
    %4700 = vmatpush1.bf16.msra.mxu0 %v4135
    %4701 = vmatprep.subr.bf16.mxu0 0
    %4702 = vmatpush1.bf16.msra.mxu0 %v4136
    %4703 = vmatprep.subr.bf16.mxu0 0
    %4704 = vmatpush1.bf16.msra.mxu0 %v4137
    %4705 = vmatprep.subr.bf16.mxu0 0
    %4706 = vmatpush1.bf16.msra.mxu0 %v4138
    %4707 = vmatprep.subr.bf16.mxu0 0
    %4708 = vmatpush1.bf16.msra.mxu0 %v4139
    %4709 = vmatprep.subr.bf16.mxu0 0
    %4710 = vmatpush1.bf16.msra.mxu0 %v4140
    %4711 = vmatprep.subr.bf16.mxu0 0
    %4712 = vmatpush1.bf16.msra.mxu0 %v4141
    %4713 = vmatprep.subr.bf16.mxu0 0
    %4714 = vmatpush1.bf16.msra.mxu0 %v4142
    %4715 = vmatprep.subr.bf16.mxu0 0
    %4716 = vmatpush1.bf16.msra.mxu0 %v4143
    %4717 = vmatprep.subr.bf16.mxu0 0
    %4718 = vmatpush1.bf16.msra.mxu0 %v4144
    %4719 = vmatprep.subr.bf16.mxu0 0
    %4720 = vmatpush1.bf16.msra.mxu0 %v4145
    %4721 = vmatprep.subr.bf16.mxu0 0
    %4722 = vmatpush1.bf16.msra.mxu0 %v4146
    %4723 = vmatprep.subr.bf16.mxu0 0
    %4724 = vmatpush1.bf16.msra.mxu0 %v4147
    %4725 = vmatprep.subr.bf16.mxu0 0
    %4726 = vmatpush1.bf16.msra.mxu0 %v4148
    %4727 = vmatprep.mubr.bf16.mxu0 %v2531
    %4728 = vmatmul.mubr.bf16.gmra.mrb[0].mxu0 %v2530
    %v4729 = vpop.f32.mrb[0].mxu0
    %v4730 = vadd.f32 %v4689, %v4729
    %v4731 = vpop.f32.mrb[0].mxu0
    %v4732 = vpop.f32.mrb[0].mxu0
    %v4733 = vadd.f32 %v4692, %v4732
    %v4734 = vpop.f32.mrb[0].mxu0
    %4735 = vdwg.mxu0
    %4736 = vmatprep.subr.bf16.mxu0 0
    %4737 = vmatpush1.bf16.msra.mxu0 %v4149
    %4738 = vmatprep.subr.bf16.mxu0 0
    %4739 = vmatpush1.bf16.msra.mxu0 %v4150
    %4740 = vmatprep.subr.bf16.mxu0 0
    %4741 = vmatpush1.bf16.msra.mxu0 %v4151
    %4742 = vmatprep.subr.bf16.mxu0 0
    %4743 = vmatpush1.bf16.msra.mxu0 %v4152
    %4744 = vmatprep.subr.bf16.mxu0 0
    %4745 = vmatpush1.bf16.msra.mxu0 %v4153
    %4746 = vmatprep.subr.bf16.mxu0 0
    %4747 = vmatpush1.bf16.msra.mxu0 %v4154
    %4748 = vmatprep.subr.bf16.mxu0 0
    %4749 = vmatpush1.bf16.msra.mxu0 %v4155
    %4750 = vmatprep.subr.bf16.mxu0 0
    %4751 = vmatpush1.bf16.msra.mxu0 %v4156
    %4752 = vmatprep.subr.bf16.mxu0 0
    %4753 = vmatpush1.bf16.msra.mxu0 %v4157
    %4754 = vmatprep.subr.bf16.mxu0 0
    %4755 = vmatpush1.bf16.msra.mxu0 %v4158
    %4756 = vmatprep.subr.bf16.mxu0 0
    %4757 = vmatpush1.bf16.msra.mxu0 %v4159
    %4758 = vmatprep.subr.bf16.mxu0 0
    %4759 = vmatpush1.bf16.msra.mxu0 %v4160
    %4760 = vmatprep.subr.bf16.mxu0 0
    %4761 = vmatpush1.bf16.msra.mxu0 %v4161
    %4762 = vmatprep.subr.bf16.mxu0 0
    %4763 = vmatpush1.bf16.msra.mxu0 %v4162
    %4764 = vmatprep.subr.bf16.mxu0 0
    %4765 = vmatpush1.bf16.msra.mxu0 %v4163
    %4766 = vmatprep.subr.bf16.mxu0 0
    %4767 = vmatpush1.bf16.msra.mxu0 %v4164
    %4768 = vmatprep.mubr.bf16.mxu0 %v2533
    %4769 = vmatmul.mubr.bf16.gmra.mrb[0].mxu0 %v2532
    %v4770 = vpop.f32.mrb[0].mxu0
    %v4771 = vadd.f32 %v4730, %v4770
    %v4772 = vpop.f32.mrb[0].mxu0
    %v4773 = vpop.f32.mrb[0].mxu0
    %v4774 = vadd.f32 %v4733, %v4773
    %v4775 = vpop.f32.mrb[0].mxu0
    %4776 = vdwg.mxu0
    %4777 = vmatprep.subr.bf16.mxu0 0
    %4778 = vmatpush1.bf16.msra.mxu0 %v4165
    %4779 = vmatprep.subr.bf16.mxu0 0
    %4780 = vmatpush1.bf16.msra.mxu0 %v4166
    %4781 = vmatprep.subr.bf16.mxu0 0
    %4782 = vmatpush1.bf16.msra.mxu0 %v4167
    %4783 = vmatprep.subr.bf16.mxu0 0
    %4784 = vmatpush1.bf16.msra.mxu0 %v4168
    %4785 = vmatprep.subr.bf16.mxu0 0
    %4786 = vmatpush1.bf16.msra.mxu0 %v4169
    %4787 = vmatprep.subr.bf16.mxu0 0
    %4788 = vmatpush1.bf16.msra.mxu0 %v4170
    %4789 = vmatprep.subr.bf16.mxu0 0
    %4790 = vmatpush1.bf16.msra.mxu0 %v4171
    %4791 = vmatprep.subr.bf16.mxu0 0
    %4792 = vmatpush1.bf16.msra.mxu0 %v4172
    %4793 = vmatprep.subr.bf16.mxu0 0
    %4794 = vmatpush1.bf16.msra.mxu0 %v4173
    %4795 = vmatprep.subr.bf16.mxu0 0
    %4796 = vmatpush1.bf16.msra.mxu0 %v4174
    %4797 = vmatprep.subr.bf16.mxu0 0
    %4798 = vmatpush1.bf16.msra.mxu0 %v4175
    %4799 = vmatprep.subr.bf16.mxu0 0
    %4800 = vmatpush1.bf16.msra.mxu0 %v4176
    %4801 = vmatprep.subr.bf16.mxu0 0
    %4802 = vmatpush1.bf16.msra.mxu0 %v4177
    %4803 = vmatprep.subr.bf16.mxu0 0
    %4804 = vmatpush1.bf16.msra.mxu0 %v4178
    %4805 = vmatprep.subr.bf16.mxu0 0
    %4806 = vmatpush1.bf16.msra.mxu0 %v4179
    %4807 = vmatprep.subr.bf16.mxu0 0
    %4808 = vmatpush1.bf16.msra.mxu0 %v4180
    %4809 = vmatprep.mubr.bf16.mxu0 %v2535
    %4810 = vmatmul.mubr.bf16.gmra.mrb[0].mxu0 %v2534
    %v4811 = vpop.f32.mrb[0].mxu0
    %v4812 = vadd.f32 %v4771, %v4811
    %v4813 = vpop.f32.mrb[0].mxu0
    %v4814 = vpop.f32.mrb[0].mxu0
    %v4815 = vadd.f32 %v4774, %v4814
    %v4816 = vpop.f32.mrb[0].mxu0
    %4817 = vdwg.mxu0
    %4818 = vmatprep.subr.bf16.mxu0 0
    %4819 = vmatpush1.bf16.msra.mxu0 %v4181
    %4820 = vmatprep.subr.bf16.mxu0 0
    %4821 = vmatpush1.bf16.msra.mxu0 %v4182
    %4822 = vmatprep.subr.bf16.mxu0 0
    %4823 = vmatpush1.bf16.msra.mxu0 %v4183
    %4824 = vmatprep.subr.bf16.mxu0 0
    %4825 = vmatpush1.bf16.msra.mxu0 %v4184
    %4826 = vmatprep.subr.bf16.mxu0 0
    %4827 = vmatpush1.bf16.msra.mxu0 %v4185
    %4828 = vmatprep.subr.bf16.mxu0 0
    %4829 = vmatpush1.bf16.msra.mxu0 %v4186
    %4830 = vmatprep.subr.bf16.mxu0 0
    %4831 = vmatpush1.bf16.msra.mxu0 %v4187
    %4832 = vmatprep.subr.bf16.mxu0 0
    %4833 = vmatpush1.bf16.msra.mxu0 %v4188
    %4834 = vmatprep.subr.bf16.mxu0 0
    %4835 = vmatpush1.bf16.msra.mxu0 %v4189
    %4836 = vmatprep.subr.bf16.mxu0 0
    %4837 = vmatpush1.bf16.msra.mxu0 %v4190
    %4838 = vmatprep.subr.bf16.mxu0 0
    %4839 = vmatpush1.bf16.msra.mxu0 %v4191
    %4840 = vmatprep.subr.bf16.mxu0 0
    %4841 = vmatpush1.bf16.msra.mxu0 %v4192
    %4842 = vmatprep.subr.bf16.mxu0 0
    %4843 = vmatpush1.bf16.msra.mxu0 %v4193
    %4844 = vmatprep.subr.bf16.mxu0 0
    %4845 = vmatpush1.bf16.msra.mxu0 %v4194
    %4846 = vmatprep.subr.bf16.mxu0 0
    %4847 = vmatpush1.bf16.msra.mxu0 %v4195
    %4848 = vmatprep.subr.bf16.mxu0 0
    %4849 = vmatpush1.bf16.msra.mxu0 %v4196
    %4850 = vmatprep.mubr.bf16.mxu0 %v2537
    %4851 = vmatmul.mubr.bf16.gmra.mrb[0].mxu0 %v2536
    %v4852 = vpop.f32.mrb[0].mxu0
    %v4853 = vadd.f32 %v4812, %v4852
    %v4854 = vpop.f32.mrb[0].mxu0
    %v4855 = vpop.f32.mrb[0].mxu0
    %v4856 = vadd.f32 %v4815, %v4855
    %v4857 = vpop.f32.mrb[0].mxu0
    %4858 = vdwg.mxu0
    %4859 = vmatprep.subr.bf16.mxu0 0
    %4860 = vmatpush1.bf16.msra.mxu0 %v4197
    %4861 = vmatprep.subr.bf16.mxu0 0
    %4862 = vmatpush1.bf16.msra.mxu0 %v4198
    %4863 = vmatprep.subr.bf16.mxu0 0
    %4864 = vmatpush1.bf16.msra.mxu0 %v4199
    %4865 = vmatprep.subr.bf16.mxu0 0
    %4866 = vmatpush1.bf16.msra.mxu0 %v4200
    %4867 = vmatprep.subr.bf16.mxu0 0
    %4868 = vmatpush1.bf16.msra.mxu0 %v4201
    %4869 = vmatprep.subr.bf16.mxu0 0
    %4870 = vmatpush1.bf16.msra.mxu0 %v4202
    %4871 = vmatprep.subr.bf16.mxu0 0
    %4872 = vmatpush1.bf16.msra.mxu0 %v4203
    %4873 = vmatprep.subr.bf16.mxu0 0
    %4874 = vmatpush1.bf16.msra.mxu0 %v4204
    %4875 = vmatprep.subr.bf16.mxu0 0
    %4876 = vmatpush1.bf16.msra.mxu0 %v4205
    %4877 = vmatprep.subr.bf16.mxu0 0
    %4878 = vmatpush1.bf16.msra.mxu0 %v4206
    %4879 = vmatprep.subr.bf16.mxu0 0
    %4880 = vmatpush1.bf16.msra.mxu0 %v4207
    %4881 = vmatprep.subr.bf16.mxu0 0
    %4882 = vmatpush1.bf16.msra.mxu0 %v4208
    %4883 = vmatprep.subr.bf16.mxu0 0
    %4884 = vmatpush1.bf16.msra.mxu0 %v4209
    %4885 = vmatprep.subr.bf16.mxu0 0
    %4886 = vmatpush1.bf16.msra.mxu0 %v4210
    %4887 = vmatprep.subr.bf16.mxu0 0
    %4888 = vmatpush1.bf16.msra.mxu0 %v4211
    %4889 = vmatprep.subr.bf16.mxu0 0
    %4890 = vmatpush1.bf16.msra.mxu0 %v4212
    %4891 = vmatprep.mubr.bf16.mxu0 %v2539
    %4892 = vmatmul.mubr.bf16.gmra.mrb[0].mxu0 %v2538
    %v4893 = vpop.f32.mrb[0].mxu0
    %v4894 = vadd.f32 %v4853, %v4893
    %v4895 = vpop.f32.mrb[0].mxu0
    %v4896 = vpop.f32.mrb[0].mxu0
    %v4897 = vadd.f32 %v4856, %v4896
    %v4898 = vpop.f32.mrb[0].mxu0
    %4899 = vdwg.mxu0
    %4900 = vmatprep.subr.bf16.mxu0 0
    %4901 = vmatpush1.bf16.msra.mxu0 %v4213
    %4902 = vmatprep.subr.bf16.mxu0 0
    %4903 = vmatpush1.bf16.msra.mxu0 %v4214
    %4904 = vmatprep.subr.bf16.mxu0 0
    %4905 = vmatpush1.bf16.msra.mxu0 %v4215
    %4906 = vmatprep.subr.bf16.mxu0 0
    %4907 = vmatpush1.bf16.msra.mxu0 %v4216
    %4908 = vmatprep.subr.bf16.mxu0 0
    %4909 = vmatpush1.bf16.msra.mxu0 %v4217
    %4910 = vmatprep.subr.bf16.mxu0 0
    %4911 = vmatpush1.bf16.msra.mxu0 %v4218
    %4912 = vmatprep.subr.bf16.mxu0 0
    %4913 = vmatpush1.bf16.msra.mxu0 %v4219
    %4914 = vmatprep.subr.bf16.mxu0 0
    %4915 = vmatpush1.bf16.msra.mxu0 %v4220
    %4916 = vmatprep.subr.bf16.mxu0 0
    %4917 = vmatpush1.bf16.msra.mxu0 %v4221
    %4918 = vmatprep.subr.bf16.mxu0 0
    %4919 = vmatpush1.bf16.msra.mxu0 %v4222
    %4920 = vmatprep.subr.bf16.mxu0 0
    %4921 = vmatpush1.bf16.msra.mxu0 %v4223
    %4922 = vmatprep.subr.bf16.mxu0 0
    %4923 = vmatpush1.bf16.msra.mxu0 %v4224
    %4924 = vmatprep.subr.bf16.mxu0 0
    %4925 = vmatpush1.bf16.msra.mxu0 %v4225
    %4926 = vmatprep.subr.bf16.mxu0 0
    %4927 = vmatpush1.bf16.msra.mxu0 %v4226
    %4928 = vmatprep.subr.bf16.mxu0 0
    %4929 = vmatpush1.bf16.msra.mxu0 %v4227
    %4930 = vmatprep.subr.bf16.mxu0 0
    %4931 = vmatpush1.bf16.msra.mxu0 %v4228
    %4932 = vmatprep.mubr.bf16.mxu0 %v2541
    %4933 = vmatmul.mubr.bf16.gmra.mrb[0].mxu0 %v2540
    %v4934 = vpop.f32.mrb[0].mxu0
    %v4935 = vadd.f32 %v4894, %v4934
    %v4936 = vpop.f32.mrb[0].mxu0
    %v4937 = vpop.f32.mrb[0].mxu0
    %v4938 = vadd.f32 %v4897, %v4937
    %v4939 = vpop.f32.mrb[0].mxu0
    %4940 = vdwg.mxu0
    %4941 = vmatprep.subr.bf16.mxu0 0
    %4942 = vmatpush1.bf16.msra.mxu0 %v4229
    %4943 = vmatprep.subr.bf16.mxu0 0
    %4944 = vmatpush1.bf16.msra.mxu0 %v4230
    %4945 = vmatprep.subr.bf16.mxu0 0
    %4946 = vmatpush1.bf16.msra.mxu0 %v4231
    %4947 = vmatprep.subr.bf16.mxu0 0
    %4948 = vmatpush1.bf16.msra.mxu0 %v4232
    %4949 = vmatprep.subr.bf16.mxu0 0
    %4950 = vmatpush1.bf16.msra.mxu0 %v4233
    %4951 = vmatprep.subr.bf16.mxu0 0
    %4952 = vmatpush1.bf16.msra.mxu0 %v4234
    %4953 = vmatprep.subr.bf16.mxu0 0
    %4954 = vmatpush1.bf16.msra.mxu0 %v4235
    %4955 = vmatprep.subr.bf16.mxu0 0
    %4956 = vmatpush1.bf16.msra.mxu0 %v4236
    %4957 = vmatprep.subr.bf16.mxu0 0
    %4958 = vmatpush1.bf16.msra.mxu0 %v4237
    %4959 = vmatprep.subr.bf16.mxu0 0
    %4960 = vmatpush1.bf16.msra.mxu0 %v4238
    %4961 = vmatprep.subr.bf16.mxu0 0
    %4962 = vmatpush1.bf16.msra.mxu0 %v4239
    %4963 = vmatprep.subr.bf16.mxu0 0
    %4964 = vmatpush1.bf16.msra.mxu0 %v4240
    %4965 = vmatprep.subr.bf16.mxu0 0
    %4966 = vmatpush1.bf16.msra.mxu0 %v4241
    %4967 = vmatprep.subr.bf16.mxu0 0
    %4968 = vmatpush1.bf16.msra.mxu0 %v4242
    %4969 = vmatprep.subr.bf16.mxu0 0
    %4970 = vmatpush1.bf16.msra.mxu0 %v4243
    %4971 = vmatprep.subr.bf16.mxu0 0
    %4972 = vmatpush1.bf16.msra.mxu0 %v4244
    %4973 = vmatprep.mubr.bf16.mxu0 %v2543
    %4974 = vmatmul.mubr.bf16.gmra.mrb[0].mxu0 %v2542
    %v4975 = vpop.f32.mrb[0].mxu0
    %v4976 = vadd.f32 %v4935, %v4975
    %v4977 = vpop.f32.mrb[0].mxu0
    %v4978 = vpop.f32.mrb[0].mxu0
    %v4979 = vadd.f32 %v4938, %v4978
    %v4980 = vpop.f32.mrb[0].mxu0
    %4981 = vdwg.mxu0
    %4982 = vmatprep.subr.bf16.mxu0 0
    %4983 = vmatpush1.bf16.msra.mxu0 %v4245
    %4984 = vmatprep.subr.bf16.mxu0 0
    %4985 = vmatpush1.bf16.msra.mxu0 %v4246
    %4986 = vmatprep.subr.bf16.mxu0 0
    %4987 = vmatpush1.bf16.msra.mxu0 %v4247
    %4988 = vmatprep.subr.bf16.mxu0 0
    %4989 = vmatpush1.bf16.msra.mxu0 %v4248
    %4990 = vmatprep.subr.bf16.mxu0 0
    %4991 = vmatpush1.bf16.msra.mxu0 %v4249
    %4992 = vmatprep.subr.bf16.mxu0 0
    %4993 = vmatpush1.bf16.msra.mxu0 %v4250
    %4994 = vmatprep.subr.bf16.mxu0 0
    %4995 = vmatpush1.bf16.msra.mxu0 %v4251
    %4996 = vmatprep.subr.bf16.mxu0 0
    %4997 = vmatpush1.bf16.msra.mxu0 %v4252
    %4998 = vmatprep.subr.bf16.mxu0 0
    %4999 = vmatpush1.bf16.msra.mxu0 %v4253
    %5000 = vmatprep.subr.bf16.mxu0 0
    %5001 = vmatpush1.bf16.msra.mxu0 %v4254
    %5002 = vmatprep.subr.bf16.mxu0 0
    %5003 = vmatpush1.bf16.msra.mxu0 %v4255
    %5004 = vmatprep.subr.bf16.mxu0 0
    %5005 = vmatpush1.bf16.msra.mxu0 %v4256
    %5006 = vmatprep.subr.bf16.mxu0 0
    %5007 = vmatpush1.bf16.msra.mxu0 %v4257
    %5008 = vmatprep.subr.bf16.mxu0 0
    %5009 = vmatpush1.bf16.msra.mxu0 %v4258
    %5010 = vmatprep.subr.bf16.mxu0 0
    %5011 = vmatpush1.bf16.msra.mxu0 %v4259
    %5012 = vmatprep.subr.bf16.mxu0 0
    %5013 = vmatpush1.bf16.msra.mxu0 %v4260
    %5014 = vmatprep.mubr.bf16.mxu0 %v2545
    %5015 = vmatmul.mubr.bf16.gmra.mrb[0].mxu0 %v2544
    %v5016 = vpop.f32.mrb[0].mxu0
    %v5017 = vadd.f32 %v4976, %v5016
    %v5018 = vpop.f32.mrb[0].mxu0
    %v5019 = vpop.f32.mrb[0].mxu0
    %v5020 = vadd.f32 %v4979, %v5019
    %v5021 = vpop.f32.mrb[0].mxu0
    %5022 = vdwg.mxu0
    %5023 = vmatprep.subr.bf16.mxu0 0
    %5024 = vmatpush1.bf16.msra.mxu0 %v4261
    %5025 = vmatprep.subr.bf16.mxu0 0
    %5026 = vmatpush1.bf16.msra.mxu0 %v4262
    %5027 = vmatprep.subr.bf16.mxu0 0
    %5028 = vmatpush1.bf16.msra.mxu0 %v4263
    %5029 = vmatprep.subr.bf16.mxu0 0
    %5030 = vmatpush1.bf16.msra.mxu0 %v4264
    %5031 = vmatprep.subr.bf16.mxu0 0
    %5032 = vmatpush1.bf16.msra.mxu0 %v4265
    %5033 = vmatprep.subr.bf16.mxu0 0
    %5034 = vmatpush1.bf16.msra.mxu0 %v4266
    %5035 = vmatprep.subr.bf16.mxu0 0
    %5036 = vmatpush1.bf16.msra.mxu0 %v4267
    %5037 = vmatprep.subr.bf16.mxu0 0
    %5038 = vmatpush1.bf16.msra.mxu0 %v4268
    %5039 = vmatprep.subr.bf16.mxu0 0
    %5040 = vmatpush1.bf16.msra.mxu0 %v4269
    %5041 = vmatprep.subr.bf16.mxu0 0
    %5042 = vmatpush1.bf16.msra.mxu0 %v4270
    %5043 = vmatprep.subr.bf16.mxu0 0
    %5044 = vmatpush1.bf16.msra.mxu0 %v4271
    %5045 = vmatprep.subr.bf16.mxu0 0
    %5046 = vmatpush1.bf16.msra.mxu0 %v4272
    %5047 = vmatprep.subr.bf16.mxu0 0
    %5048 = vmatpush1.bf16.msra.mxu0 %v4273
    %5049 = vmatprep.subr.bf16.mxu0 0
    %5050 = vmatpush1.bf16.msra.mxu0 %v4274
    %5051 = vmatprep.subr.bf16.mxu0 0
    %5052 = vmatpush1.bf16.msra.mxu0 %v4275
    %5053 = vmatprep.subr.bf16.mxu0 0
    %5054 = vmatpush1.bf16.msra.mxu0 %v4276
    %5055 = vmatprep.mubr.bf16.mxu0 %v2547
    %5056 = vmatmul.mubr.bf16.gmra.mrb[0].mxu0 %v2546
    %v5057 = vpop.f32.mrb[0].mxu0
    %v5058 = vadd.f32 %v5017, %v5057
    %v5059 = vpop.f32.mrb[0].mxu0
    %v5060 = vpop.f32.mrb[0].mxu0
    %v5061 = vadd.f32 %v5020, %v5060
    %v5062 = vpop.f32.mrb[0].mxu0
    %5063 = vdwg.mxu0
    %5064 = vmatprep.subr.bf16.mxu0 0
    %5065 = vmatpush1.bf16.msra.mxu0 %v4277
    %5066 = vmatprep.subr.bf16.mxu0 0
    %5067 = vmatpush1.bf16.msra.mxu0 %v4278
    %5068 = vmatprep.subr.bf16.mxu0 0
    %5069 = vmatpush1.bf16.msra.mxu0 %v4279
    %5070 = vmatprep.subr.bf16.mxu0 0
    %5071 = vmatpush1.bf16.msra.mxu0 %v4280
    %5072 = vmatprep.subr.bf16.mxu0 0
    %5073 = vmatpush1.bf16.msra.mxu0 %v4281
    %5074 = vmatprep.subr.bf16.mxu0 0
    %5075 = vmatpush1.bf16.msra.mxu0 %v4282
    %5076 = vmatprep.subr.bf16.mxu0 0
    %5077 = vmatpush1.bf16.msra.mxu0 %v4283
    %5078 = vmatprep.subr.bf16.mxu0 0
    %5079 = vmatpush1.bf16.msra.mxu0 %v4284
    %5080 = vmatprep.subr.bf16.mxu0 0
    %5081 = vmatpush1.bf16.msra.mxu0 %v4285
    %5082 = vmatprep.subr.bf16.mxu0 0
    %5083 = vmatpush1.bf16.msra.mxu0 %v4286
    %5084 = vmatprep.subr.bf16.mxu0 0
    %5085 = vmatpush1.bf16.msra.mxu0 %v4287
    %5086 = vmatprep.subr.bf16.mxu0 0
    %5087 = vmatpush1.bf16.msra.mxu0 %v4288
    %5088 = vmatprep.subr.bf16.mxu0 0
    %5089 = vmatpush1.bf16.msra.mxu0 %v4289
    %5090 = vmatprep.subr.bf16.mxu0 0
    %5091 = vmatpush1.bf16.msra.mxu0 %v4290
    %5092 = vmatprep.subr.bf16.mxu0 0
    %5093 = vmatpush1.bf16.msra.mxu0 %v4291
    %5094 = vmatprep.subr.bf16.mxu0 0
    %5095 = vmatpush1.bf16.msra.mxu0 %v4292
    %5096 = vmatprep.mubr.bf16.mxu0 %v2549
    %5097 = vmatmul.mubr.bf16.gmra.mrb[0].mxu0 %v2548
    %v5098 = vpop.f32.mrb[0].mxu0
    %v5099 = vadd.f32 %v5058, %v5098
    %v5100 = vpop.f32.mrb[0].mxu0
    %v5101 = vpop.f32.mrb[0].mxu0
    %v5102 = vadd.f32 %v5061, %v5101
    %v5103 = vpop.f32.mrb[0].mxu0
    %5104 = vdwg.mxu0
    %5105 = vmatprep.subr.bf16.mxu0 0
    %5106 = vmatpush1.bf16.msra.mxu0 %v4293
    %5107 = vmatprep.subr.bf16.mxu0 0
    %5108 = vmatpush1.bf16.msra.mxu0 %v4294
    %5109 = vmatprep.subr.bf16.mxu0 0
    %5110 = vmatpush1.bf16.msra.mxu0 %v4295
    %5111 = vmatprep.subr.bf16.mxu0 0
    %5112 = vmatpush1.bf16.msra.mxu0 %v4296
    %5113 = vmatprep.subr.bf16.mxu0 0
    %5114 = vmatpush1.bf16.msra.mxu0 %v4297
    %5115 = vmatprep.subr.bf16.mxu0 0
    %5116 = vmatpush1.bf16.msra.mxu0 %v4298
    %5117 = vmatprep.subr.bf16.mxu0 0
    %5118 = vmatpush1.bf16.msra.mxu0 %v4299
    %5119 = vmatprep.subr.bf16.mxu0 0
    %5120 = vmatpush1.bf16.msra.mxu0 %v4300
    %5121 = vmatprep.subr.bf16.mxu0 0
    %5122 = vmatpush1.bf16.msra.mxu0 %v4301
    %5123 = vmatprep.subr.bf16.mxu0 0
    %5124 = vmatpush1.bf16.msra.mxu0 %v4302
    %5125 = vmatprep.subr.bf16.mxu0 0
    %5126 = vmatpush1.bf16.msra.mxu0 %v4303
    %5127 = vmatprep.subr.bf16.mxu0 0
    %5128 = vmatpush1.bf16.msra.mxu0 %v4304
    %5129 = vmatprep.subr.bf16.mxu0 0
    %5130 = vmatpush1.bf16.msra.mxu0 %v4305
    %5131 = vmatprep.subr.bf16.mxu0 0
    %5132 = vmatpush1.bf16.msra.mxu0 %v4306
    %5133 = vmatprep.subr.bf16.mxu0 0
    %5134 = vmatpush1.bf16.msra.mxu0 %v4307
    %5135 = vmatprep.subr.bf16.mxu0 0
    %5136 = vmatpush1.bf16.msra.mxu0 %v4308
    %5137 = vmatprep.mubr.bf16.mxu0 %v2551
    %5138 = vmatmul.mubr.bf16.gmra.mrb[0].mxu0 %v2550
    %v5139 = vpop.f32.mrb[0].mxu0
    %v5140 = vadd.f32 %v5099, %v5139
    %v5141 = vpop.f32.mrb[0].mxu0
    %v5142 = vpop.f32.mrb[0].mxu0
    %v5143 = vadd.f32 %v5102, %v5142
    %v5144 = vpop.f32.mrb[0].mxu0
    %5145 = vdwg.mxu0
    %5146 = vmatprep.subr.bf16.mxu0 0
    %5147 = vmatpush1.bf16.msra.mxu0 %v4309
    %5148 = vmatprep.subr.bf16.mxu0 0
    %5149 = vmatpush1.bf16.msra.mxu0 %v4310
    %5150 = vmatprep.subr.bf16.mxu0 0
    %5151 = vmatpush1.bf16.msra.mxu0 %v4311
    %5152 = vmatprep.subr.bf16.mxu0 0
    %5153 = vmatpush1.bf16.msra.mxu0 %v4312
    %5154 = vmatprep.subr.bf16.mxu0 0
    %5155 = vmatpush1.bf16.msra.mxu0 %v4313
    %5156 = vmatprep.subr.bf16.mxu0 0
    %5157 = vmatpush1.bf16.msra.mxu0 %v4314
    %5158 = vmatprep.subr.bf16.mxu0 0
    %5159 = vmatpush1.bf16.msra.mxu0 %v4315
    %5160 = vmatprep.subr.bf16.mxu0 0
    %5161 = vmatpush1.bf16.msra.mxu0 %v4316
    %5162 = vmatprep.subr.bf16.mxu0 0
    %5163 = vmatpush1.bf16.msra.mxu0 %v4317
    %5164 = vmatprep.subr.bf16.mxu0 0
    %5165 = vmatpush1.bf16.msra.mxu0 %v4318
    %5166 = vmatprep.subr.bf16.mxu0 0
    %5167 = vmatpush1.bf16.msra.mxu0 %v4319
    %5168 = vmatprep.subr.bf16.mxu0 0
    %5169 = vmatpush1.bf16.msra.mxu0 %v4320
    %5170 = vmatprep.subr.bf16.mxu0 0
    %5171 = vmatpush1.bf16.msra.mxu0 %v4321
    %5172 = vmatprep.subr.bf16.mxu0 0
    %5173 = vmatpush1.bf16.msra.mxu0 %v4322
    %5174 = vmatprep.subr.bf16.mxu0 0
    %5175 = vmatpush1.bf16.msra.mxu0 %v4323
    %5176 = vmatprep.subr.bf16.mxu0 0
    %5177 = vmatpush1.bf16.msra.mxu0 %v4324
    %5178 = vmatprep.mubr.bf16.mxu0 %v2553
    %5179 = vmatmul.mubr.bf16.gmra.mrb[0].mxu0 %v2552
    %v5180 = vpop.f32.mrb[0].mxu0
    %v5181 = vadd.f32 %v5140, %v5180
    %v5182 = vpop.f32.mrb[0].mxu0
    %v5183 = vpop.f32.mrb[0].mxu0
    %v5184 = vadd.f32 %v5143, %v5183
    %v5185 = vpop.f32.mrb[0].mxu0
    %5186 = vdwg.mxu0
    %5187 = vmatprep.subr.bf16.mxu0 0
    %5188 = vmatpush1.bf16.msra.mxu0 %v4325
    %5189 = vmatprep.subr.bf16.mxu0 0
    %5190 = vmatpush1.bf16.msra.mxu0 %v4326
    %5191 = vmatprep.subr.bf16.mxu0 0
    %5192 = vmatpush1.bf16.msra.mxu0 %v4327
    %5193 = vmatprep.subr.bf16.mxu0 0
    %5194 = vmatpush1.bf16.msra.mxu0 %v4328
    %5195 = vmatprep.subr.bf16.mxu0 0
    %5196 = vmatpush1.bf16.msra.mxu0 %v4329
    %5197 = vmatprep.subr.bf16.mxu0 0
    %5198 = vmatpush1.bf16.msra.mxu0 %v4330
    %5199 = vmatprep.subr.bf16.mxu0 0
    %5200 = vmatpush1.bf16.msra.mxu0 %v4331
    %5201 = vmatprep.subr.bf16.mxu0 0
    %5202 = vmatpush1.bf16.msra.mxu0 %v4332
    %5203 = vmatprep.subr.bf16.mxu0 0
    %5204 = vmatpush1.bf16.msra.mxu0 %v4333
    %5205 = vmatprep.subr.bf16.mxu0 0
    %5206 = vmatpush1.bf16.msra.mxu0 %v4334
    %5207 = vmatprep.subr.bf16.mxu0 0
    %5208 = vmatpush1.bf16.msra.mxu0 %v4335
    %5209 = vmatprep.subr.bf16.mxu0 0
    %5210 = vmatpush1.bf16.msra.mxu0 %v4336
    %5211 = vmatprep.subr.bf16.mxu0 0
    %5212 = vmatpush1.bf16.msra.mxu0 %v4337
    %5213 = vmatprep.subr.bf16.mxu0 0
    %5214 = vmatpush1.bf16.msra.mxu0 %v4338
    %5215 = vmatprep.subr.bf16.mxu0 0
    %5216 = vmatpush1.bf16.msra.mxu0 %v4339
    %5217 = vmatprep.subr.bf16.mxu0 0
    %5218 = vmatpush1.bf16.msra.mxu0 %v4340
    %5219 = vmatprep.mubr.bf16.mxu0 %v2555
    %5220 = vmatmul.mubr.bf16.gmra.mrb[0].mxu0 %v2554
    %v5221 = vpop.f32.mrb[0].mxu0
    %v5222 = vadd.f32 %v5181, %v5221
    %v5223 = vpop.f32.mrb[0].mxu0
    %v5224 = vpop.f32.mrb[0].mxu0
    %v5225 = vadd.f32 %v5184, %v5224
    %v5226 = vpop.f32.mrb[0].mxu0
    %5227 = vdwg.mxu0
    %5228 = vmatprep.subr.bf16.mxu0 0
    %5229 = vmatpush1.bf16.msra.mxu0 %v4341
    %5230 = vmatprep.subr.bf16.mxu0 0
    %5231 = vmatpush1.bf16.msra.mxu0 %v4342
    %5232 = vmatprep.subr.bf16.mxu0 0
    %5233 = vmatpush1.bf16.msra.mxu0 %v4343
    %5234 = vmatprep.subr.bf16.mxu0 0
    %5235 = vmatpush1.bf16.msra.mxu0 %v4344
    %5236 = vmatprep.subr.bf16.mxu0 0
    %5237 = vmatpush1.bf16.msra.mxu0 %v4345
    %5238 = vmatprep.subr.bf16.mxu0 0
    %5239 = vmatpush1.bf16.msra.mxu0 %v4346
    %5240 = vmatprep.subr.bf16.mxu0 0
    %5241 = vmatpush1.bf16.msra.mxu0 %v4347
    %5242 = vmatprep.subr.bf16.mxu0 0
    %5243 = vmatpush1.bf16.msra.mxu0 %v4348
    %5244 = vmatprep.subr.bf16.mxu0 0
    %5245 = vmatpush1.bf16.msra.mxu0 %v4349
    %5246 = vmatprep.subr.bf16.mxu0 0
    %5247 = vmatpush1.bf16.msra.mxu0 %v4350
    %5248 = vmatprep.subr.bf16.mxu0 0
    %5249 = vmatpush1.bf16.msra.mxu0 %v4351
    %5250 = vmatprep.subr.bf16.mxu0 0
    %5251 = vmatpush1.bf16.msra.mxu0 %v4352
    %5252 = vmatprep.subr.bf16.mxu0 0
    %5253 = vmatpush1.bf16.msra.mxu0 %v4353
    %5254 = vmatprep.subr.bf16.mxu0 0
    %5255 = vmatpush1.bf16.msra.mxu0 %v4354
    %5256 = vmatprep.subr.bf16.mxu0 0
    %5257 = vmatpush1.bf16.msra.mxu0 %v4355
    %5258 = vmatprep.subr.bf16.mxu0 0
    %5259 = vmatpush1.bf16.msra.mxu0 %v4356
    %5260 = vmatprep.mubr.bf16.mxu0 %v2557
    %5261 = vmatmul.mubr.bf16.gmra.mrb[0].mxu0 %v2556
    %v5262 = vpop.f32.mrb[0].mxu0
    %v5263 = vadd.f32 %v5222, %v5262
    %v5264 = vpop.f32.mrb[0].mxu0
    %v5265 = vpop.f32.mrb[0].mxu0
    %v5266 = vadd.f32 %v5225, %v5265
    %v5267 = vpop.f32.mrb[0].mxu0
    %5268 = vdwg.mxu0
    %5269 = vst [vmem:[%s5] sm:$0xff] %v5263
    %5270 = vst [vmem:[%s5 + $0x8] sm:$0xff] %v5266
    %v5271 = vtanh.pop %v5263
    %v5272 = vtanh.pop %v5266
    %5273 = vst [vmem:[%s6] sm:$0xff] %v5271
    %5274 = vst [vmem:[%s6 + $0x8] sm:$0xff] %v5272
    // Predicated region
    $region34: #{_imgnet_forward_padded.1} parent=1 // pred_check
      _
    $region35: #{_imgnet_forward_padded.1} parent=1 // pred_check_branch
      %5276 = sbr.rel (0) target = $region37
    $region36: #{_imgnet_forward_padded.1} parent=1 // pred_region
      _
    $region37: #{_imgnet_forward_padded.1} parent=1 // pred_fallthru
      _
    // Predicated region
    $region38: #{_imgnet_forward_padded.1} parent=1 // pred_check
      _
    $region39: #{_imgnet_forward_padded.1} parent=1 // pred_check_branch
      %5278 = sbr.rel (0) target = $region41
    $region40: #{_imgnet_forward_padded.1} parent=1 // pred_region
      _
    $region41: #{_imgnet_forward_padded.1} parent=1 // pred_fallthru
      _
    // Predicated region
    $region42: #{_imgnet_forward_padded.1} parent=1 // pred_check
      _
    $region43: #{_imgnet_forward_padded.1} parent=1 // pred_check_branch
      %5280 = sbr.rel (0) target = $region45
    $region44: #{_imgnet_forward_padded.1} parent=1 // pred_region
      _
    $region45: #{_imgnet_forward_padded.1} parent=1 // pred_fallthru
      _
    // Predicated region
    $region46: #{_imgnet_forward_padded.1} parent=1 // pred_check
      _
    $region47: #{_imgnet_forward_padded.1} parent=1 // pred_check_branch
      %5282 = sbr.rel (0) target = $region49
    $region48: #{_imgnet_forward_padded.1} parent=1 // pred_region
      _
    $region49: #{_imgnet_forward_padded.1} parent=1 // pred_fallthru
      _
    %5283 = vsyncpa [#allocation3], 1
    %5284 = vsyncpa [#allocation5], 1

</llo_original>
